<compile_context>
chip_gen: v7x
topology: tpu7x:2x2x1
jax: 0.10.0
libtpu: 0.0.40
codegen_flags: <defaults>
</compile_context>

<pallas_src>
import functools
import math

import jax
import jax.numpy as jnp
from jax.experimental import pallas as pl
from jax.experimental.pallas import tpu as pltpu


_EPS = 1e-5

# Matmul operand dtype fed to the MXU (accumulation is always f32).
_DOT_DTYPE = jnp.bfloat16


# ----------------------------- in-kernel helpers ---------------------------- #

def _dot(a, b):
    return jnp.dot(a.astype(_DOT_DTYPE), b.astype(_DOT_DTYPE),
                   preferred_element_type=jnp.float32)


def _dot_t(a, b):
    # a @ b.T without materializing a transpose: contract the last dims of both.
    return jax.lax.dot_general(
        a.astype(_DOT_DTYPE), b.astype(_DOT_DTYPE),
        dimension_numbers=(((1,), (1,)), ((), ())),
        preferred_element_type=jnp.float32)


def _layernorm(x, g, b):
    mean = jnp.mean(x, axis=-1, keepdims=True)
    var = jnp.mean(jnp.square(x - mean), axis=-1, keepdims=True)
    return (x - mean) * jax.lax.rsqrt(var + _EPS) * g + b


# ----------------------- buffering / tiling utilities ----------------------- #

@functools.lru_cache(maxsize=None)
def _single_buffer_weights():
    """True iff this JAX build supports pipeline_mode=pl.Buffered(1) on TPU
    pallas_call BlockSpecs (single-buffered grid-invariant weights -> half the
    weight VMEM).  Probed with a tiny kernel; unsupported builds silently fall
    back to default double buffering."""
    if not hasattr(pl, "Buffered"):
        return False

    def _probe_kernel(x_ref, w_ref, o_ref):
        o_ref[...] = x_ref[...] + w_ref[...]

    try:
        x = jnp.arange(16 * 128, dtype=jnp.float32).reshape(16, 128)
        w = jnp.full((8, 128), 3.0, jnp.float32)
        out = pl.pallas_call(
            _probe_kernel,
            out_shape=jax.ShapeDtypeStruct((16, 128), jnp.float32),
            grid=(2,),
            in_specs=[pl.BlockSpec((8, 128), lambda i: (i, 0)),
                      pl.BlockSpec((8, 128), lambda i: (0, 0),
                                   pipeline_mode=pl.Buffered(1))],
            out_specs=pl.BlockSpec((8, 128), lambda i: (i, 0)),
        )(x, w)
        return bool(jnp.allclose(out, x + 3.0))
    except Exception:
        return False


def _const_spec(shape):
    """BlockSpec for a grid-invariant operand (weights / biases / LN params):
    constant index map, single-buffered when supported."""
    index_map = lambda *_: (0,) * len(shape)
    if _single_buffer_weights():
        return pl.BlockSpec(shape, index_map, pipeline_mode=pl.Buffered(1))
    return pl.BlockSpec(shape, index_map)


def _weight_buffers():
    return 1 if _single_buffer_weights() else 2


def _vmem_limit(est_bytes):
    # Generous 2x headroom for compiler temporaries / spills; floored at the
    # 32 MiB default scoped limit, capped below physical VMEM.
    return int(min(100 * 2 ** 20, max(32 * 2 ** 20, 2 * est_bytes)))


def _row_tile(n):
    """Largest row tile (multiple of 8) dividing n that still leaves >= 2 grid
    steps (so the row axis can shard across TensorCores on v7x)."""
    for t in (1024, 512, 256, 128, 64, 32, 16, 8):
        if n % t == 0 and n // t >= 2:
            return t
    return n


def _seq_tile(s):
    """Query-block tile: largest multiple of 8 dividing s, capped at 512 to
    bound the per-block live set ((tq, S) scores per head)."""
    for t in (512, 256, 128, 64, 32, 16, 8):
        if s % t == 0:
            return t
    return s


# ----------------------------- kernels ------------------------------------- #

def _in_proj_kernel(x_ref, w_ref, b_ref, g_ref, bb_ref, o_ref):
    # Fused: Linear(input_dim -> D) + ReLU + LayerNorm(D), one row tile per step.
    y = _dot(x_ref[...], w_ref[...]) + b_ref[...]
    y = jnp.maximum(y, 0.0)
    o_ref[...] = _layernorm(y, g_ref[...], bb_ref[...])


def _head_proj_kernel(h_ref, mw_ref, mb_ref, g_ref, bb_ref, ow_ref, ob_ref, o_ref):
    # Fused: Linear(D -> D) + LayerNorm(D) + ReLU + Linear(D -> padded out_dim).
    # The output width is a multiple of 128 -> unmasked lane-dense stores.
    y = _dot(h_ref[...], mw_ref[...]) + mb_ref[...]
    y = jnp.maximum(_layernorm(y, g_ref[...], bb_ref[...]), 0.0)
    o_ref[...] = _dot(y, ow_ref[...]) + ob_ref[...]


def _encoder_layer_kernel(xq_ref, xf_ref,
                          wq_ref, bq_ref, wk_ref, bk_ref, wv_ref, bv_ref,
                          wo_ref, bo_ref, ln1g_ref, ln1b_ref,
                          ff1w_ref, ff1b_ref, ff2w_ref, ff2b_ref,
                          ln2g_ref, ln2b_ref,
                          o_ref,
                          k_scr, v_scr, ctx_scr):
    """One MHA encoder layer for one (batch, query-block) grid point.

    Grid: (B, S // tq) with semantics ("parallel", "arbitrary").  K/V for the
    whole sequence are projected once per batch element (at query-block 0) and
    kept in VMEM scratch across query blocks.
    """
    num_heads, _, dh = wq_ref.shape
    qi = pl.program_id(1)

    # ---- K / V projection for the full sequence: once per batch element. ----
    @pl.when(qi == 0)
    def _():
        xf = xf_ref[0].astype(_DOT_DTYPE)                       # (S, D)
        # Static head loop: every iteration's result is stored straight into
        # scratch, so the live set stays bounded to a single head.
        for h in range(num_heads):
            k_scr[h] = (_dot(xf, wk_ref[h]) + bk_ref[h]).astype(_DOT_DTYPE)
            v_scr[h] = (_dot(xf, wv_ref[h]) + bv_ref[h]).astype(_DOT_DTYPE)

    xq = xq_ref[0]                                              # (tq, D) f32
    xqm = xq.astype(_DOT_DTYPE)

    # ---- Multi-head attention for this query block. -------------------------
    # Per-head weights are leading-axis slabs (free Ref views, no lane-axis
    # relayout).  Each head's context lands at its lane offset in a (tq, D)
    # scratch, so the out-projection below is ONE full-K (= D) matmul.
    for h in range(num_heads):
        # 1/sqrt(dh) is folded into wq/bq at parameter-prep time.
        qh = _dot(xqm, wq_ref[h]) + bq_ref[h]                   # (tq, dh)
        s = _dot_t(qh, k_scr[h])                                # (tq, S)
        s = s - jnp.max(s, axis=-1, keepdims=True)
        p = jnp.exp(s)
        p = p * pl.reciprocal(jnp.sum(p, axis=-1, keepdims=True))   # exact
        ctx_scr[:, h * dh:(h + 1) * dh] = _dot(p, v_scr[h])     # (tq, dh)

    attn = _dot(ctx_scr[...], wo_ref[...]) + bo_ref[...]        # (tq, D)

    # ---- Residual + LayerNorm 1. --------------------------------------------
    h1 = _layernorm(xq + attn, ln1g_ref[...], ln1b_ref[...])

    # ---- Feed-forward (D -> D -> D, per the PyTorch module) + residual + LN2.
    ff = jnp.maximum(_dot(h1, ff1w_ref[...]) + ff1b_ref[...], 0.0)
    ff = _dot(ff, ff2w_ref[...]) + ff2b_ref[...]
    o_ref[0] = _layernorm(h1 + ff, ln2g_ref[...], ln2b_ref[...])


# ----------------------------- wrappers ------------------------------------ #

def pallas_in_proj(x, w, b, g, bb):
    n, din = x.shape
    d = w.shape[1]
    tm = _row_tile(n)
    est = _weight_buffers() * (2 * din * d + 12 * d) + 2 * 4 * tm * (din + d)
    return pl.pallas_call(
        _in_proj_kernel,
        out_shape=jax.ShapeDtypeStruct((n, d), jnp.float32),
        grid=(n // tm,),
        in_specs=[pl.BlockSpec((tm, din), lambda i: (i, 0)),
                  _const_spec((din, d)),
                  _const_spec((1, d)),
                  _const_spec((1, d)),
                  _const_spec((1, d))],
        out_specs=pl.BlockSpec((tm, d), lambda i: (i, 0)),
        compiler_params=pltpu.CompilerParams(
            dimension_semantics=("parallel",),
            vmem_limit_bytes=_vmem_limit(est)),
        cost_estimate=pl.CostEstimate(
            flops=int(2 * n * din * d), transcendentals=int(n),
            bytes_accessed=int(4 * n * (din + d) + 2 * din * d)),
    )(x, w, b, g, bb)


def pallas_head_proj(h, mw, mb, g, bb, ow, ob):
    n, d = h.shape
    dout = ow.shape[1]       # padded to a multiple of 128 (lane-dense stores)
    tm = _row_tile(n)
    est = (_weight_buffers() * (2 * d * d + 2 * d * dout + 16 * d)
           + 2 * 4 * tm * (d + dout))
    return pl.pallas_call(
        _head_proj_kernel,
        out_shape=jax.ShapeDtypeStruct((n, dout), jnp.float32),
        grid=(n // tm,),
        in_specs=[pl.BlockSpec((tm, d), lambda i: (i, 0)),
                  _const_spec((d, d)),
                  _const_spec((1, d)),
                  _const_spec((1, d)),
                  _const_spec((1, d)),
                  _const_spec((d, dout)),
                  _const_spec((1, dout))],
        out_specs=pl.BlockSpec((tm, dout), lambda i: (i, 0)),
        compiler_params=pltpu.CompilerParams(
            dimension_semantics=("parallel",),
            vmem_limit_bytes=_vmem_limit(est)),
        cost_estimate=pl.CostEstimate(
            flops=int(2 * n * d * (d + dout)), transcendentals=int(n),
            bytes_accessed=int(4 * n * (d + dout) + 2 * d * (d + dout))),
    )(h, mw, mb, g, bb, ow, ob)


def pallas_encoder_layer(x, lp):
    bsz, s, d = x.shape
    nh, _, dh = lp["wq"].shape
    tq = _seq_tile(s)
    nq = s // tq

    weight_bytes = 12 * d * d + 64 * d                # bf16 weights + f32 vectors
    act_bytes = 4 * d * (2 * tq + s)                  # xq + out + xf blocks
    scratch_bytes = 2 * nh * s * dh * 2 + 4 * tq * d  # K/V bf16 + ctx f32
    est = _weight_buffers() * weight_bytes + 2 * act_bytes + scratch_bytes

    return pl.pallas_call(
        _encoder_layer_kernel,
        out_shape=jax.ShapeDtypeStruct((bsz, s, d), jnp.float32),
        grid=(bsz, nq),
        in_specs=[
            pl.BlockSpec((1, tq, d), lambda i, j: (i, j, 0)),    # query rows
            pl.BlockSpec((1, s, d), lambda i, j: (i, 0, 0)),     # full seq (K/V)
            _const_spec((nh, d, dh)), _const_spec((nh, 1, dh)),  # wq, bq
            _const_spec((nh, d, dh)), _const_spec((nh, 1, dh)),  # wk, bk
            _const_spec((nh, d, dh)), _const_spec((nh, 1, dh)),  # wv, bv
            _const_spec((d, d)), _const_spec((1, d)),            # wo, bo
            _const_spec((1, d)), _const_spec((1, d)),            # ln1 g, b
            _const_spec((d, d)), _const_spec((1, d)),            # ff1 w, b
            _const_spec((d, d)), _const_spec((1, d)),            # ff2 w, b
            _const_spec((1, d)), _const_spec((1, d)),            # ln2 g, b
        ],
        out_specs=pl.BlockSpec((1, tq, d), lambda i, j: (i, j, 0)),
        scratch_shapes=[pltpu.VMEM((nh, s, dh), _DOT_DTYPE),     # K
                        pltpu.VMEM((nh, s, dh), _DOT_DTYPE),     # V
                        pltpu.VMEM((tq, d), jnp.float32)],       # per-block ctx
        compiler_params=pltpu.CompilerParams(
            # The batch axis shards across TensorCores (v7x megacore); the
            # query-block axis carries the K/V scratch, hence "arbitrary".
            dimension_semantics=("parallel", "arbitrary"),
            vmem_limit_bytes=_vmem_limit(est)),
        cost_estimate=pl.CostEstimate(
            flops=int(2 * bsz * s * d * (6 * d + 2 * s)),
            transcendentals=int(bsz * nh * s * s),
            bytes_accessed=int(8 * bsz * s * d + weight_bytes)),
    )(x, x,
      lp["wq"], lp["bq"], lp["wk"], lp["bk"], lp["wv"], lp["bv"],
      lp["wo"], lp["bo"], lp["ln1_g"], lp["ln1_b"],
      lp["ff1_w"], lp["ff1_b"], lp["ff2_w"], lp["ff2_b"],
      lp["ln2_g"], lp["ln2_b"])


# ----------------------------- parameters ----------------------------------- #

def init_params(key, input_dim, d_model, out_dim, num_layers):
    """PyTorch-equivalent f32 parameters, layout (in_features, out_features)."""
    keys = iter(jax.random.split(key, 8 + 8 * num_layers))

    def dense(din, dout):
        kw, kb = jax.random.split(next(keys))
        lim = 1.0 / math.sqrt(din)
        w = jax.random.uniform(kw, (din, dout), jnp.float32, -lim, lim)
        b = jax.random.uniform(kb, (1, dout), jnp.float32, -lim, lim)
        return w, b

    def ln_params(dd):
        return jnp.ones((1, dd), jnp.float32), jnp.zeros((1, dd), jnp.float32)

    p = {}
    p["in_w"], p["in_b"] = dense(input_dim, d_model)
    p["ln0_g"], p["ln0_b"] = ln_params(d_model)
    layers = []
    for _ in range(num_layers):
        lp = {}
        lp["wq"], lp["bq"] = dense(d_model, d_model)
        lp["wk"], lp["bk"] = dense(d_model, d_model)
        lp["wv"], lp["bv"] = dense(d_model, d_model)
        lp["wo"], lp["bo"] = dense(d_model, d_model)
        lp["ln1_g"], lp["ln1_b"] = ln_params(d_model)
        lp["ff1_w"], lp["ff1_b"] = dense(d_model, d_model)
        lp["ff2_w"], lp["ff2_b"] = dense(d_model, d_model)
        lp["ln2_g"], lp["ln2_b"] = ln_params(d_model)
        layers.append(lp)
    p["layers"] = layers
    p["mid_w"], p["mid_b"] = dense(d_model, d_model)
    p["lnf_g"], p["lnf_b"] = ln_params(d_model)
    p["out_w"], p["out_b"] = dense(d_model, out_dim)
    return p


def prepare_params(params, num_heads):
    """Kernel-layout parameters: per-head 3-D attention weights, 1/sqrt(dh)
    folded into Q, bf16 matmul weights, lane-dense (128-multiple) output head."""
    cast = lambda w: w.astype(_DOT_DTYPE)
    d = params["in_w"].shape[1]
    dh = d // num_heads
    scale = 1.0 / math.sqrt(dh)

    def split_w(w):   # (D, D) -> (H, D, dh): per-head column slabs
        return jnp.stack([w[:, h * dh:(h + 1) * dh] for h in range(num_heads)], 0)

    def split_b(b):   # (1, D) -> (H, 1, dh)
        return jnp.stack([b[:, h * dh:(h + 1) * dh] for h in range(num_heads)], 0)

    kp = {
        "in_w": cast(params["in_w"]), "in_b": params["in_b"],
        "ln0_g": params["ln0_g"], "ln0_b": params["ln0_b"],
        "mid_w": cast(params["mid_w"]), "mid_b": params["mid_b"],
        "lnf_g": params["lnf_g"], "lnf_b": params["lnf_b"],
    }
    out_w, out_b = params["out_w"], params["out_b"]
    pad = (-out_w.shape[1]) % 128
    if pad:
        out_w = jnp.pad(out_w, ((0, 0), (0, pad)))
        out_b = jnp.pad(out_b, ((0, 0), (0, pad)))
    kp["out_w"], kp["out_b"] = cast(out_w), out_b

    layers = []
    for lp in params["layers"]:
        layers.append({
            "wq": cast(split_w(lp["wq"]) * scale), "bq": split_b(lp["bq"]) * scale,
            "wk": cast(split_w(lp["wk"])), "bk": split_b(lp["bk"]),
            "wv": cast(split_w(lp["wv"])), "bv": split_b(lp["bv"]),
            "wo": cast(lp["wo"]), "bo": lp["bo"],
            "ln1_g": lp["ln1_g"], "ln1_b": lp["ln1_b"],
            "ff1_w": cast(lp["ff1_w"]), "ff1_b": lp["ff1_b"],
            "ff2_w": cast(lp["ff2_w"]), "ff2_b": lp["ff2_b"],
            "ln2_g": lp["ln2_g"], "ln2_b": lp["ln2_b"],
        })
    kp["layers"] = layers
    return kp


# ----------------------------- model ---------------------------------------- #

def model_forward(x, kp, out_dim):
    B, S, Din = x.shape
    D = kp["in_w"].shape[1]

    # Prologue: Linear + ReLU + LayerNorm, row-tiled.
    h = pallas_in_proj(x.reshape(B * S, Din), kp["in_w"], kp["in_b"],
                       kp["ln0_g"], kp["ln0_b"])
    h = h.reshape(B, S, D)

    # One fused kernel per encoder layer.
    for lp in kp["layers"]:
        h = pallas_encoder_layer(h, lp)

    # Epilogue: Linear + LayerNorm + ReLU + Linear (lane-dense padded output).
    out = pallas_head_proj(h.reshape(B * S, D), kp["mid_w"], kp["mid_b"],
                           kp["lnf_g"], kp["lnf_b"], kp["out_w"], kp["out_b"])
    return out[:, :out_dim].reshape(B, S, out_dim)


# ----------------------------- pure-JAX reference --------------------------- #

def ref_forward(x, params, num_heads):
    def ln(t, g, b):
        m = jnp.mean(t, axis=-1, keepdims=True)
        v = jnp.mean(jnp.square(t - m), axis=-1, keepdims=True)
        return (t - m) * jax.lax.rsqrt(v + _EPS) * g + b

    B, S, Din = x.shape
    D = params["in_w"].shape[1]
    dh = D // num_heads

    h = jnp.maximum(x.reshape(B * S, Din) @ params["in_w"] + params["in_b"], 0.0)
    h = ln(h, params["ln0_g"], params["ln0_b"]).reshape(B, S, D)

    for lp in params["layers"]:
        q = h @ lp["wq"] + lp["bq"]
        k = h @ lp["wk"] + lp["bk"]
        v = h @ lp["wv"] + lp["bv"]

        def heads(t):
            return t.reshape(B, S, num_heads, dh).transpose(0, 2, 1, 3)

        qh, kh, vh = heads(q), heads(k), heads(v)
        s = jnp.einsum("bhqd,bhkd->bhqk", qh, kh) / math.sqrt(dh)
        p = jax.nn.softmax(s, axis=-1)
        ctx = jnp.einsum("bhqk,bhkd->bhqd", p, vh)
        ctx = ctx.transpose(0, 2, 1, 3).reshape(B, S, D)
        attn = ctx @ lp["wo"] + lp["bo"]

        h = ln(h + attn, lp["ln1_g"], lp["ln1_b"])
        ff = jnp.maximum(h @ lp["ff1_w"] + lp["ff1_b"], 0.0) @ lp["ff2_w"] + lp["ff2_b"]
        h = ln(h + ff, lp["ln2_g"], lp["ln2_b"])

    h = h.reshape(B * S, D) @ params["mid_w"] + params["mid_b"]
    h = jnp.maximum(ln(h, params["lnf_g"], params["lnf_b"]), 0.0)
    out = h @ params["out_w"] + params["out_b"]
    return out.reshape(B, S, -1)


# ----------------------------- main ----------------------------------------- #

if __name__ == "__main__":
    B, S = 2, 8
    input_dim, d_model, out_dim = 16, 32, 8
    n_heads, n_layers = 4, 2   # small-shape analogues of the module constants

    key = jax.random.PRNGKey(0)
    kparam_key, kx = jax.random.split(key)
    params = init_params(kparam_key, input_dim, d_model, out_dim, n_layers)
    kparams = prepare_params(params, n_heads)
    x = jax.random.normal(kx, (B, S, input_dim), jnp.float32)

    # Resolve the Buffered(1) capability probe before tracing (cached).
    _single_buffer_weights()

    fwd = jax.jit(functools.partial(model_forward, out_dim=out_dim))
    y = jax.block_until_ready(fwd(x, kparams))

    y_ref = ref_forward(x, params, n_heads)
    assert y.shape == (B, S, out_dim)
    max_err = float(jnp.max(jnp.abs(y - y_ref)))
    # Tolerance budget covers bf16 MXU operands across ~15 chained matmuls
    # (expected max abs err ~1e-2 at these scales against the f32 reference).
    assert jnp.allclose(y, y_ref, atol=5e-2, rtol=5e-2), f"max abs err {max_err}"

    print("KERNEL_OK")
</pallas_src>

<mosaic_0001>
module attributes {stable_mosaic.version = 11 : i64} {
  func.func @_probe_kernel(%arg0: i32, %arg1: memref<8x128xf32, #tpu.memory_space<vmem>>, %arg2: memref<8x128xf32, #tpu.memory_space<vmem>>, %arg3: memref<8x128xf32, #tpu.memory_space<vmem>>) attributes {dimension_semantics = [#tpu.dimension_semantics<arbitrary>], iteration_bounds = array<i64: 2>, scalar_prefetch = 0 : i64, scratch_operands = 0 : i64, tpu.core_type = #tpu.core_type<tc>, window_params = [{transform_indices = @transform_0, window_bounds = array<i64: 8, 128>}, {pipeline_mode = #tpu.pipeline_mode<synchronous>, transform_indices = @transform_1, window_bounds = array<i64: 8, 128>}, {transform_indices = @transform_2, window_bounds = array<i64: 8, 128>}]} {
    %c0 = arith.constant 0 : index
    %c0_0 = arith.constant 0 : index
    %0 = vector.load %arg1[%c0, %c0_0] : memref<8x128xf32, #tpu.memory_space<vmem>>, vector<8x128xf32>
    %c0_1 = arith.constant 0 : index
    %c0_2 = arith.constant 0 : index
    %1 = vector.load %arg2[%c0_1, %c0_2] : memref<8x128xf32, #tpu.memory_space<vmem>>, vector<8x128xf32>
    %2 = arith.addf %0, %1 : vector<8x128xf32>
    %c0_3 = arith.constant 0 : index
    %c0_4 = arith.constant 0 : index
    %3 = vector.load %arg3[%c0_3, %c0_4] : memref<8x128xf32, #tpu.memory_space<vmem>>, vector<8x128xf32>
    tpu.vector_store %arg3[%c0_3, %c0_4], %2 {strides = array<i32>} : memref<8x128xf32, #tpu.memory_space<vmem>>, vector<8x128xf32>,
    return
  }
  func.func @transform_0(%arg0: i32) -> (i32, i32) {
    %c0_i32 = arith.constant 0 : i32
    %c0_i32_0 = arith.constant 0 : i32
    return %arg0, %c0_i32 : i32, i32
  }
  func.func @transform_1(%arg0: i32) -> (i32, i32) {
    %c0_i32 = arith.constant 0 : i32
    %c0_i32_0 = arith.constant 0 : i32
    %c0_i32_1 = arith.constant 0 : i32
    return %c0_i32, %c0_i32_0 : i32, i32
  }
  func.func @transform_2(%arg0: i32) -> (i32, i32) {
    %c0_i32 = arith.constant 0 : i32
    %c0_i32_0 = arith.constant 0 : i32
    return %arg0, %c0_i32 : i32, i32
  }
}

module attributes {stable_mosaic.version = 11 : i64} {
  func.func @_head_proj_kernel(%arg0: i32, %arg1: memref<8x32xf32, #tpu.memory_space<vmem>>, %arg2: memref<32x32xbf16, #tpu.memory_space<vmem>>, %arg3: memref<1x32xf32, #tpu.memory_space<vmem>>, %arg4: memref<1x32xf32, #tpu.memory_space<vmem>>, %arg5: memref<1x32xf32, #tpu.memory_space<vmem>>, %arg6: memref<32x128xbf16, #tpu.memory_space<vmem>>, %arg7: memref<1x128xf32, #tpu.memory_space<vmem>>, %arg8: memref<8x128xf32, #tpu.memory_space<vmem>>) attributes {dimension_semantics = [#tpu.dimension_semantics<parallel>], iteration_bounds = array<i64: 2>, scalar_prefetch = 0 : i64, scratch_operands = 0 : i64, tpu.core_type = #tpu.core_type<tc>, window_params = [{transform_indices = @transform_0, window_bounds = array<i64: 8, 32>}, {pipeline_mode = #tpu.pipeline_mode<synchronous>, transform_indices = @transform_1, window_bounds = array<i64: 32, 32>}, {pipeline_mode = #tpu.pipeline_mode<synchronous>, transform_indices = @transform_2, window_bounds = array<i64: 1, 32>}, {pipeline_mode = #tpu.pipeline_mode<synchronous>, transform_indices = @transform_3, window_bounds = array<i64: 1, 32>}, {pipeline_mode = #tpu.pipeline_mode<synchronous>, transform_indices = @transform_4, window_bounds = array<i64: 1, 32>}, {pipeline_mode = #tpu.pipeline_mode<synchronous>, transform_indices = @transform_5, window_bounds = array<i64: 32, 128>}, {pipeline_mode = #tpu.pipeline_mode<synchronous>, transform_indices = @transform_6, window_bounds = array<i64: 1, 128>}, {transform_indices = @transform_7, window_bounds = array<i64: 8, 128>}]} {
    %c0 = arith.constant 0 : index
    %c0_0 = arith.constant 0 : index
    %0 = vector.load %arg1[%c0, %c0_0] : memref<8x32xf32, #tpu.memory_space<vmem>>, vector<8x32xf32>
    %c0_1 = arith.constant 0 : index
    %c0_2 = arith.constant 0 : index
    %1 = vector.load %arg2[%c0_1, %c0_2] : memref<32x32xbf16, #tpu.memory_space<vmem>>, vector<32x32xbf16>
    %2 = arith.truncf %0 : vector<8x32xf32> to vector<8x32xbf16>
    %cst = arith.constant dense<0.000000e+00> : vector<8x32xf32>
    %3 = tpu.matmul %2, %1, %cst {dimension_numbers = #tpu.dot_dimension_numbers<[1], [0], [0], [1], [0, 0, 1, 1], [], []>} : vector<8x32xbf16>, vector<32x32xbf16>, vector<8x32xf32> -> vector<8x32xf32>
    %c0_3 = arith.constant 0 : index
    %c0_4 = arith.constant 0 : index
    %4 = vector.load %arg3[%c0_3, %c0_4] : memref<1x32xf32, #tpu.memory_space<vmem>>, vector<1x32xf32>
    %5 = vector.broadcast %4 : vector<1x32xf32> to vector<8x32xf32>
    %6 = arith.addf %3, %5 : vector<8x32xf32>
    %c0_5 = arith.constant 0 : index
    %c0_6 = arith.constant 0 : index
    %7 = vector.load %arg4[%c0_5, %c0_6] : memref<1x32xf32, #tpu.memory_space<vmem>>, vector<1x32xf32>
    %c0_7 = arith.constant 0 : index
    %c0_8 = arith.constant 0 : index
    %8 = vector.load %arg5[%c0_7, %c0_8] : memref<1x32xf32, #tpu.memory_space<vmem>>, vector<1x32xf32>
    %cst_9 = arith.constant dense<0.000000e+00> : vector<8xf32>
    %9 = vector.multi_reduction <add>, %6, %cst_9 [1] : vector<8x32xf32> to vector<8xf32>
    %10 = vector.shape_cast %9 : vector<8xf32> to vector<8x1xf32>
    %cst_10 = arith.constant 3.200000e+01 : f32
    %11 = vector.broadcast %cst_10 : f32 to vector<8x1xf32>
    %12 = arith.divf %10, %11 : vector<8x1xf32>
    %13 = vector.broadcast %12 : vector<8x1xf32> to vector<8x32xf32>
    %14 = arith.subf %6, %13 : vector<8x32xf32>
    %15 = arith.mulf %14, %14 : vector<8x32xf32>
    %cst_11 = arith.constant dense<0.000000e+00> : vector<8xf32>
    %16 = vector.multi_reduction <add>, %15, %cst_11 [1] : vector<8x32xf32> to vector<8xf32>
    %17 = vector.shape_cast %16 : vector<8xf32> to vector<8x1xf32>
    %cst_12 = arith.constant 3.200000e+01 : f32
    %18 = vector.broadcast %cst_12 : f32 to vector<8x1xf32>
    %19 = arith.divf %17, %18 : vector<8x1xf32>
    %20 = vector.broadcast %12 : vector<8x1xf32> to vector<8x32xf32>
    %21 = arith.subf %6, %20 : vector<8x32xf32>
    %cst_13 = arith.constant 9.99999974E-6 : f32
    %22 = vector.broadcast %cst_13 : f32 to vector<8x1xf32>
    %23 = arith.addf %19, %22 : vector<8x1xf32>
    %24 = math.rsqrt %23 : vector<8x1xf32>
    %25 = vector.broadcast %24 : vector<8x1xf32> to vector<8x32xf32>
    %26 = arith.mulf %21, %25 : vector<8x32xf32>
    %27 = vector.broadcast %7 : vector<1x32xf32> to vector<8x32xf32>
    %28 = arith.mulf %26, %27 : vector<8x32xf32>
    %29 = vector.broadcast %8 : vector<1x32xf32> to vector<8x32xf32>
    %30 = arith.addf %28, %29 : vector<8x32xf32>
    %cst_14 = arith.constant 0.000000e+00 : f32
    %31 = vector.broadcast %cst_14 : f32 to vector<8x32xf32>
    %32 = arith.maximumf %30, %31 : vector<8x32xf32>
    %c0_15 = arith.constant 0 : index
    %c0_16 = arith.constant 0 : index
    %33 = vector.load %arg6[%c0_15, %c0_16] : memref<32x128xbf16, #tpu.memory_space<vmem>>, vector<32x128xbf16>
    %34 = arith.truncf %32 : vector<8x32xf32> to vector<8x32xbf16>
    %cst_17 = arith.constant dense<0.000000e+00> : vector<8x128xf32>
    %35 = tpu.matmul %34, %33, %cst_17 {dimension_numbers = #tpu.dot_dimension_numbers<[1], [0], [0], [1], [0, 0, 1, 1], [], []>} : vector<8x32xbf16>, vector<32x128xbf16>, vector<8x128xf32> -> vector<8x128xf32>
    %c0_18 = arith.constant 0 : index
    %c0_19 = arith.constant 0 : index
    %36 = vector.load %arg7[%c0_18, %c0_19] : memref<1x128xf32, #tpu.memory_space<vmem>>, vector<1x128xf32>
    %37 = vector.broadcast %36 : vector<1x128xf32> to vector<8x128xf32>
    %38 = arith.addf %35, %37 : vector<8x128xf32>
    %c0_20 = arith.constant 0 : index
    %c0_21 = arith.constant 0 : index
    %39 = vector.load %arg8[%c0_20, %c0_21] : memref<8x128xf32, #tpu.memory_space<vmem>>, vector<8x128xf32>
    tpu.vector_store %arg8[%c0_20, %c0_21], %38 {strides = array<i32>} : memref<8x128xf32, #tpu.memory_space<vmem>>, vector<8x128xf32>,
    return
  }
  func.func @transform_0(%arg0: i32) -> (i32, i32) {
    %c0_i32 = arith.constant 0 : i32
    %c0_i32_0 = arith.constant 0 : i32
    return %arg0, %c0_i32 : i32, i32
  }
  func.func @transform_1(%arg0: i32) -> (i32, i32) {
    %c0_i32 = arith.constant 0 : i32
    %c0_i32_0 = arith.constant 0 : i32
    %c0_i32_1 = arith.constant 0 : i32
    return %c0_i32, %c0_i32_0 : i32, i32
  }
  func.func @transform_2(%arg0: i32) -> (i32, i32) {
    %c0_i32 = arith.constant 0 : i32
    %c0_i32_0 = arith.constant 0 : i32
    %c0_i32_1 = arith.constant 0 : i32
    return %c0_i32, %c0_i32_0 : i32, i32
  }
  func.func @transform_3(%arg0: i32) -> (i32, i32) {
    %c0_i32 = arith.constant 0 : i32
    %c0_i32_0 = arith.constant 0 : i32
    %c0_i32_1 = arith.constant 0 : i32
    return %c0_i32, %c0_i32_0 : i32, i32
  }
  func.func @transform_4(%arg0: i32) -> (i32, i32) {
    %c0_i32 = arith.constant 0 : i32
    %c0_i32_0 = arith.constant 0 : i32
    %c0_i32_1 = arith.constant 0 : i32
    return %c0_i32, %c0_i32_0 : i32, i32
  }
  func.func @transform_5(%arg0: i32) -> (i32, i32) {
    %c0_i32 = arith.constant 0 : i32
    %c0_i32_0 = arith.constant 0 : i32
    %c0_i32_1 = arith.constant 0 : i32
    return %c0_i32, %c0_i32_0 : i32, i32
  }
  func.func @transform_6(%arg0: i32) -> (i32, i32) {
    %c0_i32 = arith.constant 0 : i32
    %c0_i32_0 = arith.constant 0 : i32
    %c0_i32_1 = arith.constant 0 : i32
    return %c0_i32, %c0_i32_0 : i32, i32
  }
  func.func @transform_7(%arg0: i32) -> (i32, i32) {
    %c0_i32 = arith.constant 0 : i32
    %c0_i32_0 = arith.constant 0 : i32
    return %arg0, %c0_i32 : i32, i32
  }
}

module attributes {stable_mosaic.version = 11 : i64} {
  func.func @_in_proj_kernel(%arg0: i32, %arg1: memref<8x16xf32, #tpu.memory_space<vmem>>, %arg2: memref<16x32xbf16, #tpu.memory_space<vmem>>, %arg3: memref<1x32xf32, #tpu.memory_space<vmem>>, %arg4: memref<1x32xf32, #tpu.memory_space<vmem>>, %arg5: memref<1x32xf32, #tpu.memory_space<vmem>>, %arg6: memref<8x32xf32, #tpu.memory_space<vmem>>) attributes {dimension_semantics = [#tpu.dimension_semantics<parallel>], iteration_bounds = array<i64: 2>, scalar_prefetch = 0 : i64, scratch_operands = 0 : i64, tpu.core_type = #tpu.core_type<tc>, window_params = [{transform_indices = @transform_0, window_bounds = array<i64: 8, 16>}, {pipeline_mode = #tpu.pipeline_mode<synchronous>, transform_indices = @transform_1, window_bounds = array<i64: 16, 32>}, {pipeline_mode = #tpu.pipeline_mode<synchronous>, transform_indices = @transform_2, window_bounds = array<i64: 1, 32>}, {pipeline_mode = #tpu.pipeline_mode<synchronous>, transform_indices = @transform_3, window_bounds = array<i64: 1, 32>}, {pipeline_mode = #tpu.pipeline_mode<synchronous>, transform_indices = @transform_4, window_bounds = array<i64: 1, 32>}, {transform_indices = @transform_5, window_bounds = array<i64: 8, 32>}]} {
    %c0 = arith.constant 0 : index
    %c0_0 = arith.constant 0 : index
    %0 = vector.load %arg1[%c0, %c0_0] : memref<8x16xf32, #tpu.memory_space<vmem>>, vector<8x16xf32>
    %c0_1 = arith.constant 0 : index
    %c0_2 = arith.constant 0 : index
    %1 = vector.load %arg2[%c0_1, %c0_2] : memref<16x32xbf16, #tpu.memory_space<vmem>>, vector<16x32xbf16>
    %2 = arith.truncf %0 : vector<8x16xf32> to vector<8x16xbf16>
    %cst = arith.constant dense<0.000000e+00> : vector<8x32xf32>
    %3 = tpu.matmul %2, %1, %cst {dimension_numbers = #tpu.dot_dimension_numbers<[1], [0], [0], [1], [0, 0, 1, 1], [], []>} : vector<8x16xbf16>, vector<16x32xbf16>, vector<8x32xf32> -> vector<8x32xf32>
    %c0_3 = arith.constant 0 : index
    %c0_4 = arith.constant 0 : index
    %4 = vector.load %arg3[%c0_3, %c0_4] : memref<1x32xf32, #tpu.memory_space<vmem>>, vector<1x32xf32>
    %5 = vector.broadcast %4 : vector<1x32xf32> to vector<8x32xf32>
    %6 = arith.addf %3, %5 : vector<8x32xf32>
    %cst_5 = arith.constant 0.000000e+00 : f32
    %7 = vector.broadcast %cst_5 : f32 to vector<8x32xf32>
    %8 = arith.maximumf %6, %7 : vector<8x32xf32>
    %c0_6 = arith.constant 0 : index
    %c0_7 = arith.constant 0 : index
    %9 = vector.load %arg4[%c0_6, %c0_7] : memref<1x32xf32, #tpu.memory_space<vmem>>, vector<1x32xf32>
    %c0_8 = arith.constant 0 : index
    %c0_9 = arith.constant 0 : index
    %10 = vector.load %arg5[%c0_8, %c0_9] : memref<1x32xf32, #tpu.memory_space<vmem>>, vector<1x32xf32>
    %cst_10 = arith.constant dense<0.000000e+00> : vector<8xf32>
    %11 = vector.multi_reduction <add>, %8, %cst_10 [1] : vector<8x32xf32> to vector<8xf32>
    %12 = vector.shape_cast %11 : vector<8xf32> to vector<8x1xf32>
    %cst_11 = arith.constant 3.200000e+01 : f32
    %13 = vector.broadcast %cst_11 : f32 to vector<8x1xf32>
    %14 = arith.divf %12, %13 : vector<8x1xf32>
    %15 = vector.broadcast %14 : vector<8x1xf32> to vector<8x32xf32>
    %16 = arith.subf %8, %15 : vector<8x32xf32>
    %17 = arith.mulf %16, %16 : vector<8x32xf32>
    %cst_12 = arith.constant dense<0.000000e+00> : vector<8xf32>
    %18 = vector.multi_reduction <add>, %17, %cst_12 [1] : vector<8x32xf32> to vector<8xf32>
    %19 = vector.shape_cast %18 : vector<8xf32> to vector<8x1xf32>
    %cst_13 = arith.constant 3.200000e+01 : f32
    %20 = vector.broadcast %cst_13 : f32 to vector<8x1xf32>
    %21 = arith.divf %19, %20 : vector<8x1xf32>
    %22 = vector.broadcast %14 : vector<8x1xf32> to vector<8x32xf32>
    %23 = arith.subf %8, %22 : vector<8x32xf32>
    %cst_14 = arith.constant 9.99999974E-6 : f32
    %24 = vector.broadcast %cst_14 : f32 to vector<8x1xf32>
    %25 = arith.addf %21, %24 : vector<8x1xf32>
    %26 = math.rsqrt %25 : vector<8x1xf32>
    %27 = vector.broadcast %26 : vector<8x1xf32> to vector<8x32xf32>
    %28 = arith.mulf %23, %27 : vector<8x32xf32>
    %29 = vector.broadcast %9 : vector<1x32xf32> to vector<8x32xf32>
    %30 = arith.mulf %28, %29 : vector<8x32xf32>
    %31 = vector.broadcast %10 : vector<1x32xf32> to vector<8x32xf32>
    %32 = arith.addf %30, %31 : vector<8x32xf32>
    %c0_15 = arith.constant 0 : index
    %c0_16 = arith.constant 0 : index
    %33 = vector.load %arg6[%c0_15, %c0_16] : memref<8x32xf32, #tpu.memory_space<vmem>>, vector<8x32xf32>
    tpu.vector_store %arg6[%c0_15, %c0_16], %32 {strides = array<i32>} : memref<8x32xf32, #tpu.memory_space<vmem>>, vector<8x32xf32>,
    return
  }
  func.func @transform_0(%arg0: i32) -> (i32, i32) {
    %c0_i32 = arith.constant 0 : i32
    %c0_i32_0 = arith.constant 0 : i32
    return %arg0, %c0_i32 : i32, i32
  }
  func.func @transform_1(%arg0: i32) -> (i32, i32) {
    %c0_i32 = arith.constant 0 : i32
    %c0_i32_0 = arith.constant 0 : i32
    %c0_i32_1 = arith.constant 0 : i32
    return %c0_i32, %c0_i32_0 : i32, i32
  }
  func.func @transform_2(%arg0: i32) -> (i32, i32) {
    %c0_i32 = arith.constant 0 : i32
    %c0_i32_0 = arith.constant 0 : i32
    %c0_i32_1 = arith.constant 0 : i32
    return %c0_i32, %c0_i32_0 : i32, i32
  }
  func.func @transform_3(%arg0: i32) -> (i32, i32) {
    %c0_i32 = arith.constant 0 : i32
    %c0_i32_0 = arith.constant 0 : i32
    %c0_i32_1 = arith.constant 0 : i32
    return %c0_i32, %c0_i32_0 : i32, i32
  }
  func.func @transform_4(%arg0: i32) -> (i32, i32) {
    %c0_i32 = arith.constant 0 : i32
    %c0_i32_0 = arith.constant 0 : i32
    %c0_i32_1 = arith.constant 0 : i32
    return %c0_i32, %c0_i32_0 : i32, i32
  }
  func.func @transform_5(%arg0: i32) -> (i32, i32) {
    %c0_i32 = arith.constant 0 : i32
    %c0_i32_0 = arith.constant 0 : i32
    return %arg0, %c0_i32 : i32, i32
  }
}

module attributes {stable_mosaic.version = 11 : i64} {
  func.func @_encoder_layer_kernel(%arg0: i32, %arg1: i32, %arg2: memref<1x8x32xf32, #tpu.memory_space<vmem>>, %arg3: memref<1x8x32xf32, #tpu.memory_space<vmem>>, %arg4: memref<4x32x8xbf16, #tpu.memory_space<vmem>>, %arg5: memref<4x1x8xf32, #tpu.memory_space<vmem>>, %arg6: memref<4x32x8xbf16, #tpu.memory_space<vmem>>, %arg7: memref<4x1x8xf32, #tpu.memory_space<vmem>>, %arg8: memref<4x32x8xbf16, #tpu.memory_space<vmem>>, %arg9: memref<4x1x8xf32, #tpu.memory_space<vmem>>, %arg10: memref<32x32xbf16, #tpu.memory_space<vmem>>, %arg11: memref<1x32xf32, #tpu.memory_space<vmem>>, %arg12: memref<1x32xf32, #tpu.memory_space<vmem>>, %arg13: memref<1x32xf32, #tpu.memory_space<vmem>>, %arg14: memref<32x32xbf16, #tpu.memory_space<vmem>>, %arg15: memref<1x32xf32, #tpu.memory_space<vmem>>, %arg16: memref<32x32xbf16, #tpu.memory_space<vmem>>, %arg17: memref<1x32xf32, #tpu.memory_space<vmem>>, %arg18: memref<1x32xf32, #tpu.memory_space<vmem>>, %arg19: memref<1x32xf32, #tpu.memory_space<vmem>>, %arg20: memref<1x8x32xf32, #tpu.memory_space<vmem>>, %arg21: memref<4x8x8xbf16, #tpu.memory_space<vmem>>, %arg22: memref<4x8x8xbf16, #tpu.memory_space<vmem>>, %arg23: memref<8x32xf32, #tpu.memory_space<vmem>>) attributes {dimension_semantics = [#tpu.dimension_semantics<parallel>, #tpu.dimension_semantics<arbitrary>], iteration_bounds = array<i64: 2, 1>, scalar_prefetch = 0 : i64, scratch_operands = 3 : i64, tpu.core_type = #tpu.core_type<tc>, window_params = [{transform_indices = @transform_0, window_bounds = array<i64: 1, 8, 32>}, {transform_indices = @transform_1, window_bounds = array<i64: 1, 8, 32>}, {pipeline_mode = #tpu.pipeline_mode<synchronous>, transform_indices = @transform_2, window_bounds = array<i64: 4, 32, 8>}, {pipeline_mode = #tpu.pipeline_mode<synchronous>, transform_indices = @transform_3, window_bounds = array<i64: 4, 1, 8>}, {pipeline_mode = #tpu.pipeline_mode<synchronous>, transform_indices = @transform_4, window_bounds = array<i64: 4, 32, 8>}, {pipeline_mode = #tpu.pipeline_mode<synchronous>, transform_indices = @transform_5, window_bounds = array<i64: 4, 1, 8>}, {pipeline_mode = #tpu.pipeline_mode<synchronous>, transform_indices = @transform_6, window_bounds = array<i64: 4, 32, 8>}, {pipeline_mode = #tpu.pipeline_mode<synchronous>, transform_indices = @transform_7, window_bounds = array<i64: 4, 1, 8>}, {pipeline_mode = #tpu.pipeline_mode<synchronous>, transform_indices = @transform_8, window_bounds = array<i64: 32, 32>}, {pipeline_mode = #tpu.pipeline_mode<synchronous>, transform_indices = @transform_9, window_bounds = array<i64: 1, 32>}, {pipeline_mode = #tpu.pipeline_mode<synchronous>, transform_indices = @transform_10, window_bounds = array<i64: 1, 32>}, {pipeline_mode = #tpu.pipeline_mode<synchronous>, transform_indices = @transform_11, window_bounds = array<i64: 1, 32>}, {pipeline_mode = #tpu.pipeline_mode<synchronous>, transform_indices = @transform_12, window_bounds = array<i64: 32, 32>}, {pipeline_mode = #tpu.pipeline_mode<synchronous>, transform_indices = @transform_13, window_bounds = array<i64: 1, 32>}, {pipeline_mode = #tpu.pipeline_mode<synchronous>, transform_indices = @transform_14, window_bounds = array<i64: 32, 32>}, {pipeline_mode = #tpu.pipeline_mode<synchronous>, transform_indices = @transform_15, window_bounds = array<i64: 1, 32>}, {pipeline_mode = #tpu.pipeline_mode<synchronous>, transform_indices = @transform_16, window_bounds = array<i64: 1, 32>}, {pipeline_mode = #tpu.pipeline_mode<synchronous>, transform_indices = @transform_17, window_bounds = array<i64: 1, 32>}, {transform_indices = @transform_18, window_bounds = array<i64: 1, 8, 32>}]} {
    %c0_i32 = arith.constant 0 : i32
    %0 = arith.cmpi eq, %arg1, %c0_i32 : i32
    %1 = arith.extui %0 : i1 to i32
    %c0_i32_0 = arith.constant 0 : i32
    %2 = arith.cmpi ne, %1, %c0_i32_0 : i32
    scf.if %2 {
      %c0_111 = arith.constant 0 : index
      %c0_112 = arith.constant 0 : index
      %c0_113 = arith.constant 0 : index
      %184 = vector.load %arg3[%c0_111, %c0_112, %c0_113] : memref<1x8x32xf32, #tpu.memory_space<vmem>>, vector<1x8x32xf32>
      %185 = vector.shape_cast %184 : vector<1x8x32xf32> to vector<8x32xf32>
      %186 = arith.truncf %185 : vector<8x32xf32> to vector<8x32xbf16>
      %c0_114 = arith.constant 0 : index
      %c0_115 = arith.constant 0 : index
      %c0_116 = arith.constant 0 : index
      %187 = vector.load %arg6[%c0_114, %c0_115, %c0_116] : memref<4x32x8xbf16, #tpu.memory_space<vmem>>, vector<1x32x8xbf16>
      %188 = vector.shape_cast %187 : vector<1x32x8xbf16> to vector<32x8xbf16>
      %cst_117 = arith.constant dense<0.000000e+00> : vector<8x8xf32>
      %189 = tpu.matmul %186, %188, %cst_117 {dimension_numbers = #tpu.dot_dimension_numbers<[1], [0], [0], [1], [0, 0, 1, 1], [], []>} : vector<8x32xbf16>, vector<32x8xbf16>, vector<8x8xf32> -> vector<8x8xf32>
      %c0_118 = arith.constant 0 : index
      %c0_119 = arith.constant 0 : index
      %c0_120 = arith.constant 0 : index
      %190 = vector.load %arg7[%c0_118, %c0_119, %c0_120] : memref<4x1x8xf32, #tpu.memory_space<vmem>>, vector<1x1x8xf32>
      %191 = vector.shape_cast %190 : vector<1x1x8xf32> to vector<1x8xf32>
      %192 = vector.broadcast %191 : vector<1x8xf32> to vector<8x8xf32>
      %193 = arith.addf %189, %192 : vector<8x8xf32>
      %194 = arith.truncf %193 : vector<8x8xf32> to vector<8x8xbf16>
      %c0_121 = arith.constant 0 : index
      %c0_122 = arith.constant 0 : index
      %c0_123 = arith.constant 0 : index
      %195 = vector.load %arg21[%c0_121, %c0_122, %c0_123] : memref<4x8x8xbf16, #tpu.memory_space<vmem>>, vector<1x8x8xbf16>
      %196 = vector.shape_cast %195 : vector<1x8x8xbf16> to vector<8x8xbf16>
      %197 = vector.shape_cast %194 : vector<8x8xbf16> to vector<1x8x8xbf16>
      tpu.vector_store %arg21[%c0_121, %c0_122, %c0_123], %197 {strides = array<i32>} : memref<4x8x8xbf16, #tpu.memory_space<vmem>>, vector<1x8x8xbf16>,
      %c0_124 = arith.constant 0 : index
      %c0_125 = arith.constant 0 : index
      %c0_126 = arith.constant 0 : index
      %198 = vector.load %arg8[%c0_124, %c0_125, %c0_126] : memref<4x32x8xbf16, #tpu.memory_space<vmem>>, vector<1x32x8xbf16>
      %199 = vector.shape_cast %198 : vector<1x32x8xbf16> to vector<32x8xbf16>
      %cst_127 = arith.constant dense<0.000000e+00> : vector<8x8xf32>
      %200 = tpu.matmul %186, %199, %cst_127 {dimension_numbers = #tpu.dot_dimension_numbers<[1], [0], [0], [1], [0, 0, 1, 1], [], []>} : vector<8x32xbf16>, vector<32x8xbf16>, vector<8x8xf32> -> vector<8x8xf32>
      %c0_128 = arith.constant 0 : index
      %c0_129 = arith.constant 0 : index
      %c0_130 = arith.constant 0 : index
      %201 = vector.load %arg9[%c0_128, %c0_129, %c0_130] : memref<4x1x8xf32, #tpu.memory_space<vmem>>, vector<1x1x8xf32>
      %202 = vector.shape_cast %201 : vector<1x1x8xf32> to vector<1x8xf32>
      %203 = vector.broadcast %202 : vector<1x8xf32> to vector<8x8xf32>
      %204 = arith.addf %200, %203 : vector<8x8xf32>
      %205 = arith.truncf %204 : vector<8x8xf32> to vector<8x8xbf16>
      %c0_131 = arith.constant 0 : index
      %c0_132 = arith.constant 0 : index
      %c0_133 = arith.constant 0 : index
      %206 = vector.load %arg22[%c0_131, %c0_132, %c0_133] : memref<4x8x8xbf16, #tpu.memory_space<vmem>>, vector<1x8x8xbf16>
      %207 = vector.shape_cast %206 : vector<1x8x8xbf16> to vector<8x8xbf16>
      %208 = vector.shape_cast %205 : vector<8x8xbf16> to vector<1x8x8xbf16>
      tpu.vector_store %arg22[%c0_131, %c0_132, %c0_133], %208 {strides = array<i32>} : memref<4x8x8xbf16, #tpu.memory_space<vmem>>, vector<1x8x8xbf16>,
      %c1_134 = arith.constant 1 : index
      %c0_135 = arith.constant 0 : index
      %c0_136 = arith.constant 0 : index
      %209 = vector.load %arg6[%c1_134, %c0_135, %c0_136] : memref<4x32x8xbf16, #tpu.memory_space<vmem>>, vector<1x32x8xbf16>
      %210 = vector.shape_cast %209 : vector<1x32x8xbf16> to vector<32x8xbf16>
      %cst_137 = arith.constant dense<0.000000e+00> : vector<8x8xf32>
      %211 = tpu.matmul %186, %210, %cst_137 {dimension_numbers = #tpu.dot_dimension_numbers<[1], [0], [0], [1], [0, 0, 1, 1], [], []>} : vector<8x32xbf16>, vector<32x8xbf16>, vector<8x8xf32> -> vector<8x8xf32>
      %c1_138 = arith.constant 1 : index
      %c0_139 = arith.constant 0 : index
      %c0_140 = arith.constant 0 : index
      %212 = vector.load %arg7[%c1_138, %c0_139, %c0_140] : memref<4x1x8xf32, #tpu.memory_space<vmem>>, vector<1x1x8xf32>
      %213 = vector.shape_cast %212 : vector<1x1x8xf32> to vector<1x8xf32>
      %214 = vector.broadcast %213 : vector<1x8xf32> to vector<8x8xf32>
      %215 = arith.addf %211, %214 : vector<8x8xf32>
      %216 = arith.truncf %215 : vector<8x8xf32> to vector<8x8xbf16>
      %c1_141 = arith.constant 1 : index
      %c0_142 = arith.constant 0 : index
      %c0_143 = arith.constant 0 : index
      %217 = vector.load %arg21[%c1_141, %c0_142, %c0_143] : memref<4x8x8xbf16, #tpu.memory_space<vmem>>, vector<1x8x8xbf16>
      %218 = vector.shape_cast %217 : vector<1x8x8xbf16> to vector<8x8xbf16>
      %219 = vector.shape_cast %216 : vector<8x8xbf16> to vector<1x8x8xbf16>
      tpu.vector_store %arg21[%c1_141, %c0_142, %c0_143], %219 {strides = array<i32>} : memref<4x8x8xbf16, #tpu.memory_space<vmem>>, vector<1x8x8xbf16>,
      %c1_144 = arith.constant 1 : index
      %c0_145 = arith.constant 0 : index
      %c0_146 = arith.constant 0 : index
      %220 = vector.load %arg8[%c1_144, %c0_145, %c0_146] : memref<4x32x8xbf16, #tpu.memory_space<vmem>>, vector<1x32x8xbf16>
      %221 = vector.shape_cast %220 : vector<1x32x8xbf16> to vector<32x8xbf16>
      %cst_147 = arith.constant dense<0.000000e+00> : vector<8x8xf32>
      %222 = tpu.matmul %186, %221, %cst_147 {dimension_numbers = #tpu.dot_dimension_numbers<[1], [0], [0], [1], [0, 0, 1, 1], [], []>} : vector<8x32xbf16>, vector<32x8xbf16>, vector<8x8xf32> -> vector<8x8xf32>
      %c1_148 = arith.constant 1 : index
      %c0_149 = arith.constant 0 : index
      %c0_150 = arith.constant 0 : index
      %223 = vector.load %arg9[%c1_148, %c0_149, %c0_150] : memref<4x1x8xf32, #tpu.memory_space<vmem>>, vector<1x1x8xf32>
      %224 = vector.shape_cast %223 : vector<1x1x8xf32> to vector<1x8xf32>
      %225 = vector.broadcast %224 : vector<1x8xf32> to vector<8x8xf32>
      %226 = arith.addf %222, %225 : vector<8x8xf32>
      %227 = arith.truncf %226 : vector<8x8xf32> to vector<8x8xbf16>
      %c1_151 = arith.constant 1 : index
      %c0_152 = arith.constant 0 : index
      %c0_153 = arith.constant 0 : index
      %228 = vector.load %arg22[%c1_151, %c0_152, %c0_153] : memref<4x8x8xbf16, #tpu.memory_space<vmem>>, vector<1x8x8xbf16>
      %229 = vector.shape_cast %228 : vector<1x8x8xbf16> to vector<8x8xbf16>
      %230 = vector.shape_cast %227 : vector<8x8xbf16> to vector<1x8x8xbf16>
      tpu.vector_store %arg22[%c1_151, %c0_152, %c0_153], %230 {strides = array<i32>} : memref<4x8x8xbf16, #tpu.memory_space<vmem>>, vector<1x8x8xbf16>,
      %c2_154 = arith.constant 2 : index
      %c0_155 = arith.constant 0 : index
      %c0_156 = arith.constant 0 : index
      %231 = vector.load %arg6[%c2_154, %c0_155, %c0_156] : memref<4x32x8xbf16, #tpu.memory_space<vmem>>, vector<1x32x8xbf16>
      %232 = vector.shape_cast %231 : vector<1x32x8xbf16> to vector<32x8xbf16>
      %cst_157 = arith.constant dense<0.000000e+00> : vector<8x8xf32>
      %233 = tpu.matmul %186, %232, %cst_157 {dimension_numbers = #tpu.dot_dimension_numbers<[1], [0], [0], [1], [0, 0, 1, 1], [], []>} : vector<8x32xbf16>, vector<32x8xbf16>, vector<8x8xf32> -> vector<8x8xf32>
      %c2_158 = arith.constant 2 : index
      %c0_159 = arith.constant 0 : index
      %c0_160 = arith.constant 0 : index
      %234 = vector.load %arg7[%c2_158, %c0_159, %c0_160] : memref<4x1x8xf32, #tpu.memory_space<vmem>>, vector<1x1x8xf32>
      %235 = vector.shape_cast %234 : vector<1x1x8xf32> to vector<1x8xf32>
      %236 = vector.broadcast %235 : vector<1x8xf32> to vector<8x8xf32>
      %237 = arith.addf %233, %236 : vector<8x8xf32>
      %238 = arith.truncf %237 : vector<8x8xf32> to vector<8x8xbf16>
      %c2_161 = arith.constant 2 : index
      %c0_162 = arith.constant 0 : index
      %c0_163 = arith.constant 0 : index
      %239 = vector.load %arg21[%c2_161, %c0_162, %c0_163] : memref<4x8x8xbf16, #tpu.memory_space<vmem>>, vector<1x8x8xbf16>
      %240 = vector.shape_cast %239 : vector<1x8x8xbf16> to vector<8x8xbf16>
      %241 = vector.shape_cast %238 : vector<8x8xbf16> to vector<1x8x8xbf16>
      tpu.vector_store %arg21[%c2_161, %c0_162, %c0_163], %241 {strides = array<i32>} : memref<4x8x8xbf16, #tpu.memory_space<vmem>>, vector<1x8x8xbf16>,
      %c2_164 = arith.constant 2 : index
      %c0_165 = arith.constant 0 : index
      %c0_166 = arith.constant 0 : index
      %242 = vector.load %arg8[%c2_164, %c0_165, %c0_166] : memref<4x32x8xbf16, #tpu.memory_space<vmem>>, vector<1x32x8xbf16>
      %243 = vector.shape_cast %242 : vector<1x32x8xbf16> to vector<32x8xbf16>
      %cst_167 = arith.constant dense<0.000000e+00> : vector<8x8xf32>
      %244 = tpu.matmul %186, %243, %cst_167 {dimension_numbers = #tpu.dot_dimension_numbers<[1], [0], [0], [1], [0, 0, 1, 1], [], []>} : vector<8x32xbf16>, vector<32x8xbf16>, vector<8x8xf32> -> vector<8x8xf32>
      %c2_168 = arith.constant 2 : index
      %c0_169 = arith.constant 0 : index
      %c0_170 = arith.constant 0 : index
      %245 = vector.load %arg9[%c2_168, %c0_169, %c0_170] : memref<4x1x8xf32, #tpu.memory_space<vmem>>, vector<1x1x8xf32>
      %246 = vector.shape_cast %245 : vector<1x1x8xf32> to vector<1x8xf32>
      %247 = vector.broadcast %246 : vector<1x8xf32> to vector<8x8xf32>
      %248 = arith.addf %244, %247 : vector<8x8xf32>
      %249 = arith.truncf %248 : vector<8x8xf32> to vector<8x8xbf16>
      %c2_171 = arith.constant 2 : index
      %c0_172 = arith.constant 0 : index
      %c0_173 = arith.constant 0 : index
      %250 = vector.load %arg22[%c2_171, %c0_172, %c0_173] : memref<4x8x8xbf16, #tpu.memory_space<vmem>>, vector<1x8x8xbf16>
      %251 = vector.shape_cast %250 : vector<1x8x8xbf16> to vector<8x8xbf16>
      %252 = vector.shape_cast %249 : vector<8x8xbf16> to vector<1x8x8xbf16>
      tpu.vector_store %arg22[%c2_171, %c0_172, %c0_173], %252 {strides = array<i32>} : memref<4x8x8xbf16, #tpu.memory_space<vmem>>, vector<1x8x8xbf16>,
      %c3_174 = arith.constant 3 : index
      %c0_175 = arith.constant 0 : index
      %c0_176 = arith.constant 0 : index
      %253 = vector.load %arg6[%c3_174, %c0_175, %c0_176] : memref<4x32x8xbf16, #tpu.memory_space<vmem>>, vector<1x32x8xbf16>
      %254 = vector.shape_cast %253 : vector<1x32x8xbf16> to vector<32x8xbf16>
      %cst_177 = arith.constant dense<0.000000e+00> : vector<8x8xf32>
      %255 = tpu.matmul %186, %254, %cst_177 {dimension_numbers = #tpu.dot_dimension_numbers<[1], [0], [0], [1], [0, 0, 1, 1], [], []>} : vector<8x32xbf16>, vector<32x8xbf16>, vector<8x8xf32> -> vector<8x8xf32>
      %c3_178 = arith.constant 3 : index
      %c0_179 = arith.constant 0 : index
      %c0_180 = arith.constant 0 : index
      %256 = vector.load %arg7[%c3_178, %c0_179, %c0_180] : memref<4x1x8xf32, #tpu.memory_space<vmem>>, vector<1x1x8xf32>
      %257 = vector.shape_cast %256 : vector<1x1x8xf32> to vector<1x8xf32>
      %258 = vector.broadcast %257 : vector<1x8xf32> to vector<8x8xf32>
      %259 = arith.addf %255, %258 : vector<8x8xf32>
      %260 = arith.truncf %259 : vector<8x8xf32> to vector<8x8xbf16>
      %c3_181 = arith.constant 3 : index
      %c0_182 = arith.constant 0 : index
      %c0_183 = arith.constant 0 : index
      %261 = vector.load %arg21[%c3_181, %c0_182, %c0_183] : memref<4x8x8xbf16, #tpu.memory_space<vmem>>, vector<1x8x8xbf16>
      %262 = vector.shape_cast %261 : vector<1x8x8xbf16> to vector<8x8xbf16>
      %263 = vector.shape_cast %260 : vector<8x8xbf16> to vector<1x8x8xbf16>
      tpu.vector_store %arg21[%c3_181, %c0_182, %c0_183], %263 {strides = array<i32>} : memref<4x8x8xbf16, #tpu.memory_space<vmem>>, vector<1x8x8xbf16>,
      %c3_184 = arith.constant 3 : index
      %c0_185 = arith.constant 0 : index
      %c0_186 = arith.constant 0 : index
      %264 = vector.load %arg8[%c3_184, %c0_185, %c0_186] : memref<4x32x8xbf16, #tpu.memory_space<vmem>>, vector<1x32x8xbf16>
      %265 = vector.shape_cast %264 : vector<1x32x8xbf16> to vector<32x8xbf16>
      %cst_187 = arith.constant dense<0.000000e+00> : vector<8x8xf32>
      %266 = tpu.matmul %186, %265, %cst_187 {dimension_numbers = #tpu.dot_dimension_numbers<[1], [0], [0], [1], [0, 0, 1, 1], [], []>} : vector<8x32xbf16>, vector<32x8xbf16>, vector<8x8xf32> -> vector<8x8xf32>
      %c3_188 = arith.constant 3 : index
      %c0_189 = arith.constant 0 : index
      %c0_190 = arith.constant 0 : index
      %267 = vector.load %arg9[%c3_188, %c0_189, %c0_190] : memref<4x1x8xf32, #tpu.memory_space<vmem>>, vector<1x1x8xf32>
      %268 = vector.shape_cast %267 : vector<1x1x8xf32> to vector<1x8xf32>
      %269 = vector.broadcast %268 : vector<1x8xf32> to vector<8x8xf32>
      %270 = arith.addf %266, %269 : vector<8x8xf32>
      %271 = arith.truncf %270 : vector<8x8xf32> to vector<8x8xbf16>
      %c3_191 = arith.constant 3 : index
      %c0_192 = arith.constant 0 : index
      %c0_193 = arith.constant 0 : index
      %272 = vector.load %arg22[%c3_191, %c0_192, %c0_193] : memref<4x8x8xbf16, #tpu.memory_space<vmem>>, vector<1x8x8xbf16>
      %273 = vector.shape_cast %272 : vector<1x8x8xbf16> to vector<8x8xbf16>
      %274 = vector.shape_cast %271 : vector<8x8xbf16> to vector<1x8x8xbf16>
      tpu.vector_store %arg22[%c3_191, %c0_192, %c0_193], %274 {strides = array<i32>} : memref<4x8x8xbf16, #tpu.memory_space<vmem>>, vector<1x8x8xbf16>,
    } else {
    }
    %c0 = arith.constant 0 : index
    %c0_1 = arith.constant 0 : index
    %c0_2 = arith.constant 0 : index
    %3 = vector.load %arg2[%c0, %c0_1, %c0_2] : memref<1x8x32xf32, #tpu.memory_space<vmem>>, vector<1x8x32xf32>
    %4 = vector.shape_cast %3 : vector<1x8x32xf32> to vector<8x32xf32>
    %5 = arith.truncf %4 : vector<8x32xf32> to vector<8x32xbf16>
    %c0_3 = arith.constant 0 : index
    %c0_4 = arith.constant 0 : index
    %c0_5 = arith.constant 0 : index
    %6 = vector.load %arg4[%c0_3, %c0_4, %c0_5] : memref<4x32x8xbf16, #tpu.memory_space<vmem>>, vector<1x32x8xbf16>
    %7 = vector.shape_cast %6 : vector<1x32x8xbf16> to vector<32x8xbf16>
    %cst = arith.constant dense<0.000000e+00> : vector<8x8xf32>
    %8 = tpu.matmul %5, %7, %cst {dimension_numbers = #tpu.dot_dimension_numbers<[1], [0], [0], [1], [0, 0, 1, 1], [], []>} : vector<8x32xbf16>, vector<32x8xbf16>, vector<8x8xf32> -> vector<8x8xf32>
    %c0_6 = arith.constant 0 : index
    %c0_7 = arith.constant 0 : index
    %c0_8 = arith.constant 0 : index
    %9 = vector.load %arg5[%c0_6, %c0_7, %c0_8] : memref<4x1x8xf32, #tpu.memory_space<vmem>>, vector<1x1x8xf32>
    %10 = vector.shape_cast %9 : vector<1x1x8xf32> to vector<1x8xf32>
    %11 = vector.broadcast %10 : vector<1x8xf32> to vector<8x8xf32>
    %12 = arith.addf %8, %11 : vector<8x8xf32>
    %c0_9 = arith.constant 0 : index
    %c0_10 = arith.constant 0 : index
    %c0_11 = arith.constant 0 : index
    %13 = vector.load %arg21[%c0_9, %c0_10, %c0_11] : memref<4x8x8xbf16, #tpu.memory_space<vmem>>, vector<1x8x8xbf16>
    %14 = vector.shape_cast %13 : vector<1x8x8xbf16> to vector<8x8xbf16>
    %15 = arith.truncf %12 : vector<8x8xf32> to vector<8x8xbf16>
    %cst_12 = arith.constant dense<0.000000e+00> : vector<8x8xf32>
    %16 = tpu.matmul %15, %14, %cst_12 {dimension_numbers = #tpu.dot_dimension_numbers<[1], [1], [0], [0], [0, 0, 1, 0], [], []>} : vector<8x8xbf16>, vector<8x8xbf16>, vector<8x8xf32> -> vector<8x8xf32>
    %cst_13 = arith.constant dense<0xFF800000> : vector<8xf32>
    %17 = vector.multi_reduction <maximumf>, %16, %cst_13 [1] : vector<8x8xf32> to vector<8xf32>
    %18 = vector.shape_cast %17 : vector<8xf32> to vector<8x1xf32>
    %19 = vector.broadcast %18 : vector<8x1xf32> to vector<8x8xf32>
    %20 = arith.subf %16, %19 : vector<8x8xf32>
    %21 = math.exp %20 : vector<8x8xf32>
    %cst_14 = arith.constant dense<0.000000e+00> : vector<8xf32>
    %22 = vector.multi_reduction <add>, %21, %cst_14 [1] : vector<8x8xf32> to vector<8xf32>
    %23 = vector.shape_cast %22 : vector<8xf32> to vector<8x1xf32>
    %24 = tpu.reciprocal %23 : vector<8x1xf32> -> vector<8x1xf32>
    %25 = vector.broadcast %24 : vector<8x1xf32> to vector<8x8xf32>
    %26 = arith.mulf %21, %25 : vector<8x8xf32>
    %c0_15 = arith.constant 0 : index
    %c0_16 = arith.constant 0 : index
    %c0_17 = arith.constant 0 : index
    %27 = vector.load %arg22[%c0_15, %c0_16, %c0_17] : memref<4x8x8xbf16, #tpu.memory_space<vmem>>, vector<1x8x8xbf16>
    %28 = vector.shape_cast %27 : vector<1x8x8xbf16> to vector<8x8xbf16>
    %29 = arith.truncf %26 : vector<8x8xf32> to vector<8x8xbf16>
    %cst_18 = arith.constant dense<0.000000e+00> : vector<8x8xf32>
    %30 = tpu.matmul %29, %28, %cst_18 {dimension_numbers = #tpu.dot_dimension_numbers<[1], [0], [0], [1], [0, 0, 1, 1], [], []>} : vector<8x8xbf16>, vector<8x8xbf16>, vector<8x8xf32> -> vector<8x8xf32>
    %c0_19 = arith.constant 0 : index
    %c0_20 = arith.constant 0 : index
    %31 = vector.load %arg23[%c0_19, %c0_20] : memref<8x32xf32, #tpu.memory_space<vmem>>, vector<8x8xf32>
    tpu.vector_store %arg23[%c0_19, %c0_20], %30 {strides = array<i32>} : memref<8x32xf32, #tpu.memory_space<vmem>>, vector<8x8xf32>,
    %c1 = arith.constant 1 : index
    %c0_21 = arith.constant 0 : index
    %c0_22 = arith.constant 0 : index
    %32 = vector.load %arg4[%c1, %c0_21, %c0_22] : memref<4x32x8xbf16, #tpu.memory_space<vmem>>, vector<1x32x8xbf16>
    %33 = vector.shape_cast %32 : vector<1x32x8xbf16> to vector<32x8xbf16>
    %cst_23 = arith.constant dense<0.000000e+00> : vector<8x8xf32>
    %34 = tpu.matmul %5, %33, %cst_23 {dimension_numbers = #tpu.dot_dimension_numbers<[1], [0], [0], [1], [0, 0, 1, 1], [], []>} : vector<8x32xbf16>, vector<32x8xbf16>, vector<8x8xf32> -> vector<8x8xf32>
    %c1_24 = arith.constant 1 : index
    %c0_25 = arith.constant 0 : index
    %c0_26 = arith.constant 0 : index
    %35 = vector.load %arg5[%c1_24, %c0_25, %c0_26] : memref<4x1x8xf32, #tpu.memory_space<vmem>>, vector<1x1x8xf32>
    %36 = vector.shape_cast %35 : vector<1x1x8xf32> to vector<1x8xf32>
    %37 = vector.broadcast %36 : vector<1x8xf32> to vector<8x8xf32>
    %38 = arith.addf %34, %37 : vector<8x8xf32>
    %c1_27 = arith.constant 1 : index
    %c0_28 = arith.constant 0 : index
    %c0_29 = arith.constant 0 : index
    %39 = vector.load %arg21[%c1_27, %c0_28, %c0_29] : memref<4x8x8xbf16, #tpu.memory_space<vmem>>, vector<1x8x8xbf16>
    %40 = vector.shape_cast %39 : vector<1x8x8xbf16> to vector<8x8xbf16>
    %41 = arith.truncf %38 : vector<8x8xf32> to vector<8x8xbf16>
    %cst_30 = arith.constant dense<0.000000e+00> : vector<8x8xf32>
    %42 = tpu.matmul %41, %40, %cst_30 {dimension_numbers = #tpu.dot_dimension_numbers<[1], [1], [0], [0], [0, 0, 1, 0], [], []>} : vector<8x8xbf16>, vector<8x8xbf16>, vector<8x8xf32> -> vector<8x8xf32>
    %cst_31 = arith.constant dense<0xFF800000> : vector<8xf32>
    %43 = vector.multi_reduction <maximumf>, %42, %cst_31 [1] : vector<8x8xf32> to vector<8xf32>
    %44 = vector.shape_cast %43 : vector<8xf32> to vector<8x1xf32>
    %45 = vector.broadcast %44 : vector<8x1xf32> to vector<8x8xf32>
    %46 = arith.subf %42, %45 : vector<8x8xf32>
    %47 = math.exp %46 : vector<8x8xf32>
    %cst_32 = arith.constant dense<0.000000e+00> : vector<8xf32>
    %48 = vector.multi_reduction <add>, %47, %cst_32 [1] : vector<8x8xf32> to vector<8xf32>
    %49 = vector.shape_cast %48 : vector<8xf32> to vector<8x1xf32>
    %50 = tpu.reciprocal %49 : vector<8x1xf32> -> vector<8x1xf32>
    %51 = vector.broadcast %50 : vector<8x1xf32> to vector<8x8xf32>
    %52 = arith.mulf %47, %51 : vector<8x8xf32>
    %c1_33 = arith.constant 1 : index
    %c0_34 = arith.constant 0 : index
    %c0_35 = arith.constant 0 : index
    %53 = vector.load %arg22[%c1_33, %c0_34, %c0_35] : memref<4x8x8xbf16, #tpu.memory_space<vmem>>, vector<1x8x8xbf16>
    %54 = vector.shape_cast %53 : vector<1x8x8xbf16> to vector<8x8xbf16>
    %55 = arith.truncf %52 : vector<8x8xf32> to vector<8x8xbf16>
    %cst_36 = arith.constant dense<0.000000e+00> : vector<8x8xf32>
    %56 = tpu.matmul %55, %54, %cst_36 {dimension_numbers = #tpu.dot_dimension_numbers<[1], [0], [0], [1], [0, 0, 1, 1], [], []>} : vector<8x8xbf16>, vector<8x8xbf16>, vector<8x8xf32> -> vector<8x8xf32>
    %c0_37 = arith.constant 0 : index
    %c8 = arith.constant 8 : index
    %57 = vector.load %arg23[%c0_37, %c8] : memref<8x32xf32, #tpu.memory_space<vmem>>, vector<8x8xf32>
    tpu.vector_store %arg23[%c0_37, %c8], %56 {strides = array<i32>} : memref<8x32xf32, #tpu.memory_space<vmem>>, vector<8x8xf32>,
    %c2 = arith.constant 2 : index
    %c0_38 = arith.constant 0 : index
    %c0_39 = arith.constant 0 : index
    %58 = vector.load %arg4[%c2, %c0_38, %c0_39] : memref<4x32x8xbf16, #tpu.memory_space<vmem>>, vector<1x32x8xbf16>
    %59 = vector.shape_cast %58 : vector<1x32x8xbf16> to vector<32x8xbf16>
    %cst_40 = arith.constant dense<0.000000e+00> : vector<8x8xf32>
    %60 = tpu.matmul %5, %59, %cst_40 {dimension_numbers = #tpu.dot_dimension_numbers<[1], [0], [0], [1], [0, 0, 1, 1], [], []>} : vector<8x32xbf16>, vector<32x8xbf16>, vector<8x8xf32> -> vector<8x8xf32>
    %c2_41 = arith.constant 2 : index
    %c0_42 = arith.constant 0 : index
    %c0_43 = arith.constant 0 : index
    %61 = vector.load %arg5[%c2_41, %c0_42, %c0_43] : memref<4x1x8xf32, #tpu.memory_space<vmem>>, vector<1x1x8xf32>
    %62 = vector.shape_cast %61 : vector<1x1x8xf32> to vector<1x8xf32>
    %63 = vector.broadcast %62 : vector<1x8xf32> to vector<8x8xf32>
    %64 = arith.addf %60, %63 : vector<8x8xf32>
    %c2_44 = arith.constant 2 : index
    %c0_45 = arith.constant 0 : index
    %c0_46 = arith.constant 0 : index
    %65 = vector.load %arg21[%c2_44, %c0_45, %c0_46] : memref<4x8x8xbf16, #tpu.memory_space<vmem>>, vector<1x8x8xbf16>
    %66 = vector.shape_cast %65 : vector<1x8x8xbf16> to vector<8x8xbf16>
    %67 = arith.truncf %64 : vector<8x8xf32> to vector<8x8xbf16>
    %cst_47 = arith.constant dense<0.000000e+00> : vector<8x8xf32>
    %68 = tpu.matmul %67, %66, %cst_47 {dimension_numbers = #tpu.dot_dimension_numbers<[1], [1], [0], [0], [0, 0, 1, 0], [], []>} : vector<8x8xbf16>, vector<8x8xbf16>, vector<8x8xf32> -> vector<8x8xf32>
    %cst_48 = arith.constant dense<0xFF800000> : vector<8xf32>
    %69 = vector.multi_reduction <maximumf>, %68, %cst_48 [1] : vector<8x8xf32> to vector<8xf32>
    %70 = vector.shape_cast %69 : vector<8xf32> to vector<8x1xf32>
    %71 = vector.broadcast %70 : vector<8x1xf32> to vector<8x8xf32>
    %72 = arith.subf %68, %71 : vector<8x8xf32>
    %73 = math.exp %72 : vector<8x8xf32>
    %cst_49 = arith.constant dense<0.000000e+00> : vector<8xf32>
    %74 = vector.multi_reduction <add>, %73, %cst_49 [1] : vector<8x8xf32> to vector<8xf32>
    %75 = vector.shape_cast %74 : vector<8xf32> to vector<8x1xf32>
    %76 = tpu.reciprocal %75 : vector<8x1xf32> -> vector<8x1xf32>
    %77 = vector.broadcast %76 : vector<8x1xf32> to vector<8x8xf32>
    %78 = arith.mulf %73, %77 : vector<8x8xf32>
    %c2_50 = arith.constant 2 : index
    %c0_51 = arith.constant 0 : index
    %c0_52 = arith.constant 0 : index
    %79 = vector.load %arg22[%c2_50, %c0_51, %c0_52] : memref<4x8x8xbf16, #tpu.memory_space<vmem>>, vector<1x8x8xbf16>
    %80 = vector.shape_cast %79 : vector<1x8x8xbf16> to vector<8x8xbf16>
    %81 = arith.truncf %78 : vector<8x8xf32> to vector<8x8xbf16>
    %cst_53 = arith.constant dense<0.000000e+00> : vector<8x8xf32>
    %82 = tpu.matmul %81, %80, %cst_53 {dimension_numbers = #tpu.dot_dimension_numbers<[1], [0], [0], [1], [0, 0, 1, 1], [], []>} : vector<8x8xbf16>, vector<8x8xbf16>, vector<8x8xf32> -> vector<8x8xf32>
    %c0_54 = arith.constant 0 : index
    %c16 = arith.constant 16 : index
    %83 = vector.load %arg23[%c0_54, %c16] : memref<8x32xf32, #tpu.memory_space<vmem>>, vector<8x8xf32>
    tpu.vector_store %arg23[%c0_54, %c16], %82 {strides = array<i32>} : memref<8x32xf32, #tpu.memory_space<vmem>>, vector<8x8xf32>,
    %c3 = arith.constant 3 : index
    %c0_55 = arith.constant 0 : index
    %c0_56 = arith.constant 0 : index
    %84 = vector.load %arg4[%c3, %c0_55, %c0_56] : memref<4x32x8xbf16, #tpu.memory_space<vmem>>, vector<1x32x8xbf16>
    %85 = vector.shape_cast %84 : vector<1x32x8xbf16> to vector<32x8xbf16>
    %cst_57 = arith.constant dense<0.000000e+00> : vector<8x8xf32>
    %86 = tpu.matmul %5, %85, %cst_57 {dimension_numbers = #tpu.dot_dimension_numbers<[1], [0], [0], [1], [0, 0, 1, 1], [], []>} : vector<8x32xbf16>, vector<32x8xbf16>, vector<8x8xf32> -> vector<8x8xf32>
    %c3_58 = arith.constant 3 : index
    %c0_59 = arith.constant 0 : index
    %c0_60 = arith.constant 0 : index
    %87 = vector.load %arg5[%c3_58, %c0_59, %c0_60] : memref<4x1x8xf32, #tpu.memory_space<vmem>>, vector<1x1x8xf32>
    %88 = vector.shape_cast %87 : vector<1x1x8xf32> to vector<1x8xf32>
    %89 = vector.broadcast %88 : vector<1x8xf32> to vector<8x8xf32>
    %90 = arith.addf %86, %89 : vector<8x8xf32>
    %c3_61 = arith.constant 3 : index
    %c0_62 = arith.constant 0 : index
    %c0_63 = arith.constant 0 : index
    %91 = vector.load %arg21[%c3_61, %c0_62, %c0_63] : memref<4x8x8xbf16, #tpu.memory_space<vmem>>, vector<1x8x8xbf16>
    %92 = vector.shape_cast %91 : vector<1x8x8xbf16> to vector<8x8xbf16>
    %93 = arith.truncf %90 : vector<8x8xf32> to vector<8x8xbf16>
    %cst_64 = arith.constant dense<0.000000e+00> : vector<8x8xf32>
    %94 = tpu.matmul %93, %92, %cst_64 {dimension_numbers = #tpu.dot_dimension_numbers<[1], [1], [0], [0], [0, 0, 1, 0], [], []>} : vector<8x8xbf16>, vector<8x8xbf16>, vector<8x8xf32> -> vector<8x8xf32>
    %cst_65 = arith.constant dense<0xFF800000> : vector<8xf32>
    %95 = vector.multi_reduction <maximumf>, %94, %cst_65 [1] : vector<8x8xf32> to vector<8xf32>
    %96 = vector.shape_cast %95 : vector<8xf32> to vector<8x1xf32>
    %97 = vector.broadcast %96 : vector<8x1xf32> to vector<8x8xf32>
    %98 = arith.subf %94, %97 : vector<8x8xf32>
    %99 = math.exp %98 : vector<8x8xf32>
    %cst_66 = arith.constant dense<0.000000e+00> : vector<8xf32>
    %100 = vector.multi_reduction <add>, %99, %cst_66 [1] : vector<8x8xf32> to vector<8xf32>
    %101 = vector.shape_cast %100 : vector<8xf32> to vector<8x1xf32>
    %102 = tpu.reciprocal %101 : vector<8x1xf32> -> vector<8x1xf32>
    %103 = vector.broadcast %102 : vector<8x1xf32> to vector<8x8xf32>
    %104 = arith.mulf %99, %103 : vector<8x8xf32>
    %c3_67 = arith.constant 3 : index
    %c0_68 = arith.constant 0 : index
    %c0_69 = arith.constant 0 : index
    %105 = vector.load %arg22[%c3_67, %c0_68, %c0_69] : memref<4x8x8xbf16, #tpu.memory_space<vmem>>, vector<1x8x8xbf16>
    %106 = vector.shape_cast %105 : vector<1x8x8xbf16> to vector<8x8xbf16>
    %107 = arith.truncf %104 : vector<8x8xf32> to vector<8x8xbf16>
    %cst_70 = arith.constant dense<0.000000e+00> : vector<8x8xf32>
    %108 = tpu.matmul %107, %106, %cst_70 {dimension_numbers = #tpu.dot_dimension_numbers<[1], [0], [0], [1], [0, 0, 1, 1], [], []>} : vector<8x8xbf16>, vector<8x8xbf16>, vector<8x8xf32> -> vector<8x8xf32>
    %c0_71 = arith.constant 0 : index
    %c24 = arith.constant 24 : index
    %109 = vector.load %arg23[%c0_71, %c24] : memref<8x32xf32, #tpu.memory_space<vmem>>, vector<8x8xf32>
    tpu.vector_store %arg23[%c0_71, %c24], %108 {strides = array<i32>} : memref<8x32xf32, #tpu.memory_space<vmem>>, vector<8x8xf32>,
    %c0_72 = arith.constant 0 : index
    %c0_73 = arith.constant 0 : index
    %110 = vector.load %arg23[%c0_72, %c0_73] : memref<8x32xf32, #tpu.memory_space<vmem>>, vector<8x32xf32>
    %c0_74 = arith.constant 0 : index
    %c0_75 = arith.constant 0 : index
    %111 = vector.load %arg10[%c0_74, %c0_75] : memref<32x32xbf16, #tpu.memory_space<vmem>>, vector<32x32xbf16>
    %112 = arith.truncf %110 : vector<8x32xf32> to vector<8x32xbf16>
    %cst_76 = arith.constant dense<0.000000e+00> : vector<8x32xf32>
    %113 = tpu.matmul %112, %111, %cst_76 {dimension_numbers = #tpu.dot_dimension_numbers<[1], [0], [0], [1], [0, 0, 1, 1], [], []>} : vector<8x32xbf16>, vector<32x32xbf16>, vector<8x32xf32> -> vector<8x32xf32>
    %c0_77 = arith.constant 0 : index
    %c0_78 = arith.constant 0 : index
    %114 = vector.load %arg11[%c0_77, %c0_78] : memref<1x32xf32, #tpu.memory_space<vmem>>, vector<1x32xf32>
    %115 = vector.broadcast %114 : vector<1x32xf32> to vector<8x32xf32>
    %116 = arith.addf %113, %115 : vector<8x32xf32>
    %117 = arith.addf %4, %116 : vector<8x32xf32>
    %c0_79 = arith.constant 0 : index
    %c0_80 = arith.constant 0 : index
    %118 = vector.load %arg12[%c0_79, %c0_80] : memref<1x32xf32, #tpu.memory_space<vmem>>, vector<1x32xf32>
    %c0_81 = arith.constant 0 : index
    %c0_82 = arith.constant 0 : index
    %119 = vector.load %arg13[%c0_81, %c0_82] : memref<1x32xf32, #tpu.memory_space<vmem>>, vector<1x32xf32>
    %cst_83 = arith.constant dense<0.000000e+00> : vector<8xf32>
    %120 = vector.multi_reduction <add>, %117, %cst_83 [1] : vector<8x32xf32> to vector<8xf32>
    %121 = vector.shape_cast %120 : vector<8xf32> to vector<8x1xf32>
    %cst_84 = arith.constant 3.200000e+01 : f32
    %122 = vector.broadcast %cst_84 : f32 to vector<8x1xf32>
    %123 = arith.divf %121, %122 : vector<8x1xf32>
    %124 = vector.broadcast %123 : vector<8x1xf32> to vector<8x32xf32>
    %125 = arith.subf %117, %124 : vector<8x32xf32>
    %126 = arith.mulf %125, %125 : vector<8x32xf32>
    %cst_85 = arith.constant dense<0.000000e+00> : vector<8xf32>
    %127 = vector.multi_reduction <add>, %126, %cst_85 [1] : vector<8x32xf32> to vector<8xf32>
    %128 = vector.shape_cast %127 : vector<8xf32> to vector<8x1xf32>
    %cst_86 = arith.constant 3.200000e+01 : f32
    %129 = vector.broadcast %cst_86 : f32 to vector<8x1xf32>
    %130 = arith.divf %128, %129 : vector<8x1xf32>
    %131 = vector.broadcast %123 : vector<8x1xf32> to vector<8x32xf32>
    %132 = arith.subf %117, %131 : vector<8x32xf32>
    %cst_87 = arith.constant 9.99999974E-6 : f32
    %133 = vector.broadcast %cst_87 : f32 to vector<8x1xf32>
    %134 = arith.addf %130, %133 : vector<8x1xf32>
    %135 = math.rsqrt %134 : vector<8x1xf32>
    %136 = vector.broadcast %135 : vector<8x1xf32> to vector<8x32xf32>
    %137 = arith.mulf %132, %136 : vector<8x32xf32>
    %138 = vector.broadcast %118 : vector<1x32xf32> to vector<8x32xf32>
    %139 = arith.mulf %137, %138 : vector<8x32xf32>
    %140 = vector.broadcast %119 : vector<1x32xf32> to vector<8x32xf32>
    %141 = arith.addf %139, %140 : vector<8x32xf32>
    %c0_88 = arith.constant 0 : index
    %c0_89 = arith.constant 0 : index
    %142 = vector.load %arg14[%c0_88, %c0_89] : memref<32x32xbf16, #tpu.memory_space<vmem>>, vector<32x32xbf16>
    %143 = arith.truncf %141 : vector<8x32xf32> to vector<8x32xbf16>
    %cst_90 = arith.constant dense<0.000000e+00> : vector<8x32xf32>
    %144 = tpu.matmul %143, %142, %cst_90 {dimension_numbers = #tpu.dot_dimension_numbers<[1], [0], [0], [1], [0, 0, 1, 1], [], []>} : vector<8x32xbf16>, vector<32x32xbf16>, vector<8x32xf32> -> vector<8x32xf32>
    %c0_91 = arith.constant 0 : index
    %c0_92 = arith.constant 0 : index
    %145 = vector.load %arg15[%c0_91, %c0_92] : memref<1x32xf32, #tpu.memory_space<vmem>>, vector<1x32xf32>
    %146 = vector.broadcast %145 : vector<1x32xf32> to vector<8x32xf32>
    %147 = arith.addf %144, %146 : vector<8x32xf32>
    %cst_93 = arith.constant 0.000000e+00 : f32
    %148 = vector.broadcast %cst_93 : f32 to vector<8x32xf32>
    %149 = arith.maximumf %147, %148 : vector<8x32xf32>
    %c0_94 = arith.constant 0 : index
    %c0_95 = arith.constant 0 : index
    %150 = vector.load %arg16[%c0_94, %c0_95] : memref<32x32xbf16, #tpu.memory_space<vmem>>, vector<32x32xbf16>
    %151 = arith.truncf %149 : vector<8x32xf32> to vector<8x32xbf16>
    %cst_96 = arith.constant dense<0.000000e+00> : vector<8x32xf32>
    %152 = tpu.matmul %151, %150, %cst_96 {dimension_numbers = #tpu.dot_dimension_numbers<[1], [0], [0], [1], [0, 0, 1, 1], [], []>} : vector<8x32xbf16>, vector<32x32xbf16>, vector<8x32xf32> -> vector<8x32xf32>
    %c0_97 = arith.constant 0 : index
    %c0_98 = arith.constant 0 : index
    %153 = vector.load %arg17[%c0_97, %c0_98] : memref<1x32xf32, #tpu.memory_space<vmem>>, vector<1x32xf32>
    %154 = vector.broadcast %153 : vector<1x32xf32> to vector<8x32xf32>
    %155 = arith.addf %152, %154 : vector<8x32xf32>
    %156 = arith.addf %141, %155 : vector<8x32xf32>
    %c0_99 = arith.constant 0 : index
    %c0_100 = arith.constant 0 : index
    %157 = vector.load %arg18[%c0_99, %c0_100] : memref<1x32xf32, #tpu.memory_space<vmem>>, vector<1x32xf32>
    %c0_101 = arith.constant 0 : index
    %c0_102 = arith.constant 0 : index
    %158 = vector.load %arg19[%c0_101, %c0_102] : memref<1x32xf32, #tpu.memory_space<vmem>>, vector<1x32xf32>
    %cst_103 = arith.constant dense<0.000000e+00> : vector<8xf32>
    %159 = vector.multi_reduction <add>, %156, %cst_103 [1] : vector<8x32xf32> to vector<8xf32>
    %160 = vector.shape_cast %159 : vector<8xf32> to vector<8x1xf32>
    %cst_104 = arith.constant 3.200000e+01 : f32
    %161 = vector.broadcast %cst_104 : f32 to vector<8x1xf32>
    %162 = arith.divf %160, %161 : vector<8x1xf32>
    %163 = vector.broadcast %162 : vector<8x1xf32> to vector<8x32xf32>
    %164 = arith.subf %156, %163 : vector<8x32xf32>
    %165 = arith.mulf %164, %164 : vector<8x32xf32>
    %cst_105 = arith.constant dense<0.000000e+00> : vector<8xf32>
    %166 = vector.multi_reduction <add>, %165, %cst_105 [1] : vector<8x32xf32> to vector<8xf32>
    %167 = vector.shape_cast %166 : vector<8xf32> to vector<8x1xf32>
    %cst_106 = arith.constant 3.200000e+01 : f32
    %168 = vector.broadcast %cst_106 : f32 to vector<8x1xf32>
    %169 = arith.divf %167, %168 : vector<8x1xf32>
    %170 = vector.broadcast %162 : vector<8x1xf32> to vector<8x32xf32>
    %171 = arith.subf %156, %170 : vector<8x32xf32>
    %cst_107 = arith.constant 9.99999974E-6 : f32
    %172 = vector.broadcast %cst_107 : f32 to vector<8x1xf32>
    %173 = arith.addf %169, %172 : vector<8x1xf32>
    %174 = math.rsqrt %173 : vector<8x1xf32>
    %175 = vector.broadcast %174 : vector<8x1xf32> to vector<8x32xf32>
    %176 = arith.mulf %171, %175 : vector<8x32xf32>
    %177 = vector.broadcast %157 : vector<1x32xf32> to vector<8x32xf32>
    %178 = arith.mulf %176, %177 : vector<8x32xf32>
    %179 = vector.broadcast %158 : vector<1x32xf32> to vector<8x32xf32>
    %180 = arith.addf %178, %179 : vector<8x32xf32>
    %c0_108 = arith.constant 0 : index
    %c0_109 = arith.constant 0 : index
    %c0_110 = arith.constant 0 : index
    %181 = vector.load %arg20[%c0_108, %c0_109, %c0_110] : memref<1x8x32xf32, #tpu.memory_space<vmem>>, vector<1x8x32xf32>
    %182 = vector.shape_cast %181 : vector<1x8x32xf32> to vector<8x32xf32>
    %183 = vector.shape_cast %180 : vector<8x32xf32> to vector<1x8x32xf32>
    tpu.vector_store %arg20[%c0_108, %c0_109, %c0_110], %183 {strides = array<i32>} : memref<1x8x32xf32, #tpu.memory_space<vmem>>, vector<1x8x32xf32>,
    return
  }
  func.func @transform_0(%arg0: i32, %arg1: i32) -> (i32, i32, i32) {
    %c0_i32 = arith.constant 0 : i32
    %c0_i32_0 = arith.constant 0 : i32
    return %arg0, %arg1, %c0_i32 : i32, i32, i32
  }
  func.func @transform_1(%arg0: i32, %arg1: i32) -> (i32, i32, i32) {
    %c0_i32 = arith.constant 0 : i32
    %c0_i32_0 = arith.constant 0 : i32
    %c0_i32_1 = arith.constant 0 : i32
    return %arg0, %c0_i32, %c0_i32_0 : i32, i32, i32
  }
  func.func @transform_2(%arg0: i32, %arg1: i32) -> (i32, i32, i32) {
    %c0_i32 = arith.constant 0 : i32
    %c0_i32_0 = arith.constant 0 : i32
    %c0_i32_1 = arith.constant 0 : i32
    %c0_i32_2 = arith.constant 0 : i32
    return %c0_i32, %c0_i32_0, %c0_i32_1 : i32, i32, i32
  }
  func.func @transform_3(%arg0: i32, %arg1: i32) -> (i32, i32, i32) {
    %c0_i32 = arith.constant 0 : i32
    %c0_i32_0 = arith.constant 0 : i32
    %c0_i32_1 = arith.constant 0 : i32
    %c0_i32_2 = arith.constant 0 : i32
    return %c0_i32, %c0_i32_0, %c0_i32_1 : i32, i32, i32
  }
  func.func @transform_4(%arg0: i32, %arg1: i32) -> (i32, i32, i32) {
    %c0_i32 = arith.constant 0 : i32
    %c0_i32_0 = arith.constant 0 : i32
    %c0_i32_1 = arith.constant 0 : i32
    %c0_i32_2 = arith.constant 0 : i32
    return %c0_i32, %c0_i32_0, %c0_i32_1 : i32, i32, i32
  }
  func.func @transform_5(%arg0: i32, %arg1: i32) -> (i32, i32, i32) {
    %c0_i32 = arith.constant 0 : i32
    %c0_i32_0 = arith.constant 0 : i32
    %c0_i32_1 = arith.constant 0 : i32
    %c0_i32_2 = arith.constant 0 : i32
    return %c0_i32, %c0_i32_0, %c0_i32_1 : i32, i32, i32
  }
  func.func @transform_6(%arg0: i32, %arg1: i32) -> (i32, i32, i32) {
    %c0_i32 = arith.constant 0 : i32
    %c0_i32_0 = arith.constant 0 : i32
    %c0_i32_1 = arith.constant 0 : i32
    %c0_i32_2 = arith.constant 0 : i32
    return %c0_i32, %c0_i32_0, %c0_i32_1 : i32, i32, i32
  }
  func.func @transform_7(%arg0: i32, %arg1: i32) -> (i32, i32, i32) {
    %c0_i32 = arith.constant 0 : i32
    %c0_i32_0 = arith.constant 0 : i32
    %c0_i32_1 = arith.constant 0 : i32
    %c0_i32_2 = arith.constant 0 : i32
    return %c0_i32, %c0_i32_0, %c0_i32_1 : i32, i32, i32
  }
  func.func @transform_8(%arg0: i32, %arg1: i32) -> (i32, i32) {
    %c0_i32 = arith.constant 0 : i32
    %c0_i32_0 = arith.constant 0 : i32
    %c0_i32_1 = arith.constant 0 : i32
    return %c0_i32, %c0_i32_0 : i32, i32
  }
  func.func @transform_9(%arg0: i32, %arg1: i32) -> (i32, i32) {
    %c0_i32 = arith.constant 0 : i32
    %c0_i32_0 = arith.constant 0 : i32
    %c0_i32_1 = arith.constant 0 : i32
    return %c0_i32, %c0_i32_0 : i32, i32
  }
  func.func @transform_10(%arg0: i32, %arg1: i32) -> (i32, i32) {
    %c0_i32 = arith.constant 0 : i32
    %c0_i32_0 = arith.constant 0 : i32
    %c0_i32_1 = arith.constant 0 : i32
    return %c0_i32, %c0_i32_0 : i32, i32
  }
  func.func @transform_11(%arg0: i32, %arg1: i32) -> (i32, i32) {
    %c0_i32 = arith.constant 0 : i32
    %c0_i32_0 = arith.constant 0 : i32
    %c0_i32_1 = arith.constant 0 : i32
    return %c0_i32, %c0_i32_0 : i32, i32
  }
  func.func @transform_12(%arg0: i32, %arg1: i32) -> (i32, i32) {
    %c0_i32 = arith.constant 0 : i32
    %c0_i32_0 = arith.constant 0 : i32
    %c0_i32_1 = arith.constant 0 : i32
    return %c0_i32, %c0_i32_0 : i32, i32
  }
  func.func @transform_13(%arg0: i32, %arg1: i32) -> (i32, i32) {
    %c0_i32 = arith.constant 0 : i32
    %c0_i32_0 = arith.constant 0 : i32
    %c0_i32_1 = arith.constant 0 : i32
    return %c0_i32, %c0_i32_0 : i32, i32
  }
  func.func @transform_14(%arg0: i32, %arg1: i32) -> (i32, i32) {
    %c0_i32 = arith.constant 0 : i32
    %c0_i32_0 = arith.constant 0 : i32
    %c0_i32_1 = arith.constant 0 : i32
    return %c0_i32, %c0_i32_0 : i32, i32
  }
  func.func @transform_15(%arg0: i32, %arg1: i32) -> (i32, i32) {
    %c0_i32 = arith.constant 0 : i32
    %c0_i32_0 = arith.constant 0 : i32
    %c0_i32_1 = arith.constant 0 : i32
    return %c0_i32, %c0_i32_0 : i32, i32
  }
  func.func @transform_16(%arg0: i32, %arg1: i32) -> (i32, i32) {
    %c0_i32 = arith.constant 0 : i32
    %c0_i32_0 = arith.constant 0 : i32
    %c0_i32_1 = arith.constant 0 : i32
    return %c0_i32, %c0_i32_0 : i32, i32
  }
  func.func @transform_17(%arg0: i32, %arg1: i32) -> (i32, i32) {
    %c0_i32 = arith.constant 0 : i32
    %c0_i32_0 = arith.constant 0 : i32
    %c0_i32_1 = arith.constant 0 : i32
    return %c0_i32, %c0_i32_0 : i32, i32
  }
  func.func @transform_18(%arg0: i32, %arg1: i32) -> (i32, i32, i32) {
    %c0_i32 = arith.constant 0 : i32
    %c0_i32_0 = arith.constant 0 : i32
    return %arg0, %arg1, %c0_i32 : i32, i32, i32
  }
}

</mosaic_0001>

<llo_original>
// kernel: tpu_custom_call.1
$region0: #{tpu_custom_call.1}
  #allocation0 [shape = 'u32[]', space=smem, size = 0x4, offset = 0x4, fixed_abs, tag = 'smem constant byte address 0x4 - core index']
  #allocation1 [shape = 'u32[144,128]{1,0:T(1,128)}', space=vmem, size = 0x12000, scoped, tag = 'internal scratch']
  %s0 = inlined_call_operand.hbm [shape: f32[16,128], index: 0, kind: input, shape index: {}]
  %s1 = inlined_call_operand.hbm [shape: f32[8,128], index: 1, kind: input, shape index: {}]
  %s2 = inlined_call_operand.hbm [shape: f32[16,128], index: 2, kind: output, shape index: {}]
  %s3 = sld [smem:[#allocation0]]
  $region49: #{tpu_custom_call.1} parent=0
    _
  %s5 = ssub.s32 1, %s3
  %s6 = scalar_select 0, %s5, %s3
  $region1: #{tpu_custom_call.1} parent=0
    #allocation2 [shape = 'u8[8192]{0}', space=vmem, size = 0x2000, scoped, tag = 'input window, operand 0']
    #allocation3 [shape = 's32[2]{0}', space=sflag, size = 0x8, scoped, tag = 'scoped memory for tpu_custom_call.1']
    #allocation4 [shape = 's32[2]{0}', space=sflag, size = 0x8, scoped, tag = 'scoped memory for tpu_custom_call.1']
    #allocation5 [shape = 'u8[4096]{0}', space=vmem, size = 0x1000, scoped, tag = 'input window, operand 1, single buffered']
    #allocation6 [shape = 's32[1]{0}', space=sflag, size = 0x4, scoped, tag = 'scoped memory for tpu_custom_call.1']
    #allocation7 [shape = 'u8[8192]{0}', space=vmem, size = 0x2000, scoped, tag = 'output window, operand 0']
    %7 = vsyncpa [#allocation3], 0
    %s8 = scalar_lea.sflag [#allocation3], 1
    %9 = vsyncpa %s8, 0
    %10 = vsyncpa [#allocation6], 0
    %11 = vsyncpa [#allocation4], 0
    %s12 = scalar_lea.sflag [#allocation4], 1
    %13 = vsyncpa %s12, 0
    loop: start=0, step=1, limit=4
    $region2: #{tpu_custom_call.1} parent=1 // loop_pre_header
      _
    $region3: #{tpu_custom_call.1} parent=1 // loop_header
      %s15 = sphi 0, %s19
      %p16 = scmp.ge.s32.totalorder %s15, 4
      %s25 = sphi 0, %s27
      %s28 = sphi 0, %s25
      %s29 = sphi 0, %s28
      %s45 = sphi 0, %s29
      %s49 = sphi 0, %s49
      %s51 = sphi 0, %s49
      %s52 = sphi 0, %s51
      %s66 = sphi 0, %s52
      %s72 = sphi 0, %s74
      %s75 = sphi 0, %s72
      %s76 = sphi 0, %s75
      %s92 = sphi 0, %s76
    $region4: #{tpu_custom_call.1} parent=1 // loop_header_branch
      %18 = sbr.rel (%p16) target = $region8
    $region5: #{tpu_custom_call.1} parent=1 // loop_body
      %s20 = ssub.s32 %s15, 1
      %s21 = ssub.s32 %s15, 2
      %s22 = sadd.s32 %s15, 1
      %s23 = ssub.s32 %s15, %s22
      %p24 = scmp.eq.s32.totalorder %s23, 0
      %s26 = sadd.s32 %s25, 1
      %s27 = scalar_select %p24, %s25, %s26
      %p30 = pneg %p24
      %p31 = scmp.eq.s32.totalorder %s15, 1
      %p32 = por %p30, %p31
      %p33 = scmp.ne.s32.totalorder %s25, %s28
      %p34 = scmp.eq.s32.totalorder %s15, 0
      %p35 = por %p33, %p34
      %p36 = scmp.ne.s32.totalorder %s25, %s28
      %p37 = scmp.eq.s32.totalorder %s20, 1
      %p38 = por %p36, %p37
      %p39 = scmp.ne.s32.totalorder %s28, %s29
      %p40 = scmp.eq.s32.totalorder %s20, 0
      %p41 = por %p39, %p40
      %p42 = scmp.ne.s32.totalorder %s28, %s29
      %p43 = scmp.eq.s32.totalorder %s21, 1
      %p44 = por %p42, %p43
      %p46 = scmp.ne.s32.totalorder %s29, %s45
      %p47 = scmp.eq.s32.totalorder %s21, 0
      %p48 = por %p46, %p47
      %s50 = sadd.s32 %s49, 1
      %p53 = scmp.eq.s32.totalorder %s15, 1
      %p54 = scmp.ne.s32.totalorder %s49, %s51
      %p55 = scmp.eq.s32.totalorder %s15, 0
      %p56 = por %p54, %p55
      %p57 = scmp.ne.s32.totalorder %s49, %s51
      %p58 = scmp.eq.s32.totalorder %s20, 1
      %p59 = por %p57, %p58
      %p60 = scmp.ne.s32.totalorder %s51, %s52
      %p61 = scmp.eq.s32.totalorder %s20, 0
      %p62 = por %p60, %p61
      %p63 = scmp.ne.s32.totalorder %s51, %s52
      %p64 = scmp.eq.s32.totalorder %s21, 1
      %p65 = por %p63, %p64
      %p67 = scmp.ne.s32.totalorder %s52, %s66
      %p68 = scmp.eq.s32.totalorder %s21, 0
      %p69 = por %p67, %p68
      %s70 = ssub.s32 %s15, %s22
      %p71 = scmp.eq.s32.totalorder %s70, 0
      %s73 = sadd.s32 %s72, 1
      %s74 = scalar_select %p71, %s72, %s73
      %p77 = pneg %p71
      %p78 = scmp.eq.s32.totalorder %s15, 1
      %p79 = por %p77, %p78
      %p80 = scmp.ne.s32.totalorder %s72, %s75
      %p81 = scmp.eq.s32.totalorder %s15, 0
      %p82 = por %p80, %p81
      %p83 = scmp.ne.s32.totalorder %s72, %s75
      %p84 = scmp.eq.s32.totalorder %s20, 1
      %p85 = por %p83, %p84
      %p86 = scmp.ne.s32.totalorder %s75, %s76
      %p87 = scmp.eq.s32.totalorder %s20, 0
      %p88 = por %p86, %p87
      %p89 = scmp.ne.s32.totalorder %s75, %s76
      %p90 = scmp.eq.s32.totalorder %s21, 1
      %p91 = por %p89, %p90
      %p93 = scmp.ne.s32.totalorder %s76, %s92
      %p94 = scmp.eq.s32.totalorder %s21, 0
      %p95 = por %p93, %p94
      %p96 = scmp.le.s32.totalorder 1, %s15
      %p97 = scmp.lt.s32.totalorder %s15, 3
      %p98 = pnand %p96, %p97
      %p99 = pneg %p98
      // Predicated region
      $region9: #{tpu_custom_call.1} parent=5 // pred_check
        _
      $region10: #{tpu_custom_call.1} parent=5 // pred_check_branch
        %101 = sbr.rel (%p98) target = $region12
      $region11: #{tpu_custom_call.1} parent=5 // pred_region
        %s102 = ssub.s32 %s15, 1
        // Predicated region
        $region13: #{tpu_custom_call.1} parent=11 // pred_check
          %p103 = pneg %p62
        $region14: #{tpu_custom_call.1} parent=11 // pred_check_branch
          %105 = sbr.rel (%p103) target = $region16
        $region15: #{tpu_custom_call.1} parent=11 // pred_region
          %s107 = ssub.s32 128, 128
          %108 = vsyncadd [#allocation6], %s107
          %s110 = sshll.u32 [#allocation5], 4
          %s111 = int_to_ptr.vmem [resolvable:$true] %s110
          %113 = dma.hbm_to_vmem [thread:$0]  %s1, 128, %s111, [#allocation6]
        $region16: #{tpu_custom_call.1} parent=11 // pred_fallthru
          _
      $region12: #{tpu_custom_call.1} parent=5 // pred_fallthru
        _
      %p114 = scmp.lt.s32.totalorder %s15, 2
      // Predicated region
      $region17: #{tpu_custom_call.1} parent=5 // pred_check
        %p115 = pneg %p114
      $region18: #{tpu_custom_call.1} parent=5 // pred_check_branch
        %117 = sbr.rel (%p115) target = $region20
      $region19: #{tpu_custom_call.1} parent=5 // pred_region
        // Predicated region
        $region21: #{tpu_custom_call.1} parent=19 // pred_check
          %p118 = pneg %p35
        $region22: #{tpu_custom_call.1} parent=19 // pred_check_branch
          %120 = sbr.rel (%p118) target = $region24
        $region23: #{tpu_custom_call.1} parent=19 // pred_region
          %s121 = sand.u32 %s25, 1
          %s122 = scalar_lea.sflag [#allocation3], %s121
          %s123 = sand.u32 %s25, 1
          %s124 = smul.addr %s123, 8
          %s125 = scalar_lea.vmem [#allocation2], %s124
          %s127 = ssub.s32 128, 128
          %128 = vsyncadd %s122, %s127
          %s129 = smul.addr %s15, 128
          %s130 = scalar_lea.hbm %s0, %s129
          %s132 = sshll.u32 %s125, 4
          %s133 = int_to_ptr.vmem [resolvable:$true] %s132
          %135 = dma.hbm_to_vmem [thread:$0]  %s130, 128, %s133, %s122
        $region24: #{tpu_custom_call.1} parent=19 // pred_fallthru
          _
      $region20: #{tpu_custom_call.1} parent=5 // pred_fallthru
        _
      %p136 = scmp.le.s32.totalorder 1, %s15
      %p137 = scmp.lt.s32.totalorder %s15, 3
      %p138 = pnand %p136, %p137
      %p139 = pneg %p138
      // Predicated region
      $region25: #{tpu_custom_call.1} parent=5 // pred_check
        _
      $region26: #{tpu_custom_call.1} parent=5 // pred_check_branch
        %141 = sbr.rel (%p138) target = $region28
      $region27: #{tpu_custom_call.1} parent=5 // pred_region
        %s142 = ssub.s32 %s15, 1
        %s143 = sand.u32 %s28, 1
        %s144 = scalar_lea.sflag [#allocation3], %s143
        %s145 = sand.u32 %s28, 1
        %s146 = smul.addr %s145, 8
        %s147 = scalar_lea.vmem [#allocation2], %s146
        // Predicated region
        $region29: #{tpu_custom_call.1} parent=27 // pred_check
          %p148 = pneg %p41
        $region30: #{tpu_custom_call.1} parent=27 // pred_check_branch
          %150 = sbr.rel (%p148) target = $region32
        $region31: #{tpu_custom_call.1} parent=27 // pred_region
          %151 = dma.done %s144, 128
        $region32: #{tpu_custom_call.1} parent=27 // pred_fallthru
          _
        // Predicated region
        $region33: #{tpu_custom_call.1} parent=27 // pred_check
          %p152 = pneg %p62
        $region34: #{tpu_custom_call.1} parent=27 // pred_check_branch
          %154 = sbr.rel (%p152) target = $region36
        $region35: #{tpu_custom_call.1} parent=27 // pred_region
          %155 = dma.done [#allocation6], 128
        $region36: #{tpu_custom_call.1} parent=27 // pred_fallthru
          _
        %s156 = sand.u32 %s28, 1
        %s157 = scalar_lea.sflag [#allocation3], %s156
        %s158 = sand.u32 %s28, 1
        %s159 = smul.addr %s158, 8
        %s160 = scalar_lea.vmem [#allocation2], %s159
        %p161 = pneg %p41
        %p162 = pneg %p38
        %p163 = pneg %p62
        %p164 = pneg %p59
        %p165 = pneg %p88
        %p166 = pneg %p85
        %s167 = sand.u32 %s75, 1
        %s168 = scalar_lea.sflag [#allocation4], %s167
        %s169 = sand.u32 %s75, 1
        %s170 = smul.addr %s169, 8
        %s171 = scalar_lea.vmem [#allocation7], %s170
        %v172 = vld [vmem:[%s147] sm:$0xff]
        %v173 = vld [vmem:[#allocation5] sm:$0xff]
        %v174 = vadd.f32 %v172, %v173
        %175 = vst [vmem:[%s171] sm:$0xff] %v174
        %s176 = sand.u32 %s75, 1
        %s177 = scalar_lea.sflag [#allocation4], %s176
        %s178 = sand.u32 %s75, 1
        %s179 = smul.addr %s178, 8
        %s180 = scalar_lea.vmem [#allocation7], %s179
        // Predicated region
        $region37: #{tpu_custom_call.1} parent=27 // pred_check
          %p181 = pneg %p85
        $region38: #{tpu_custom_call.1} parent=27 // pred_check_branch
          %183 = sbr.rel (%p181) target = $region40
        $region39: #{tpu_custom_call.1} parent=27 // pred_region
          %s185 = ssub.s32 128, 128
          %186 = vsyncadd %s177, %s185
          %s187 = smul.addr %s20, 128
          %s188 = scalar_lea.hbm %s2, %s187
          %s190 = sshll.u32 %s180, 4
          %s191 = int_to_ptr.vmem [resolvable:$true] %s190
          %193 = dma.vmem_to_hbm [thread:$0]  %s191, 128, %s188, %s177
        $region40: #{tpu_custom_call.1} parent=27 // pred_fallthru
          _
      $region28: #{tpu_custom_call.1} parent=5 // pred_fallthru
        _
      %p194 = scmp.le.s32.totalorder 2, %s15
      // Predicated region
      $region41: #{tpu_custom_call.1} parent=5 // pred_check
        %p195 = pneg %p194
      $region42: #{tpu_custom_call.1} parent=5 // pred_check_branch
        %197 = sbr.rel (%p195) target = $region44
      $region43: #{tpu_custom_call.1} parent=5 // pred_region
        %s198 = ssub.s32 %s15, 2
        // Predicated region
        $region45: #{tpu_custom_call.1} parent=43 // pred_check
          %p199 = pneg %p91
        $region46: #{tpu_custom_call.1} parent=43 // pred_check_branch
          %201 = sbr.rel (%p199) target = $region48
        $region47: #{tpu_custom_call.1} parent=43 // pred_region
          %s202 = sand.u32 %s76, 1
          %s203 = scalar_lea.sflag [#allocation4], %s202
          %s204 = sand.u32 %s76, 1
          %s205 = smul.addr %s204, 8
          %s206 = scalar_lea.vmem [#allocation7], %s205
          %207 = dma.done %s203, 128
        $region48: #{tpu_custom_call.1} parent=43 // pred_fallthru
          _
      $region44: #{tpu_custom_call.1} parent=5 // pred_fallthru
        _
    $region6: #{tpu_custom_call.1} parent=1 // loop_footer
      %s19 = sadd.s32 1, %s15
    $region7: #{tpu_custom_call.1} parent=1 // loop_footer_branch
      %14 = sbr.rel target = $region3
    $region8: #{tpu_custom_call.1} parent=1 // loop_exit
      _
    %208 = vsyncpa [#allocation3], 1
    %s209 = scalar_lea.sflag [#allocation3], 1
    %210 = vsyncpa %s209, 1
    %211 = vsyncpa [#allocation6], 1
    %212 = vsyncpa [#allocation4], 1
    %s213 = scalar_lea.sflag [#allocation4], 1
    %214 = vsyncpa %s213, 1

// kernel: model_forward.7
$region0: #{model_forward.7}
  #allocation0 [shape = 'u32[]', space=smem, size = 0x4, offset = 0x4, fixed_abs, tag = 'smem constant byte address 0x4 - core index']
  #allocation1 [shape = 'u32[144,128]{1,0:T(1,128)}', space=vmem, size = 0x12000, scoped, tag = 'internal scratch']
  %s0 = inlined_call_operand.vmem [shape: f32[16,32], index: 0, kind: input, shape index: {}]
  %s1 = inlined_call_operand.vmem [shape: bf16[32,32], index: 1, kind: input, shape index: {}]
  %s2 = inlined_call_operand.vmem [shape: f32[1,32], index: 2, kind: input, shape index: {}]
  %s3 = inlined_call_operand.vmem [shape: f32[1,32], index: 3, kind: input, shape index: {}]
  %s4 = inlined_call_operand.vmem [shape: f32[1,32], index: 4, kind: input, shape index: {}]
  %s5 = inlined_call_operand.vmem [shape: bf16[32,128], index: 5, kind: input, shape index: {}]
  %s6 = inlined_call_operand.vmem [shape: f32[1,128], index: 6, kind: input, shape index: {}]
  %s7 = inlined_call_operand.vmem [shape: f32[16,128], index: 7, kind: output, shape index: {}]
  %s8 = sld [smem:[#allocation0]]
  $region61: #{model_forward.7} parent=0
    _
  %s10 = ssub.s32 1, %s8
  %s11 = scalar_select 0, %s10, %s8
  loop: start=0, step=1, limit=4
  $region2: #{model_forward.7} parent=0 // loop_pre_header
    _
  $region3: #{model_forward.7} parent=0 // loop_header
    %s13 = sphi 0, %s17
    %p14 = scmp.ge.s32.totalorder %s13, 4
    %s23 = sphi 0, %s25
    %s26 = sphi 0, %s23
    %s27 = sphi 0, %s26
    %s43 = sphi 0, %s27
    %s47 = sphi 0, %s47
    %s49 = sphi 0, %s47
    %s50 = sphi 0, %s49
    %s64 = sphi 0, %s50
    %s68 = sphi 0, %s68
    %s70 = sphi 0, %s68
    %s71 = sphi 0, %s70
    %s85 = sphi 0, %s71
    %s89 = sphi 0, %s89
    %s91 = sphi 0, %s89
    %s92 = sphi 0, %s91
    %s106 = sphi 0, %s92
    %s110 = sphi 0, %s110
    %s112 = sphi 0, %s110
    %s113 = sphi 0, %s112
    %s127 = sphi 0, %s113
    %s131 = sphi 0, %s131
    %s133 = sphi 0, %s131
    %s134 = sphi 0, %s133
    %s148 = sphi 0, %s134
    %s152 = sphi 0, %s152
    %s154 = sphi 0, %s152
    %s155 = sphi 0, %s154
    %s169 = sphi 0, %s155
    %s175 = sphi 0, %s177
    %s178 = sphi 0, %s175
    %s179 = sphi 0, %s178
    %s195 = sphi 0, %s179
  $region4: #{model_forward.7} parent=0 // loop_header_branch
    %16 = sbr.rel (%p14) target = $region8
  $region5: #{model_forward.7} parent=0 // loop_body
    %s18 = ssub.s32 %s13, 1
    %s19 = ssub.s32 %s13, 2
    %s20 = sadd.s32 %s13, 1
    %s21 = ssub.s32 %s13, %s20
    %p22 = scmp.eq.s32.totalorder %s21, 0
    %s24 = sadd.s32 %s23, 1
    %s25 = scalar_select %p22, %s23, %s24
    %p28 = pneg %p22
    %p29 = scmp.eq.s32.totalorder %s13, 1
    %p30 = por %p28, %p29
    %p31 = scmp.ne.s32.totalorder %s23, %s26
    %p32 = scmp.eq.s32.totalorder %s13, 0
    %p33 = por %p31, %p32
    %p34 = scmp.ne.s32.totalorder %s23, %s26
    %p35 = scmp.eq.s32.totalorder %s18, 1
    %p36 = por %p34, %p35
    %p37 = scmp.ne.s32.totalorder %s26, %s27
    %p38 = scmp.eq.s32.totalorder %s18, 0
    %p39 = por %p37, %p38
    %p40 = scmp.ne.s32.totalorder %s26, %s27
    %p41 = scmp.eq.s32.totalorder %s19, 1
    %p42 = por %p40, %p41
    %p44 = scmp.ne.s32.totalorder %s27, %s43
    %p45 = scmp.eq.s32.totalorder %s19, 0
    %p46 = por %p44, %p45
    %s48 = sadd.s32 %s47, 1
    %p51 = scmp.eq.s32.totalorder %s13, 1
    %p52 = scmp.ne.s32.totalorder %s47, %s49
    %p53 = scmp.eq.s32.totalorder %s13, 0
    %p54 = por %p52, %p53
    %p55 = scmp.ne.s32.totalorder %s47, %s49
    %p56 = scmp.eq.s32.totalorder %s18, 1
    %p57 = por %p55, %p56
    %p58 = scmp.ne.s32.totalorder %s49, %s50
    %p59 = scmp.eq.s32.totalorder %s18, 0
    %p60 = por %p58, %p59
    %p61 = scmp.ne.s32.totalorder %s49, %s50
    %p62 = scmp.eq.s32.totalorder %s19, 1
    %p63 = por %p61, %p62
    %p65 = scmp.ne.s32.totalorder %s50, %s64
    %p66 = scmp.eq.s32.totalorder %s19, 0
    %p67 = por %p65, %p66
    %s69 = sadd.s32 %s68, 1
    %p72 = scmp.eq.s32.totalorder %s13, 1
    %p73 = scmp.ne.s32.totalorder %s68, %s70
    %p74 = scmp.eq.s32.totalorder %s13, 0
    %p75 = por %p73, %p74
    %p76 = scmp.ne.s32.totalorder %s68, %s70
    %p77 = scmp.eq.s32.totalorder %s18, 1
    %p78 = por %p76, %p77
    %p79 = scmp.ne.s32.totalorder %s70, %s71
    %p80 = scmp.eq.s32.totalorder %s18, 0
    %p81 = por %p79, %p80
    %p82 = scmp.ne.s32.totalorder %s70, %s71
    %p83 = scmp.eq.s32.totalorder %s19, 1
    %p84 = por %p82, %p83
    %p86 = scmp.ne.s32.totalorder %s71, %s85
    %p87 = scmp.eq.s32.totalorder %s19, 0
    %p88 = por %p86, %p87
    %s90 = sadd.s32 %s89, 1
    %p93 = scmp.eq.s32.totalorder %s13, 1
    %p94 = scmp.ne.s32.totalorder %s89, %s91
    %p95 = scmp.eq.s32.totalorder %s13, 0
    %p96 = por %p94, %p95
    %p97 = scmp.ne.s32.totalorder %s89, %s91
    %p98 = scmp.eq.s32.totalorder %s18, 1
    %p99 = por %p97, %p98
    %p100 = scmp.ne.s32.totalorder %s91, %s92
    %p101 = scmp.eq.s32.totalorder %s18, 0
    %p102 = por %p100, %p101
    %p103 = scmp.ne.s32.totalorder %s91, %s92
    %p104 = scmp.eq.s32.totalorder %s19, 1
    %p105 = por %p103, %p104
    %p107 = scmp.ne.s32.totalorder %s92, %s106
    %p108 = scmp.eq.s32.totalorder %s19, 0
    %p109 = por %p107, %p108
    %s111 = sadd.s32 %s110, 1
    %p114 = scmp.eq.s32.totalorder %s13, 1
    %p115 = scmp.ne.s32.totalorder %s110, %s112
    %p116 = scmp.eq.s32.totalorder %s13, 0
    %p117 = por %p115, %p116
    %p118 = scmp.ne.s32.totalorder %s110, %s112
    %p119 = scmp.eq.s32.totalorder %s18, 1
    %p120 = por %p118, %p119
    %p121 = scmp.ne.s32.totalorder %s112, %s113
    %p122 = scmp.eq.s32.totalorder %s18, 0
    %p123 = por %p121, %p122
    %p124 = scmp.ne.s32.totalorder %s112, %s113
    %p125 = scmp.eq.s32.totalorder %s19, 1
    %p126 = por %p124, %p125
    %p128 = scmp.ne.s32.totalorder %s113, %s127
    %p129 = scmp.eq.s32.totalorder %s19, 0
    %p130 = por %p128, %p129
    %s132 = sadd.s32 %s131, 1
    %p135 = scmp.eq.s32.totalorder %s13, 1
    %p136 = scmp.ne.s32.totalorder %s131, %s133
    %p137 = scmp.eq.s32.totalorder %s13, 0
    %p138 = por %p136, %p137
    %p139 = scmp.ne.s32.totalorder %s131, %s133
    %p140 = scmp.eq.s32.totalorder %s18, 1
    %p141 = por %p139, %p140
    %p142 = scmp.ne.s32.totalorder %s133, %s134
    %p143 = scmp.eq.s32.totalorder %s18, 0
    %p144 = por %p142, %p143
    %p145 = scmp.ne.s32.totalorder %s133, %s134
    %p146 = scmp.eq.s32.totalorder %s19, 1
    %p147 = por %p145, %p146
    %p149 = scmp.ne.s32.totalorder %s134, %s148
    %p150 = scmp.eq.s32.totalorder %s19, 0
    %p151 = por %p149, %p150
    %s153 = sadd.s32 %s152, 1
    %p156 = scmp.eq.s32.totalorder %s13, 1
    %p157 = scmp.ne.s32.totalorder %s152, %s154
    %p158 = scmp.eq.s32.totalorder %s13, 0
    %p159 = por %p157, %p158
    %p160 = scmp.ne.s32.totalorder %s152, %s154
    %p161 = scmp.eq.s32.totalorder %s18, 1
    %p162 = por %p160, %p161
    %p163 = scmp.ne.s32.totalorder %s154, %s155
    %p164 = scmp.eq.s32.totalorder %s18, 0
    %p165 = por %p163, %p164
    %p166 = scmp.ne.s32.totalorder %s154, %s155
    %p167 = scmp.eq.s32.totalorder %s19, 1
    %p168 = por %p166, %p167
    %p170 = scmp.ne.s32.totalorder %s155, %s169
    %p171 = scmp.eq.s32.totalorder %s19, 0
    %p172 = por %p170, %p171
    %s173 = ssub.s32 %s13, %s20
    %p174 = scmp.eq.s32.totalorder %s173, 0
    %s176 = sadd.s32 %s175, 1
    %s177 = scalar_select %p174, %s175, %s176
    %p180 = pneg %p174
    %p181 = scmp.eq.s32.totalorder %s13, 1
    %p182 = por %p180, %p181
    %p183 = scmp.ne.s32.totalorder %s175, %s178
    %p184 = scmp.eq.s32.totalorder %s13, 0
    %p185 = por %p183, %p184
    %p186 = scmp.ne.s32.totalorder %s175, %s178
    %p187 = scmp.eq.s32.totalorder %s18, 1
    %p188 = por %p186, %p187
    %p189 = scmp.ne.s32.totalorder %s178, %s179
    %p190 = scmp.eq.s32.totalorder %s18, 0
    %p191 = por %p189, %p190
    %p192 = scmp.ne.s32.totalorder %s178, %s179
    %p193 = scmp.eq.s32.totalorder %s19, 1
    %p194 = por %p192, %p193
    %p196 = scmp.ne.s32.totalorder %s179, %s195
    %p197 = scmp.eq.s32.totalorder %s19, 0
    %p198 = por %p196, %p197
    %p199 = scmp.le.s32.totalorder 1, %s13
    %p200 = scmp.lt.s32.totalorder %s13, 3
    %p201 = pnand %p199, %p200
    %p202 = pneg %p201
    // Predicated region
    $region9: #{model_forward.7} parent=5 // pred_check
      _
    $region10: #{model_forward.7} parent=5 // pred_check_branch
      %204 = sbr.rel (%p201) target = $region12
    $region11: #{model_forward.7} parent=5 // pred_region
      %s205 = ssub.s32 %s13, 1
      // Predicated region
      $region13: #{model_forward.7} parent=11 // pred_check
        %p206 = pneg %p60
      $region14: #{model_forward.7} parent=11 // pred_check_branch
        %208 = sbr.rel (%p206) target = $region16
      $region15: #{model_forward.7} parent=11 // pred_region
        _
      $region16: #{model_forward.7} parent=11 // pred_fallthru
        _
      // Predicated region
      $region17: #{model_forward.7} parent=11 // pred_check
        %p209 = pneg %p81
      $region18: #{model_forward.7} parent=11 // pred_check_branch
        %211 = sbr.rel (%p209) target = $region20
      $region19: #{model_forward.7} parent=11 // pred_region
        _
      $region20: #{model_forward.7} parent=11 // pred_fallthru
        _
      // Predicated region
      $region21: #{model_forward.7} parent=11 // pred_check
        %p212 = pneg %p102
      $region22: #{model_forward.7} parent=11 // pred_check_branch
        %214 = sbr.rel (%p212) target = $region24
      $region23: #{model_forward.7} parent=11 // pred_region
        _
      $region24: #{model_forward.7} parent=11 // pred_fallthru
        _
      // Predicated region
      $region25: #{model_forward.7} parent=11 // pred_check
        %p215 = pneg %p123
      $region26: #{model_forward.7} parent=11 // pred_check_branch
        %217 = sbr.rel (%p215) target = $region28
      $region27: #{model_forward.7} parent=11 // pred_region
        _
      $region28: #{model_forward.7} parent=11 // pred_fallthru
        _
      // Predicated region
      $region29: #{model_forward.7} parent=11 // pred_check
        %p218 = pneg %p144
      $region30: #{model_forward.7} parent=11 // pred_check_branch
        %220 = sbr.rel (%p218) target = $region32
      $region31: #{model_forward.7} parent=11 // pred_region
        _
      $region32: #{model_forward.7} parent=11 // pred_fallthru
        _
      // Predicated region
      $region33: #{model_forward.7} parent=11 // pred_check
        %p221 = pneg %p165
      $region34: #{model_forward.7} parent=11 // pred_check_branch
        %223 = sbr.rel (%p221) target = $region36
      $region35: #{model_forward.7} parent=11 // pred_region
        _
      $region36: #{model_forward.7} parent=11 // pred_fallthru
        _
    $region12: #{model_forward.7} parent=5 // pred_fallthru
      _
    %p224 = scmp.lt.s32.totalorder %s13, 2
    // Predicated region
    $region37: #{model_forward.7} parent=5 // pred_check
      %p225 = pneg %p224
    $region38: #{model_forward.7} parent=5 // pred_check_branch
      %227 = sbr.rel (%p225) target = $region40
    $region39: #{model_forward.7} parent=5 // pred_region
      // Predicated region
      $region41: #{model_forward.7} parent=39 // pred_check
        %p228 = pneg %p33
      $region42: #{model_forward.7} parent=39 // pred_check_branch
        %230 = sbr.rel (%p228) target = $region44
      $region43: #{model_forward.7} parent=39 // pred_region
        %p231 = scmp.lt.s32.totalorder %s13, 1
        %s232 = scalar_select %p231, %s13, 1
        %s233 = smul.addr %s232, 8
        %s234 = scalar_lea.vmem %s0, %s233
      $region44: #{model_forward.7} parent=39 // pred_fallthru
        _
    $region40: #{model_forward.7} parent=5 // pred_fallthru
      _
    %p235 = scmp.le.s32.totalorder 1, %s13
    %p236 = scmp.lt.s32.totalorder %s13, 3
    %p237 = pnand %p235, %p236
    %p238 = pneg %p237
    // Predicated region
    $region45: #{model_forward.7} parent=5 // pred_check
      _
    $region46: #{model_forward.7} parent=5 // pred_check_branch
      %240 = sbr.rel (%p237) target = $region48
    $region47: #{model_forward.7} parent=5 // pred_region
      %s241 = ssub.s32 %s13, 1
      %p242 = scmp.lt.s32.totalorder %s18, 1
      %s243 = scalar_select %p242, %s18, 1
      %s244 = smul.addr %s243, 8
      %s245 = scalar_lea.vmem %s0, %s244
      %p246 = pneg %p39
      %p247 = pneg %p36
      %p248 = pneg %p60
      %p249 = pneg %p57
      %p250 = pneg %p81
      %p251 = pneg %p78
      %p252 = pneg %p102
      %p253 = pneg %p99
      %p254 = pneg %p123
      %p255 = pneg %p120
      %p256 = pneg %p144
      %p257 = pneg %p141
      %p258 = pneg %p165
      %p259 = pneg %p162
      %p260 = pneg %p191
      %p261 = pneg %p188
      %p262 = scmp.lt.s32.totalorder %s18, 1
      %s263 = scalar_select %p262, %s18, 1
      %s264 = smul.addr %s263, 8
      %s265 = scalar_lea.vmem %s7, %s264
      %p266 = scmp.lt.s32.totalorder %s18, 1
      %s267 = scalar_select %p266, %s18, 1
      %s268 = smul.addr %s267, 8
      %s269 = scalar_lea.vmem %s0, %s268
      %p270 = scmp.lt.s32.totalorder %s18, 1
      %s271 = scalar_select %p270, %s18, 1
      %s272 = smul.addr %s271, 8
      %s273 = scalar_lea.vmem %s7, %s272
      %v275 = vld [vmem:[%s269] sm:$0xff]
      %v276 = vld [vmem:[%s1] sm:$0xf]
      %v277 = vld [vmem:[%s1 + $0x4] sm:$0xf]
      %v278 = vld [vmem:[%s1 + $0x8] sm:$0xf]
      %v279 = vld [vmem:[%s1 + $0xc] sm:$0xf]
      %v280 = vpack.c.bf16 %v275, %v275
      %v281 = vld [vmem:[%s2] sm:$0x1]
      %v283 = vlaneseq
      %v284 = vshrl.u32 %v283, 7
      %v285 = vsub.s32 0, %v284
      %v286 = vrot.slane %v281, %v285
      %v292 = vunpack.c.l.b16 %v276
      %v293 = vunpack.c.l.b16 %v277
      %v294 = vunpack.c.l.b16 %v278
      %v295 = vunpack.c.l.b16 %v279
      %v296 = vpack.c.b16 %v293, %v292
      %v297 = vpack.c.b16 %v295, %v294
      %vm300 = vcmask 261120
      %v302 = vsel %vm300, %v280, 0
      %304 = vmatprep.subr.bf16.mxu0 0
      %305 = vmatpush1.bf16.msra.mxu0 %v296
      %306 = vmatprep.subr.bf16.mxu0 0
      %307 = vmatpush1.bf16.msra.mxu0 %v297
      %308 = vmatprep.subr.bf16.mxu0 0
      %309 = vmatpush1.bf16.msra.mxu0 0
      %310 = vmatprep.subr.bf16.mxu0 0
      %311 = vmatpush1.bf16.msra.mxu0 0
      %312 = vmatprep.subr.bf16.mxu0 0
      %313 = vmatpush1.bf16.msra.mxu0 0
      %314 = vmatprep.subr.bf16.mxu0 0
      %315 = vmatpush1.bf16.msra.mxu0 0
      %316 = vmatprep.subr.bf16.mxu0 0
      %317 = vmatpush1.bf16.msra.mxu0 0
      %318 = vmatprep.subr.bf16.mxu0 0
      %319 = vmatpush1.bf16.msra.mxu0 0
      %320 = vmatprep.subr.bf16.mxu0 0
      %321 = vmatpush1.bf16.msra.mxu0 0
      %322 = vmatprep.subr.bf16.mxu0 0
      %323 = vmatpush1.bf16.msra.mxu0 0
      %324 = vmatprep.subr.bf16.mxu0 0
      %325 = vmatpush1.bf16.msra.mxu0 0
      %326 = vmatprep.subr.bf16.mxu0 0
      %327 = vmatpush1.bf16.msra.mxu0 0
      %328 = vmatprep.subr.bf16.mxu0 0
      %329 = vmatpush1.bf16.msra.mxu0 0
      %330 = vmatprep.subr.bf16.mxu0 0
      %331 = vmatpush1.bf16.msra.mxu0 0
      %332 = vmatprep.subr.bf16.mxu0 0
      %333 = vmatpush1.bf16.msra.mxu0 0
      %334 = vmatprep.subr.bf16.mxu0 0
      %335 = vmatpush1.bf16.msra.mxu0 0
      %336 = vmatprep.mubr.bf16.mxu0 0
      %337 = vmatmul.mubr.bf16.gmra.mrb[0].mxu0 %v302
      %v338 = vpop.f32.mrb[0].mxu0
      %v339 = vadd.f32 %v286, %v338
      %v340 = vpop.f32.mrb[0].mxu0
      %v341 = vpop.f32.mrb[0].mxu0
      %v342 = vpop.f32.mrb[0].mxu0
      %343 = vdwg.mxu0
      %v344 = vld [vmem:[%s3] sm:$0x1]
      %v345 = vld [vmem:[%s4] sm:$0x1]
      %v346 = vsel %vm300, %v339, 0.0
      %347 = vadd.xlane.f32.xlu0 %v346
      %v348 = vpop.xlane.xlu0 %347
      %v349 = vrcp.pop 32.0
      %v350 = vmul.f32 %v348, %v349
      %v351 = vsub.f32 %v339, %v350
      %v352 = vmul.f32 %v351, %v351
      %v353 = vsel %vm300, %v352, 0.0
      %354 = vadd.xlane.f32.xlu0 %v353
      %v355 = vpop.xlane.xlu0 %354
      %v356 = vmul.f32 %v355, %v349
      %v357 = vadd.f32 %v356, 1e-05
      %v358 = vrsqrt.pop %v357
      %v359 = vmul.f32 %v351, %v358
      %v361 = vlaneseq
      %v362 = vshrl.u32 %v361, 7
      %v363 = vsub.s32 0, %v362
      %v364 = vrot.slane %v344, %v363
      %v366 = vmul.f32 %v359, %v364
      %v368 = vlaneseq
      %v369 = vshrl.u32 %v368, 7
      %v370 = vsub.s32 0, %v369
      %v371 = vrot.slane %v345, %v370
      %v373 = vadd.f32 %v366, %v371
      %v374 = vmax.f32 %v373, 0.0
      %v375 = vld [vmem:[%s5] sm:$0xf]
      %v376 = vld [vmem:[%s5 + $0x4] sm:$0xf]
      %v377 = vld [vmem:[%s5 + $0x8] sm:$0xf]
      %v378 = vld [vmem:[%s5 + $0xc] sm:$0xf]
      %v379 = vpack.c.bf16 %v374, %v374
      %v380 = vld [vmem:[%s6] sm:$0x1]
      %v382 = vlaneseq
      %v383 = vshrl.u32 %v382, 7
      %v384 = vsub.s32 0, %v383
      %v385 = vrot.slane %v380, %v384
      %v391 = vunpack.c.l.b16 %v375
      %v392 = vunpack.c.l.b16 %v376
      %v393 = vunpack.c.l.b16 %v377
      %v394 = vunpack.c.l.b16 %v378
      %v395 = vpack.c.b16 %v392, %v391
      %v396 = vpack.c.b16 %v394, %v393
      %v400 = vsel %vm300, %v379, 0
      %402 = vmatprep.subr.bf16.mxu0 0
      %403 = vmatpush1.bf16.msra.mxu0 %v395
      %404 = vmatprep.subr.bf16.mxu0 0
      %405 = vmatpush1.bf16.msra.mxu0 %v396
      %406 = vmatprep.subr.bf16.mxu0 0
      %407 = vmatpush1.bf16.msra.mxu0 0
      %408 = vmatprep.subr.bf16.mxu0 0
      %409 = vmatpush1.bf16.msra.mxu0 0
      %410 = vmatprep.subr.bf16.mxu0 0
      %411 = vmatpush1.bf16.msra.mxu0 0
      %412 = vmatprep.subr.bf16.mxu0 0
      %413 = vmatpush1.bf16.msra.mxu0 0
      %414 = vmatprep.subr.bf16.mxu0 0
      %415 = vmatpush1.bf16.msra.mxu0 0
      %416 = vmatprep.subr.bf16.mxu0 0
      %417 = vmatpush1.bf16.msra.mxu0 0
      %418 = vmatprep.subr.bf16.mxu0 0
      %419 = vmatpush1.bf16.msra.mxu0 0
      %420 = vmatprep.subr.bf16.mxu0 0
      %421 = vmatpush1.bf16.msra.mxu0 0
      %422 = vmatprep.subr.bf16.mxu0 0
      %423 = vmatpush1.bf16.msra.mxu0 0
      %424 = vmatprep.subr.bf16.mxu0 0
      %425 = vmatpush1.bf16.msra.mxu0 0
      %426 = vmatprep.subr.bf16.mxu0 0
      %427 = vmatpush1.bf16.msra.mxu0 0
      %428 = vmatprep.subr.bf16.mxu0 0
      %429 = vmatpush1.bf16.msra.mxu0 0
      %430 = vmatprep.subr.bf16.mxu0 0
      %431 = vmatpush1.bf16.msra.mxu0 0
      %432 = vmatprep.subr.bf16.mxu0 0
      %433 = vmatpush1.bf16.msra.mxu0 0
      %434 = vmatprep.mubr.bf16.mxu0 0
      %435 = vmatmul.mubr.bf16.gmra.mrb[0].mxu0 %v400
      %v436 = vpop.f32.mrb[0].mxu0
      %v437 = vadd.f32 %v385, %v436
      %v438 = vpop.f32.mrb[0].mxu0
      %v439 = vpop.f32.mrb[0].mxu0
      %v440 = vpop.f32.mrb[0].mxu0
      %441 = vdwg.mxu0
      %442 = vst [vmem:[%s273] sm:$0xff] %v437
      %p443 = scmp.lt.s32.totalorder %s18, 1
      %s444 = scalar_select %p443, %s18, 1
      %s445 = smul.addr %s444, 8
      %s446 = scalar_lea.vmem %s7, %s445
      // Predicated region
      $region49: #{model_forward.7} parent=47 // pred_check
        %p447 = pneg %p188
      $region50: #{model_forward.7} parent=47 // pred_check_branch
        %449 = sbr.rel (%p447) target = $region52
      $region51: #{model_forward.7} parent=47 // pred_region
        _
      $region52: #{model_forward.7} parent=47 // pred_fallthru
        _
    $region48: #{model_forward.7} parent=5 // pred_fallthru
      _
    %p450 = scmp.le.s32.totalorder 2, %s13
    // Predicated region
    $region53: #{model_forward.7} parent=5 // pred_check
      %p451 = pneg %p450
    $region54: #{model_forward.7} parent=5 // pred_check_branch
      %453 = sbr.rel (%p451) target = $region56
    $region55: #{model_forward.7} parent=5 // pred_region
      %s454 = ssub.s32 %s13, 2
      // Predicated region
      $region57: #{model_forward.7} parent=55 // pred_check
        %p455 = pneg %p194
      $region58: #{model_forward.7} parent=55 // pred_check_branch
        %457 = sbr.rel (%p455) target = $region60
      $region59: #{model_forward.7} parent=55 // pred_region
        %p458 = scmp.lt.s32.totalorder %s19, 1
        %s459 = scalar_select %p458, %s19, 1
        %s460 = smul.addr %s459, 8
        %s461 = scalar_lea.vmem %s7, %s460
      $region60: #{model_forward.7} parent=55 // pred_fallthru
        _
    $region56: #{model_forward.7} parent=5 // pred_fallthru
      _
  $region6: #{model_forward.7} parent=0 // loop_footer
    %s17 = sadd.s32 1, %s13
  $region7: #{model_forward.7} parent=0 // loop_footer_branch
    %12 = sbr.rel target = $region3
  $region8: #{model_forward.7} parent=0 // loop_exit
    _

// kernel: model_forward.4
$region0: #{model_forward.4}
  #allocation0 [shape = 'u32[]', space=smem, size = 0x4, offset = 0x4, fixed_abs, tag = 'smem constant byte address 0x4 - core index']
  #allocation1 [shape = 'u32[144,128]{1,0:T(1,128)}', space=vmem, size = 0x12000, scoped, tag = 'internal scratch']
  %s0 = inlined_call_operand.hbm [shape: f32[16,16], index: 0, kind: input, shape index: {}]
  %s1 = inlined_call_operand.vmem [shape: bf16[16,32], index: 1, kind: input, shape index: {}]
  %s2 = inlined_call_operand.vmem [shape: f32[1,32], index: 2, kind: input, shape index: {}]
  %s3 = inlined_call_operand.vmem [shape: f32[1,32], index: 3, kind: input, shape index: {}]
  %s4 = inlined_call_operand.vmem [shape: f32[1,32], index: 4, kind: input, shape index: {}]
  %s5 = inlined_call_operand.vmem [shape: f32[16,32], index: 5, kind: output, shape index: {}]
  %s6 = sld [smem:[#allocation0]]
  $region57: #{model_forward.4} parent=0
    _
  %s8 = ssub.s32 1, %s6
  %s9 = scalar_select 0, %s8, %s6
  $region1: #{model_forward.4} parent=0
    #allocation2 [shape = 'u8[8192]{0}', space=vmem, size = 0x2000, scoped, tag = 'input window, operand 0']
    #allocation3 [shape = 's32[2]{0}', space=sflag, size = 0x8, scoped, tag = 'scoped memory for model_forward.4']
    %10 = vsyncpa [#allocation3], 0
    %s11 = scalar_lea.sflag [#allocation3], 1
    %12 = vsyncpa %s11, 0
    loop: start=0, step=1, limit=4
    $region2: #{model_forward.4} parent=1 // loop_pre_header
      _
    $region3: #{model_forward.4} parent=1 // loop_header
      %s14 = sphi 0, %s18
      %p15 = scmp.ge.s32.totalorder %s14, 4
      %s24 = sphi 0, %s26
      %s27 = sphi 0, %s24
      %s28 = sphi 0, %s27
      %s44 = sphi 0, %s28
      %s48 = sphi 0, %s48
      %s50 = sphi 0, %s48
      %s51 = sphi 0, %s50
      %s65 = sphi 0, %s51
      %s69 = sphi 0, %s69
      %s71 = sphi 0, %s69
      %s72 = sphi 0, %s71
      %s86 = sphi 0, %s72
      %s90 = sphi 0, %s90
      %s92 = sphi 0, %s90
      %s93 = sphi 0, %s92
      %s107 = sphi 0, %s93
      %s111 = sphi 0, %s111
      %s113 = sphi 0, %s111
      %s114 = sphi 0, %s113
      %s128 = sphi 0, %s114
      %s134 = sphi 0, %s136
      %s137 = sphi 0, %s134
      %s138 = sphi 0, %s137
      %s154 = sphi 0, %s138
    $region4: #{model_forward.4} parent=1 // loop_header_branch
      %17 = sbr.rel (%p15) target = $region8
    $region5: #{model_forward.4} parent=1 // loop_body
      %s19 = ssub.s32 %s14, 1
      %s20 = ssub.s32 %s14, 2
      %s21 = sadd.s32 %s14, 1
      %s22 = ssub.s32 %s14, %s21
      %p23 = scmp.eq.s32.totalorder %s22, 0
      %s25 = sadd.s32 %s24, 1
      %s26 = scalar_select %p23, %s24, %s25
      %p29 = pneg %p23
      %p30 = scmp.eq.s32.totalorder %s14, 1
      %p31 = por %p29, %p30
      %p32 = scmp.ne.s32.totalorder %s24, %s27
      %p33 = scmp.eq.s32.totalorder %s14, 0
      %p34 = por %p32, %p33
      %p35 = scmp.ne.s32.totalorder %s24, %s27
      %p36 = scmp.eq.s32.totalorder %s19, 1
      %p37 = por %p35, %p36
      %p38 = scmp.ne.s32.totalorder %s27, %s28
      %p39 = scmp.eq.s32.totalorder %s19, 0
      %p40 = por %p38, %p39
      %p41 = scmp.ne.s32.totalorder %s27, %s28
      %p42 = scmp.eq.s32.totalorder %s20, 1
      %p43 = por %p41, %p42
      %p45 = scmp.ne.s32.totalorder %s28, %s44
      %p46 = scmp.eq.s32.totalorder %s20, 0
      %p47 = por %p45, %p46
      %s49 = sadd.s32 %s48, 1
      %p52 = scmp.eq.s32.totalorder %s14, 1
      %p53 = scmp.ne.s32.totalorder %s48, %s50
      %p54 = scmp.eq.s32.totalorder %s14, 0
      %p55 = por %p53, %p54
      %p56 = scmp.ne.s32.totalorder %s48, %s50
      %p57 = scmp.eq.s32.totalorder %s19, 1
      %p58 = por %p56, %p57
      %p59 = scmp.ne.s32.totalorder %s50, %s51
      %p60 = scmp.eq.s32.totalorder %s19, 0
      %p61 = por %p59, %p60
      %p62 = scmp.ne.s32.totalorder %s50, %s51
      %p63 = scmp.eq.s32.totalorder %s20, 1
      %p64 = por %p62, %p63
      %p66 = scmp.ne.s32.totalorder %s51, %s65
      %p67 = scmp.eq.s32.totalorder %s20, 0
      %p68 = por %p66, %p67
      %s70 = sadd.s32 %s69, 1
      %p73 = scmp.eq.s32.totalorder %s14, 1
      %p74 = scmp.ne.s32.totalorder %s69, %s71
      %p75 = scmp.eq.s32.totalorder %s14, 0
      %p76 = por %p74, %p75
      %p77 = scmp.ne.s32.totalorder %s69, %s71
      %p78 = scmp.eq.s32.totalorder %s19, 1
      %p79 = por %p77, %p78
      %p80 = scmp.ne.s32.totalorder %s71, %s72
      %p81 = scmp.eq.s32.totalorder %s19, 0
      %p82 = por %p80, %p81
      %p83 = scmp.ne.s32.totalorder %s71, %s72
      %p84 = scmp.eq.s32.totalorder %s20, 1
      %p85 = por %p83, %p84
      %p87 = scmp.ne.s32.totalorder %s72, %s86
      %p88 = scmp.eq.s32.totalorder %s20, 0
      %p89 = por %p87, %p88
      %s91 = sadd.s32 %s90, 1
      %p94 = scmp.eq.s32.totalorder %s14, 1
      %p95 = scmp.ne.s32.totalorder %s90, %s92
      %p96 = scmp.eq.s32.totalorder %s14, 0
      %p97 = por %p95, %p96
      %p98 = scmp.ne.s32.totalorder %s90, %s92
      %p99 = scmp.eq.s32.totalorder %s19, 1
      %p100 = por %p98, %p99
      %p101 = scmp.ne.s32.totalorder %s92, %s93
      %p102 = scmp.eq.s32.totalorder %s19, 0
      %p103 = por %p101, %p102
      %p104 = scmp.ne.s32.totalorder %s92, %s93
      %p105 = scmp.eq.s32.totalorder %s20, 1
      %p106 = por %p104, %p105
      %p108 = scmp.ne.s32.totalorder %s93, %s107
      %p109 = scmp.eq.s32.totalorder %s20, 0
      %p110 = por %p108, %p109
      %s112 = sadd.s32 %s111, 1
      %p115 = scmp.eq.s32.totalorder %s14, 1
      %p116 = scmp.ne.s32.totalorder %s111, %s113
      %p117 = scmp.eq.s32.totalorder %s14, 0
      %p118 = por %p116, %p117
      %p119 = scmp.ne.s32.totalorder %s111, %s113
      %p120 = scmp.eq.s32.totalorder %s19, 1
      %p121 = por %p119, %p120
      %p122 = scmp.ne.s32.totalorder %s113, %s114
      %p123 = scmp.eq.s32.totalorder %s19, 0
      %p124 = por %p122, %p123
      %p125 = scmp.ne.s32.totalorder %s113, %s114
      %p126 = scmp.eq.s32.totalorder %s20, 1
      %p127 = por %p125, %p126
      %p129 = scmp.ne.s32.totalorder %s114, %s128
      %p130 = scmp.eq.s32.totalorder %s20, 0
      %p131 = por %p129, %p130
      %s132 = ssub.s32 %s14, %s21
      %p133 = scmp.eq.s32.totalorder %s132, 0
      %s135 = sadd.s32 %s134, 1
      %s136 = scalar_select %p133, %s134, %s135
      %p139 = pneg %p133
      %p140 = scmp.eq.s32.totalorder %s14, 1
      %p141 = por %p139, %p140
      %p142 = scmp.ne.s32.totalorder %s134, %s137
      %p143 = scmp.eq.s32.totalorder %s14, 0
      %p144 = por %p142, %p143
      %p145 = scmp.ne.s32.totalorder %s134, %s137
      %p146 = scmp.eq.s32.totalorder %s19, 1
      %p147 = por %p145, %p146
      %p148 = scmp.ne.s32.totalorder %s137, %s138
      %p149 = scmp.eq.s32.totalorder %s19, 0
      %p150 = por %p148, %p149
      %p151 = scmp.ne.s32.totalorder %s137, %s138
      %p152 = scmp.eq.s32.totalorder %s20, 1
      %p153 = por %p151, %p152
      %p155 = scmp.ne.s32.totalorder %s138, %s154
      %p156 = scmp.eq.s32.totalorder %s20, 0
      %p157 = por %p155, %p156
      %p158 = scmp.le.s32.totalorder 1, %s14
      %p159 = scmp.lt.s32.totalorder %s14, 3
      %p160 = pnand %p158, %p159
      %p161 = pneg %p160
      // Predicated region
      $region9: #{model_forward.4} parent=5 // pred_check
        _
      $region10: #{model_forward.4} parent=5 // pred_check_branch
        %163 = sbr.rel (%p160) target = $region12
      $region11: #{model_forward.4} parent=5 // pred_region
        %s164 = ssub.s32 %s14, 1
        // Predicated region
        $region13: #{model_forward.4} parent=11 // pred_check
          %p165 = pneg %p61
        $region14: #{model_forward.4} parent=11 // pred_check_branch
          %167 = sbr.rel (%p165) target = $region16
        $region15: #{model_forward.4} parent=11 // pred_region
          _
        $region16: #{model_forward.4} parent=11 // pred_fallthru
          _
        // Predicated region
        $region17: #{model_forward.4} parent=11 // pred_check
          %p168 = pneg %p82
        $region18: #{model_forward.4} parent=11 // pred_check_branch
          %170 = sbr.rel (%p168) target = $region20
        $region19: #{model_forward.4} parent=11 // pred_region
          _
        $region20: #{model_forward.4} parent=11 // pred_fallthru
          _
        // Predicated region
        $region21: #{model_forward.4} parent=11 // pred_check
          %p171 = pneg %p103
        $region22: #{model_forward.4} parent=11 // pred_check_branch
          %173 = sbr.rel (%p171) target = $region24
        $region23: #{model_forward.4} parent=11 // pred_region
          _
        $region24: #{model_forward.4} parent=11 // pred_fallthru
          _
        // Predicated region
        $region25: #{model_forward.4} parent=11 // pred_check
          %p174 = pneg %p124
        $region26: #{model_forward.4} parent=11 // pred_check_branch
          %176 = sbr.rel (%p174) target = $region28
        $region27: #{model_forward.4} parent=11 // pred_region
          _
        $region28: #{model_forward.4} parent=11 // pred_fallthru
          _
      $region12: #{model_forward.4} parent=5 // pred_fallthru
        _
      %p177 = scmp.lt.s32.totalorder %s14, 2
      // Predicated region
      $region29: #{model_forward.4} parent=5 // pred_check
        %p178 = pneg %p177
      $region30: #{model_forward.4} parent=5 // pred_check_branch
        %180 = sbr.rel (%p178) target = $region32
      $region31: #{model_forward.4} parent=5 // pred_region
        // Predicated region
        $region33: #{model_forward.4} parent=31 // pred_check
          %p181 = pneg %p34
        $region34: #{model_forward.4} parent=31 // pred_check_branch
          %183 = sbr.rel (%p181) target = $region36
        $region35: #{model_forward.4} parent=31 // pred_region
          %s184 = sand.u32 %s24, 1
          %s185 = scalar_lea.sflag [#allocation3], %s184
          %s186 = sand.u32 %s24, 1
          %s187 = smul.addr %s186, 8
          %s188 = scalar_lea.vmem [#allocation2], %s187
          %s190 = ssub.s32 128, 128
          %191 = vsyncadd %s185, %s190
          %s192 = smul.addr %s14, 128
          %s193 = scalar_lea.hbm %s0, %s192
          %s195 = sshll.u32 %s188, 4
          %s196 = int_to_ptr.vmem [resolvable:$true] %s195
          %198 = dma.hbm_to_vmem [thread:$0]  %s193, 128, %s196, %s185
        $region36: #{model_forward.4} parent=31 // pred_fallthru
          _
      $region32: #{model_forward.4} parent=5 // pred_fallthru
        _
      %p199 = scmp.le.s32.totalorder 1, %s14
      %p200 = scmp.lt.s32.totalorder %s14, 3
      %p201 = pnand %p199, %p200
      %p202 = pneg %p201
      // Predicated region
      $region37: #{model_forward.4} parent=5 // pred_check
        _
      $region38: #{model_forward.4} parent=5 // pred_check_branch
        %204 = sbr.rel (%p201) target = $region40
      $region39: #{model_forward.4} parent=5 // pred_region
        %s205 = ssub.s32 %s14, 1
        %s206 = sand.u32 %s27, 1
        %s207 = scalar_lea.sflag [#allocation3], %s206
        %s208 = sand.u32 %s27, 1
        %s209 = smul.addr %s208, 8
        %s210 = scalar_lea.vmem [#allocation2], %s209
        // Predicated region
        $region41: #{model_forward.4} parent=39 // pred_check
          %p211 = pneg %p40
        $region42: #{model_forward.4} parent=39 // pred_check_branch
          %213 = sbr.rel (%p211) target = $region44
        $region43: #{model_forward.4} parent=39 // pred_region
          %214 = dma.done %s207, 128
        $region44: #{model_forward.4} parent=39 // pred_fallthru
          _
        %s215 = sand.u32 %s27, 1
        %s216 = scalar_lea.sflag [#allocation3], %s215
        %s217 = sand.u32 %s27, 1
        %s218 = smul.addr %s217, 8
        %s219 = scalar_lea.vmem [#allocation2], %s218
        %p220 = pneg %p40
        %p221 = pneg %p37
        %p222 = pneg %p61
        %p223 = pneg %p58
        %p224 = pneg %p82
        %p225 = pneg %p79
        %p226 = pneg %p103
        %p227 = pneg %p100
        %p228 = pneg %p124
        %p229 = pneg %p121
        %p230 = pneg %p150
        %p231 = pneg %p147
        %p232 = scmp.lt.s32.totalorder %s19, 1
        %s233 = scalar_select %p232, %s19, 1
        %s234 = smul.addr %s233, 8
        %s235 = scalar_lea.vmem %s5, %s234
        %p236 = scmp.lt.s32.totalorder %s19, 1
        %s237 = scalar_select %p236, %s19, 1
        %s238 = smul.addr %s237, 8
        %s239 = scalar_lea.vmem %s5, %s238
        %v241 = vld [vmem:[%s210] sm:$0xff]
        %v242 = vld [vmem:[%s1] sm:$0xf]
        %v243 = vld [vmem:[%s1 + $0x4] sm:$0xf]
        %v244 = vpack.c.bf16 %v241, %v241
        %v245 = vld [vmem:[%s2] sm:$0x1]
        %v247 = vlaneseq
        %v248 = vshrl.u32 %v247, 7
        %v249 = vsub.s32 0, %v248
        %v250 = vrot.slane %v245, %v249
        %v254 = vunpack.c.l.b16 %v242
        %v255 = vunpack.c.l.b16 %v243
        %v256 = vpack.c.b16 %v255, %v254
        %vm258 = vcmask 130048
        %v260 = vsel %vm258, %v244, 0
        %262 = vmatprep.subr.bf16.mxu0 0
        %263 = vmatpush1.bf16.msra.mxu0 %v256
        %264 = vmatprep.subr.bf16.mxu0 0
        %265 = vmatpush1.bf16.msra.mxu0 0
        %266 = vmatprep.subr.bf16.mxu0 0
        %267 = vmatpush1.bf16.msra.mxu0 0
        %268 = vmatprep.subr.bf16.mxu0 0
        %269 = vmatpush1.bf16.msra.mxu0 0
        %270 = vmatprep.subr.bf16.mxu0 0
        %271 = vmatpush1.bf16.msra.mxu0 0
        %272 = vmatprep.subr.bf16.mxu0 0
        %273 = vmatpush1.bf16.msra.mxu0 0
        %274 = vmatprep.subr.bf16.mxu0 0
        %275 = vmatpush1.bf16.msra.mxu0 0
        %276 = vmatprep.subr.bf16.mxu0 0
        %277 = vmatpush1.bf16.msra.mxu0 0
        %278 = vmatprep.subr.bf16.mxu0 0
        %279 = vmatpush1.bf16.msra.mxu0 0
        %280 = vmatprep.subr.bf16.mxu0 0
        %281 = vmatpush1.bf16.msra.mxu0 0
        %282 = vmatprep.subr.bf16.mxu0 0
        %283 = vmatpush1.bf16.msra.mxu0 0
        %284 = vmatprep.subr.bf16.mxu0 0
        %285 = vmatpush1.bf16.msra.mxu0 0
        %286 = vmatprep.subr.bf16.mxu0 0
        %287 = vmatpush1.bf16.msra.mxu0 0
        %288 = vmatprep.subr.bf16.mxu0 0
        %289 = vmatpush1.bf16.msra.mxu0 0
        %290 = vmatprep.subr.bf16.mxu0 0
        %291 = vmatpush1.bf16.msra.mxu0 0
        %292 = vmatprep.subr.bf16.mxu0 0
        %293 = vmatpush1.bf16.msra.mxu0 0
        %294 = vmatprep.mubr.bf16.mxu0 0
        %295 = vmatmul.mubr.bf16.gmra.mrb[0].mxu0 %v260
        %v296 = vpop.f32.mrb[0].mxu0
        %v297 = vadd.f32 %v250, %v296
        %v298 = vpop.f32.mrb[0].mxu0
        %v299 = vpop.f32.mrb[0].mxu0
        %v300 = vpop.f32.mrb[0].mxu0
        %301 = vdwg.mxu0
        %v302 = vmax.f32 %v297, 0.0
        %v303 = vld [vmem:[%s3] sm:$0x1]
        %v304 = vld [vmem:[%s4] sm:$0x1]
        %vm305 = vcmask 261120
        %v306 = vsel %vm305, %v302, 0.0
        %307 = vadd.xlane.f32.xlu0 %v306
        %v308 = vpop.xlane.xlu0 %307
        %v309 = vrcp.pop 32.0
        %v310 = vmul.f32 %v308, %v309
        %v311 = vsub.f32 %v302, %v310
        %v312 = vmul.f32 %v311, %v311
        %v313 = vsel %vm305, %v312, 0.0
        %314 = vadd.xlane.f32.xlu0 %v313
        %v315 = vpop.xlane.xlu0 %314
        %v316 = vmul.f32 %v315, %v309
        %v317 = vadd.f32 %v316, 1e-05
        %v318 = vrsqrt.pop %v317
        %v319 = vmul.f32 %v311, %v318
        %v321 = vlaneseq
        %v322 = vshrl.u32 %v321, 7
        %v323 = vsub.s32 0, %v322
        %v324 = vrot.slane %v303, %v323
        %v326 = vmul.f32 %v319, %v324
        %v328 = vlaneseq
        %v329 = vshrl.u32 %v328, 7
        %v330 = vsub.s32 0, %v329
        %v331 = vrot.slane %v304, %v330
        %v333 = vadd.f32 %v326, %v331
        %334 = vst.msk [vmem:[%s239] sm:$0xff] %vm305, %v333
        %p335 = scmp.lt.s32.totalorder %s19, 1
        %s336 = scalar_select %p335, %s19, 1
        %s337 = smul.addr %s336, 8
        %s338 = scalar_lea.vmem %s5, %s337
        // Predicated region
        $region45: #{model_forward.4} parent=39 // pred_check
          %p339 = pneg %p147
        $region46: #{model_forward.4} parent=39 // pred_check_branch
          %341 = sbr.rel (%p339) target = $region48
        $region47: #{model_forward.4} parent=39 // pred_region
          _
        $region48: #{model_forward.4} parent=39 // pred_fallthru
          _
      $region40: #{model_forward.4} parent=5 // pred_fallthru
        _
      %p342 = scmp.le.s32.totalorder 2, %s14
      // Predicated region
      $region49: #{model_forward.4} parent=5 // pred_check
        %p343 = pneg %p342
      $region50: #{model_forward.4} parent=5 // pred_check_branch
        %345 = sbr.rel (%p343) target = $region52
      $region51: #{model_forward.4} parent=5 // pred_region
        %s346 = ssub.s32 %s14, 2
        // Predicated region
        $region53: #{model_forward.4} parent=51 // pred_check
          %p347 = pneg %p153
        $region54: #{model_forward.4} parent=51 // pred_check_branch
          %349 = sbr.rel (%p347) target = $region56
        $region55: #{model_forward.4} parent=51 // pred_region
          %p350 = scmp.lt.s32.totalorder %s20, 1
          %s351 = scalar_select %p350, %s20, 1
          %s352 = smul.addr %s351, 8
          %s353 = scalar_lea.vmem %s5, %s352
        $region56: #{model_forward.4} parent=51 // pred_fallthru
          _
      $region52: #{model_forward.4} parent=5 // pred_fallthru
        _
    $region6: #{model_forward.4} parent=1 // loop_footer
      %s18 = sadd.s32 1, %s14
    $region7: #{model_forward.4} parent=1 // loop_footer_branch
      %13 = sbr.rel target = $region3
    $region8: #{model_forward.4} parent=1 // loop_exit
      _
    %354 = vsyncpa [#allocation3], 1
    %s355 = scalar_lea.sflag [#allocation3], 1
    %356 = vsyncpa %s355, 1

// kernel: model_forward.5
$region0: #{model_forward.5}
  #allocation0 [shape = 'u32[]', space=smem, size = 0x4, offset = 0x4, fixed_abs, tag = 'smem constant byte address 0x4 - core index']
  #allocation1 [shape = 'u32[144,128]{1,0:T(1,128)}', space=vmem, size = 0x12000, scoped, tag = 'internal scratch']
  #allocation2 [shape = 'bf16[4,8,8]{2,1,0:T(8,128)(2,1)}', space=vmem, size = 0x2000, scoped, tag = 'scratch operand']
  #allocation3 [shape = 'bf16[4,8,8]{2,1,0:T(8,128)(2,1)}', space=vmem, size = 0x2000, scoped, tag = 'scratch operand']
  #allocation4 [shape = 'f32[8,32]{1,0:T(8,128)}', space=vmem, size = 0x1000, scoped, tag = 'scratch operand']
  %s0 = inlined_call_operand.vmem [shape: f32[2,8,32], index: 0, kind: input, shape index: {}, may-alias: {0,1}]
  %s1 = inlined_call_operand.vmem [shape: f32[2,8,32], index: 1, kind: input, shape index: {}, may-alias: {0,1}]
  %s2 = inlined_call_operand.vmem [shape: bf16[4,32,8], index: 2, kind: input, shape index: {}]
  %s3 = inlined_call_operand.vmem [shape: f32[4,1,8], index: 3, kind: input, shape index: {}]
  %s4 = inlined_call_operand.vmem [shape: bf16[4,32,8], index: 4, kind: input, shape index: {}]
  %s5 = inlined_call_operand.vmem [shape: f32[4,1,8], index: 5, kind: input, shape index: {}]
  %s6 = inlined_call_operand.vmem [shape: bf16[4,32,8], index: 6, kind: input, shape index: {}]
  %s7 = inlined_call_operand.vmem [shape: f32[4,1,8], index: 7, kind: input, shape index: {}]
  %s8 = inlined_call_operand.vmem [shape: bf16[32,32], index: 8, kind: input, shape index: {}]
  %s9 = inlined_call_operand.vmem [shape: f32[1,32], index: 9, kind: input, shape index: {}]
  %s10 = inlined_call_operand.vmem [shape: f32[1,32], index: 10, kind: input, shape index: {}]
  %s11 = inlined_call_operand.vmem [shape: f32[1,32], index: 11, kind: input, shape index: {}]
  %s12 = inlined_call_operand.vmem [shape: bf16[32,32], index: 12, kind: input, shape index: {}]
  %s13 = inlined_call_operand.vmem [shape: f32[1,32], index: 13, kind: input, shape index: {}]
  %s14 = inlined_call_operand.vmem [shape: bf16[32,32], index: 14, kind: input, shape index: {}]
  %s15 = inlined_call_operand.vmem [shape: f32[1,32], index: 15, kind: input, shape index: {}]
  %s16 = inlined_call_operand.vmem [shape: f32[1,32], index: 16, kind: input, shape index: {}]
  %s17 = inlined_call_operand.vmem [shape: f32[1,32], index: 17, kind: input, shape index: {}]
  %s18 = inlined_call_operand.vmem [shape: f32[2,8,32], index: 18, kind: output, shape index: {}]
  %s19 = sld [smem:[#allocation0]]
  $region109: #{model_forward.5} parent=0
    _
  %s21 = ssub.s32 1, %s19
  %s22 = scalar_select 0, %s21, %s19
  loop: start=0, step=1, limit=4
  $region2: #{model_forward.5} parent=0 // loop_pre_header
    _
  $region3: #{model_forward.5} parent=0 // loop_header
    %s24 = sphi 0, %s28
    %p25 = scmp.ge.s32.totalorder %s24, 4
    %s31 = sphi 0, %s43
    %s32 = sphi 0, %s39
    %s33 = sphi 0, %s31
    %s34 = sphi 0, %s32
    %s35 = sphi 0, %s33
    %s36 = sphi 0, %s34
    %s48 = sphi 0, %s50
    %s51 = sphi 0, %s48
    %s52 = sphi 0, %s51
    %s68 = sphi 0, %s52
    %s74 = sphi 0, %s76
    %s77 = sphi 0, %s74
    %s78 = sphi 0, %s77
    %s94 = sphi 0, %s78
    %s98 = sphi 0, %s98
    %s100 = sphi 0, %s98
    %s101 = sphi 0, %s100
    %s115 = sphi 0, %s101
    %s119 = sphi 0, %s119
    %s121 = sphi 0, %s119
    %s122 = sphi 0, %s121
    %s136 = sphi 0, %s122
    %s140 = sphi 0, %s140
    %s142 = sphi 0, %s140
    %s143 = sphi 0, %s142
    %s157 = sphi 0, %s143
    %s161 = sphi 0, %s161
    %s163 = sphi 0, %s161
    %s164 = sphi 0, %s163
    %s178 = sphi 0, %s164
    %s182 = sphi 0, %s182
    %s184 = sphi 0, %s182
    %s185 = sphi 0, %s184
    %s199 = sphi 0, %s185
    %s203 = sphi 0, %s203
    %s205 = sphi 0, %s203
    %s206 = sphi 0, %s205
    %s220 = sphi 0, %s206
    %s224 = sphi 0, %s224
    %s226 = sphi 0, %s224
    %s227 = sphi 0, %s226
    %s241 = sphi 0, %s227
    %s245 = sphi 0, %s245
    %s247 = sphi 0, %s245
    %s248 = sphi 0, %s247
    %s262 = sphi 0, %s248
    %s266 = sphi 0, %s266
    %s268 = sphi 0, %s266
    %s269 = sphi 0, %s268
    %s283 = sphi 0, %s269
    %s287 = sphi 0, %s287
    %s289 = sphi 0, %s287
    %s290 = sphi 0, %s289
    %s304 = sphi 0, %s290
    %s308 = sphi 0, %s308
    %s310 = sphi 0, %s308
    %s311 = sphi 0, %s310
    %s325 = sphi 0, %s311
    %s329 = sphi 0, %s329
    %s331 = sphi 0, %s329
    %s332 = sphi 0, %s331
    %s346 = sphi 0, %s332
    %s350 = sphi 0, %s350
    %s352 = sphi 0, %s350
    %s353 = sphi 0, %s352
    %s367 = sphi 0, %s353
    %s371 = sphi 0, %s371
    %s373 = sphi 0, %s371
    %s374 = sphi 0, %s373
    %s388 = sphi 0, %s374
    %s392 = sphi 0, %s392
    %s394 = sphi 0, %s392
    %s395 = sphi 0, %s394
    %s409 = sphi 0, %s395
    %s413 = sphi 0, %s413
    %s415 = sphi 0, %s413
    %s416 = sphi 0, %s415
    %s430 = sphi 0, %s416
    %s438 = sphi 0, %s440
    %s441 = sphi 0, %s438
    %s442 = sphi 0, %s441
    %s458 = sphi 0, %s442
  $region4: #{model_forward.5} parent=0 // loop_header_branch
    %27 = sbr.rel (%p25) target = $region8
  $region5: #{model_forward.5} parent=0 // loop_body
    %s29 = ssub.s32 %s24, 1
    %s30 = ssub.s32 %s24, 2
    %s37 = sadd.s32 1, %s32
    %p38 = scmp.ge.s32.totalorder %s37, 1
    %s39 = scalar_select %p38, 0, %s37
    %s40 = sadd.s32 1, %s31
    %s41 = scalar_select %p38, %s40, %s31
    %p42 = scmp.ge.s32.totalorder %s41, 2
    %s43 = scalar_select %p42, 0, %s41
    %s44 = ssub.s32 %s31, %s43
    %s45 = ssub.s32 %s32, %s39
    %s46 = sor.u32 %s44, %s45
    %p47 = scmp.eq.s32.totalorder %s46, 0
    %s49 = sadd.s32 %s48, 1
    %s50 = scalar_select %p47, %s48, %s49
    %p53 = pneg %p47
    %p54 = scmp.eq.s32.totalorder %s24, 1
    %p55 = por %p53, %p54
    %p56 = scmp.ne.s32.totalorder %s48, %s51
    %p57 = scmp.eq.s32.totalorder %s24, 0
    %p58 = por %p56, %p57
    %p59 = scmp.ne.s32.totalorder %s48, %s51
    %p60 = scmp.eq.s32.totalorder %s29, 1
    %p61 = por %p59, %p60
    %p62 = scmp.ne.s32.totalorder %s51, %s52
    %p63 = scmp.eq.s32.totalorder %s29, 0
    %p64 = por %p62, %p63
    %p65 = scmp.ne.s32.totalorder %s51, %s52
    %p66 = scmp.eq.s32.totalorder %s30, 1
    %p67 = por %p65, %p66
    %p69 = scmp.ne.s32.totalorder %s52, %s68
    %p70 = scmp.eq.s32.totalorder %s30, 0
    %p71 = por %p69, %p70
    %s72 = ssub.s32 %s31, %s43
    %p73 = scmp.eq.s32.totalorder %s72, 0
    %s75 = sadd.s32 %s74, 1
    %s76 = scalar_select %p73, %s74, %s75
    %p79 = pneg %p73
    %p80 = scmp.eq.s32.totalorder %s24, 1
    %p81 = por %p79, %p80
    %p82 = scmp.ne.s32.totalorder %s74, %s77
    %p83 = scmp.eq.s32.totalorder %s24, 0
    %p84 = por %p82, %p83
    %p85 = scmp.ne.s32.totalorder %s74, %s77
    %p86 = scmp.eq.s32.totalorder %s29, 1
    %p87 = por %p85, %p86
    %p88 = scmp.ne.s32.totalorder %s77, %s78
    %p89 = scmp.eq.s32.totalorder %s29, 0
    %p90 = por %p88, %p89
    %p91 = scmp.ne.s32.totalorder %s77, %s78
    %p92 = scmp.eq.s32.totalorder %s30, 1
    %p93 = por %p91, %p92
    %p95 = scmp.ne.s32.totalorder %s78, %s94
    %p96 = scmp.eq.s32.totalorder %s30, 0
    %p97 = por %p95, %p96
    %s99 = sadd.s32 %s98, 1
    %p102 = scmp.eq.s32.totalorder %s24, 1
    %p103 = scmp.ne.s32.totalorder %s98, %s100
    %p104 = scmp.eq.s32.totalorder %s24, 0
    %p105 = por %p103, %p104
    %p106 = scmp.ne.s32.totalorder %s98, %s100
    %p107 = scmp.eq.s32.totalorder %s29, 1
    %p108 = por %p106, %p107
    %p109 = scmp.ne.s32.totalorder %s100, %s101
    %p110 = scmp.eq.s32.totalorder %s29, 0
    %p111 = por %p109, %p110
    %p112 = scmp.ne.s32.totalorder %s100, %s101
    %p113 = scmp.eq.s32.totalorder %s30, 1
    %p114 = por %p112, %p113
    %p116 = scmp.ne.s32.totalorder %s101, %s115
    %p117 = scmp.eq.s32.totalorder %s30, 0
    %p118 = por %p116, %p117
    %s120 = sadd.s32 %s119, 1
    %p123 = scmp.eq.s32.totalorder %s24, 1
    %p124 = scmp.ne.s32.totalorder %s119, %s121
    %p125 = scmp.eq.s32.totalorder %s24, 0
    %p126 = por %p124, %p125
    %p127 = scmp.ne.s32.totalorder %s119, %s121
    %p128 = scmp.eq.s32.totalorder %s29, 1
    %p129 = por %p127, %p128
    %p130 = scmp.ne.s32.totalorder %s121, %s122
    %p131 = scmp.eq.s32.totalorder %s29, 0
    %p132 = por %p130, %p131
    %p133 = scmp.ne.s32.totalorder %s121, %s122
    %p134 = scmp.eq.s32.totalorder %s30, 1
    %p135 = por %p133, %p134
    %p137 = scmp.ne.s32.totalorder %s122, %s136
    %p138 = scmp.eq.s32.totalorder %s30, 0
    %p139 = por %p137, %p138
    %s141 = sadd.s32 %s140, 1
    %p144 = scmp.eq.s32.totalorder %s24, 1
    %p145 = scmp.ne.s32.totalorder %s140, %s142
    %p146 = scmp.eq.s32.totalorder %s24, 0
    %p147 = por %p145, %p146
    %p148 = scmp.ne.s32.totalorder %s140, %s142
    %p149 = scmp.eq.s32.totalorder %s29, 1
    %p150 = por %p148, %p149
    %p151 = scmp.ne.s32.totalorder %s142, %s143
    %p152 = scmp.eq.s32.totalorder %s29, 0
    %p153 = por %p151, %p152
    %p154 = scmp.ne.s32.totalorder %s142, %s143
    %p155 = scmp.eq.s32.totalorder %s30, 1
    %p156 = por %p154, %p155
    %p158 = scmp.ne.s32.totalorder %s143, %s157
    %p159 = scmp.eq.s32.totalorder %s30, 0
    %p160 = por %p158, %p159
    %s162 = sadd.s32 %s161, 1
    %p165 = scmp.eq.s32.totalorder %s24, 1
    %p166 = scmp.ne.s32.totalorder %s161, %s163
    %p167 = scmp.eq.s32.totalorder %s24, 0
    %p168 = por %p166, %p167
    %p169 = scmp.ne.s32.totalorder %s161, %s163
    %p170 = scmp.eq.s32.totalorder %s29, 1
    %p171 = por %p169, %p170
    %p172 = scmp.ne.s32.totalorder %s163, %s164
    %p173 = scmp.eq.s32.totalorder %s29, 0
    %p174 = por %p172, %p173
    %p175 = scmp.ne.s32.totalorder %s163, %s164
    %p176 = scmp.eq.s32.totalorder %s30, 1
    %p177 = por %p175, %p176
    %p179 = scmp.ne.s32.totalorder %s164, %s178
    %p180 = scmp.eq.s32.totalorder %s30, 0
    %p181 = por %p179, %p180
    %s183 = sadd.s32 %s182, 1
    %p186 = scmp.eq.s32.totalorder %s24, 1
    %p187 = scmp.ne.s32.totalorder %s182, %s184
    %p188 = scmp.eq.s32.totalorder %s24, 0
    %p189 = por %p187, %p188
    %p190 = scmp.ne.s32.totalorder %s182, %s184
    %p191 = scmp.eq.s32.totalorder %s29, 1
    %p192 = por %p190, %p191
    %p193 = scmp.ne.s32.totalorder %s184, %s185
    %p194 = scmp.eq.s32.totalorder %s29, 0
    %p195 = por %p193, %p194
    %p196 = scmp.ne.s32.totalorder %s184, %s185
    %p197 = scmp.eq.s32.totalorder %s30, 1
    %p198 = por %p196, %p197
    %p200 = scmp.ne.s32.totalorder %s185, %s199
    %p201 = scmp.eq.s32.totalorder %s30, 0
    %p202 = por %p200, %p201
    %s204 = sadd.s32 %s203, 1
    %p207 = scmp.eq.s32.totalorder %s24, 1
    %p208 = scmp.ne.s32.totalorder %s203, %s205
    %p209 = scmp.eq.s32.totalorder %s24, 0
    %p210 = por %p208, %p209
    %p211 = scmp.ne.s32.totalorder %s203, %s205
    %p212 = scmp.eq.s32.totalorder %s29, 1
    %p213 = por %p211, %p212
    %p214 = scmp.ne.s32.totalorder %s205, %s206
    %p215 = scmp.eq.s32.totalorder %s29, 0
    %p216 = por %p214, %p215
    %p217 = scmp.ne.s32.totalorder %s205, %s206
    %p218 = scmp.eq.s32.totalorder %s30, 1
    %p219 = por %p217, %p218
    %p221 = scmp.ne.s32.totalorder %s206, %s220
    %p222 = scmp.eq.s32.totalorder %s30, 0
    %p223 = por %p221, %p222
    %s225 = sadd.s32 %s224, 1
    %p228 = scmp.eq.s32.totalorder %s24, 1
    %p229 = scmp.ne.s32.totalorder %s224, %s226
    %p230 = scmp.eq.s32.totalorder %s24, 0
    %p231 = por %p229, %p230
    %p232 = scmp.ne.s32.totalorder %s224, %s226
    %p233 = scmp.eq.s32.totalorder %s29, 1
    %p234 = por %p232, %p233
    %p235 = scmp.ne.s32.totalorder %s226, %s227
    %p236 = scmp.eq.s32.totalorder %s29, 0
    %p237 = por %p235, %p236
    %p238 = scmp.ne.s32.totalorder %s226, %s227
    %p239 = scmp.eq.s32.totalorder %s30, 1
    %p240 = por %p238, %p239
    %p242 = scmp.ne.s32.totalorder %s227, %s241
    %p243 = scmp.eq.s32.totalorder %s30, 0
    %p244 = por %p242, %p243
    %s246 = sadd.s32 %s245, 1
    %p249 = scmp.eq.s32.totalorder %s24, 1
    %p250 = scmp.ne.s32.totalorder %s245, %s247
    %p251 = scmp.eq.s32.totalorder %s24, 0
    %p252 = por %p250, %p251
    %p253 = scmp.ne.s32.totalorder %s245, %s247
    %p254 = scmp.eq.s32.totalorder %s29, 1
    %p255 = por %p253, %p254
    %p256 = scmp.ne.s32.totalorder %s247, %s248
    %p257 = scmp.eq.s32.totalorder %s29, 0
    %p258 = por %p256, %p257
    %p259 = scmp.ne.s32.totalorder %s247, %s248
    %p260 = scmp.eq.s32.totalorder %s30, 1
    %p261 = por %p259, %p260
    %p263 = scmp.ne.s32.totalorder %s248, %s262
    %p264 = scmp.eq.s32.totalorder %s30, 0
    %p265 = por %p263, %p264
    %s267 = sadd.s32 %s266, 1
    %p270 = scmp.eq.s32.totalorder %s24, 1
    %p271 = scmp.ne.s32.totalorder %s266, %s268
    %p272 = scmp.eq.s32.totalorder %s24, 0
    %p273 = por %p271, %p272
    %p274 = scmp.ne.s32.totalorder %s266, %s268
    %p275 = scmp.eq.s32.totalorder %s29, 1
    %p276 = por %p274, %p275
    %p277 = scmp.ne.s32.totalorder %s268, %s269
    %p278 = scmp.eq.s32.totalorder %s29, 0
    %p279 = por %p277, %p278
    %p280 = scmp.ne.s32.totalorder %s268, %s269
    %p281 = scmp.eq.s32.totalorder %s30, 1
    %p282 = por %p280, %p281
    %p284 = scmp.ne.s32.totalorder %s269, %s283
    %p285 = scmp.eq.s32.totalorder %s30, 0
    %p286 = por %p284, %p285
    %s288 = sadd.s32 %s287, 1
    %p291 = scmp.eq.s32.totalorder %s24, 1
    %p292 = scmp.ne.s32.totalorder %s287, %s289
    %p293 = scmp.eq.s32.totalorder %s24, 0
    %p294 = por %p292, %p293
    %p295 = scmp.ne.s32.totalorder %s287, %s289
    %p296 = scmp.eq.s32.totalorder %s29, 1
    %p297 = por %p295, %p296
    %p298 = scmp.ne.s32.totalorder %s289, %s290
    %p299 = scmp.eq.s32.totalorder %s29, 0
    %p300 = por %p298, %p299
    %p301 = scmp.ne.s32.totalorder %s289, %s290
    %p302 = scmp.eq.s32.totalorder %s30, 1
    %p303 = por %p301, %p302
    %p305 = scmp.ne.s32.totalorder %s290, %s304
    %p306 = scmp.eq.s32.totalorder %s30, 0
    %p307 = por %p305, %p306
    %s309 = sadd.s32 %s308, 1
    %p312 = scmp.eq.s32.totalorder %s24, 1
    %p313 = scmp.ne.s32.totalorder %s308, %s310
    %p314 = scmp.eq.s32.totalorder %s24, 0
    %p315 = por %p313, %p314
    %p316 = scmp.ne.s32.totalorder %s308, %s310
    %p317 = scmp.eq.s32.totalorder %s29, 1
    %p318 = por %p316, %p317
    %p319 = scmp.ne.s32.totalorder %s310, %s311
    %p320 = scmp.eq.s32.totalorder %s29, 0
    %p321 = por %p319, %p320
    %p322 = scmp.ne.s32.totalorder %s310, %s311
    %p323 = scmp.eq.s32.totalorder %s30, 1
    %p324 = por %p322, %p323
    %p326 = scmp.ne.s32.totalorder %s311, %s325
    %p327 = scmp.eq.s32.totalorder %s30, 0
    %p328 = por %p326, %p327
    %s330 = sadd.s32 %s329, 1
    %p333 = scmp.eq.s32.totalorder %s24, 1
    %p334 = scmp.ne.s32.totalorder %s329, %s331
    %p335 = scmp.eq.s32.totalorder %s24, 0
    %p336 = por %p334, %p335
    %p337 = scmp.ne.s32.totalorder %s329, %s331
    %p338 = scmp.eq.s32.totalorder %s29, 1
    %p339 = por %p337, %p338
    %p340 = scmp.ne.s32.totalorder %s331, %s332
    %p341 = scmp.eq.s32.totalorder %s29, 0
    %p342 = por %p340, %p341
    %p343 = scmp.ne.s32.totalorder %s331, %s332
    %p344 = scmp.eq.s32.totalorder %s30, 1
    %p345 = por %p343, %p344
    %p347 = scmp.ne.s32.totalorder %s332, %s346
    %p348 = scmp.eq.s32.totalorder %s30, 0
    %p349 = por %p347, %p348
    %s351 = sadd.s32 %s350, 1
    %p354 = scmp.eq.s32.totalorder %s24, 1
    %p355 = scmp.ne.s32.totalorder %s350, %s352
    %p356 = scmp.eq.s32.totalorder %s24, 0
    %p357 = por %p355, %p356
    %p358 = scmp.ne.s32.totalorder %s350, %s352
    %p359 = scmp.eq.s32.totalorder %s29, 1
    %p360 = por %p358, %p359
    %p361 = scmp.ne.s32.totalorder %s352, %s353
    %p362 = scmp.eq.s32.totalorder %s29, 0
    %p363 = por %p361, %p362
    %p364 = scmp.ne.s32.totalorder %s352, %s353
    %p365 = scmp.eq.s32.totalorder %s30, 1
    %p366 = por %p364, %p365
    %p368 = scmp.ne.s32.totalorder %s353, %s367
    %p369 = scmp.eq.s32.totalorder %s30, 0
    %p370 = por %p368, %p369
    %s372 = sadd.s32 %s371, 1
    %p375 = scmp.eq.s32.totalorder %s24, 1
    %p376 = scmp.ne.s32.totalorder %s371, %s373
    %p377 = scmp.eq.s32.totalorder %s24, 0
    %p378 = por %p376, %p377
    %p379 = scmp.ne.s32.totalorder %s371, %s373
    %p380 = scmp.eq.s32.totalorder %s29, 1
    %p381 = por %p379, %p380
    %p382 = scmp.ne.s32.totalorder %s373, %s374
    %p383 = scmp.eq.s32.totalorder %s29, 0
    %p384 = por %p382, %p383
    %p385 = scmp.ne.s32.totalorder %s373, %s374
    %p386 = scmp.eq.s32.totalorder %s30, 1
    %p387 = por %p385, %p386
    %p389 = scmp.ne.s32.totalorder %s374, %s388
    %p390 = scmp.eq.s32.totalorder %s30, 0
    %p391 = por %p389, %p390
    %s393 = sadd.s32 %s392, 1
    %p396 = scmp.eq.s32.totalorder %s24, 1
    %p397 = scmp.ne.s32.totalorder %s392, %s394
    %p398 = scmp.eq.s32.totalorder %s24, 0
    %p399 = por %p397, %p398
    %p400 = scmp.ne.s32.totalorder %s392, %s394
    %p401 = scmp.eq.s32.totalorder %s29, 1
    %p402 = por %p400, %p401
    %p403 = scmp.ne.s32.totalorder %s394, %s395
    %p404 = scmp.eq.s32.totalorder %s29, 0
    %p405 = por %p403, %p404
    %p406 = scmp.ne.s32.totalorder %s394, %s395
    %p407 = scmp.eq.s32.totalorder %s30, 1
    %p408 = por %p406, %p407
    %p410 = scmp.ne.s32.totalorder %s395, %s409
    %p411 = scmp.eq.s32.totalorder %s30, 0
    %p412 = por %p410, %p411
    %s414 = sadd.s32 %s413, 1
    %p417 = scmp.eq.s32.totalorder %s24, 1
    %p418 = scmp.ne.s32.totalorder %s413, %s415
    %p419 = scmp.eq.s32.totalorder %s24, 0
    %p420 = por %p418, %p419
    %p421 = scmp.ne.s32.totalorder %s413, %s415
    %p422 = scmp.eq.s32.totalorder %s29, 1
    %p423 = por %p421, %p422
    %p424 = scmp.ne.s32.totalorder %s415, %s416
    %p425 = scmp.eq.s32.totalorder %s29, 0
    %p426 = por %p424, %p425
    %p427 = scmp.ne.s32.totalorder %s415, %s416
    %p428 = scmp.eq.s32.totalorder %s30, 1
    %p429 = por %p427, %p428
    %p431 = scmp.ne.s32.totalorder %s416, %s430
    %p432 = scmp.eq.s32.totalorder %s30, 0
    %p433 = por %p431, %p432
    %s434 = ssub.s32 %s31, %s43
    %s435 = ssub.s32 %s32, %s39
    %s436 = sor.u32 %s434, %s435
    %p437 = scmp.eq.s32.totalorder %s436, 0
    %s439 = sadd.s32 %s438, 1
    %s440 = scalar_select %p437, %s438, %s439
    %p443 = pneg %p437
    %p444 = scmp.eq.s32.totalorder %s24, 1
    %p445 = por %p443, %p444
    %p446 = scmp.ne.s32.totalorder %s438, %s441
    %p447 = scmp.eq.s32.totalorder %s24, 0
    %p448 = por %p446, %p447
    %p449 = scmp.ne.s32.totalorder %s438, %s441
    %p450 = scmp.eq.s32.totalorder %s29, 1
    %p451 = por %p449, %p450
    %p452 = scmp.ne.s32.totalorder %s441, %s442
    %p453 = scmp.eq.s32.totalorder %s29, 0
    %p454 = por %p452, %p453
    %p455 = scmp.ne.s32.totalorder %s441, %s442
    %p456 = scmp.eq.s32.totalorder %s30, 1
    %p457 = por %p455, %p456
    %p459 = scmp.ne.s32.totalorder %s442, %s458
    %p460 = scmp.eq.s32.totalorder %s30, 0
    %p461 = por %p459, %p460
    %p462 = scmp.le.s32.totalorder 1, %s24
    %p463 = scmp.lt.s32.totalorder %s24, 3
    %p464 = pnand %p462, %p463
    %p465 = pneg %p464
    // Predicated region
    $region9: #{model_forward.5} parent=5 // pred_check
      _
    $region10: #{model_forward.5} parent=5 // pred_check_branch
      %467 = sbr.rel (%p464) target = $region12
    $region11: #{model_forward.5} parent=5 // pred_region
      %s468 = ssub.s32 %s24, 1
      // Predicated region
      $region13: #{model_forward.5} parent=11 // pred_check
        %p469 = pneg %p111
      $region14: #{model_forward.5} parent=11 // pred_check_branch
        %471 = sbr.rel (%p469) target = $region16
      $region15: #{model_forward.5} parent=11 // pred_region
        _
      $region16: #{model_forward.5} parent=11 // pred_fallthru
        _
      // Predicated region
      $region17: #{model_forward.5} parent=11 // pred_check
        %p472 = pneg %p132
      $region18: #{model_forward.5} parent=11 // pred_check_branch
        %474 = sbr.rel (%p472) target = $region20
      $region19: #{model_forward.5} parent=11 // pred_region
        _
      $region20: #{model_forward.5} parent=11 // pred_fallthru
        _
      // Predicated region
      $region21: #{model_forward.5} parent=11 // pred_check
        %p475 = pneg %p153
      $region22: #{model_forward.5} parent=11 // pred_check_branch
        %477 = sbr.rel (%p475) target = $region24
      $region23: #{model_forward.5} parent=11 // pred_region
        _
      $region24: #{model_forward.5} parent=11 // pred_fallthru
        _
      // Predicated region
      $region25: #{model_forward.5} parent=11 // pred_check
        %p478 = pneg %p174
      $region26: #{model_forward.5} parent=11 // pred_check_branch
        %480 = sbr.rel (%p478) target = $region28
      $region27: #{model_forward.5} parent=11 // pred_region
        _
      $region28: #{model_forward.5} parent=11 // pred_fallthru
        _
      // Predicated region
      $region29: #{model_forward.5} parent=11 // pred_check
        %p481 = pneg %p195
      $region30: #{model_forward.5} parent=11 // pred_check_branch
        %483 = sbr.rel (%p481) target = $region32
      $region31: #{model_forward.5} parent=11 // pred_region
        _
      $region32: #{model_forward.5} parent=11 // pred_fallthru
        _
      // Predicated region
      $region33: #{model_forward.5} parent=11 // pred_check
        %p484 = pneg %p216
      $region34: #{model_forward.5} parent=11 // pred_check_branch
        %486 = sbr.rel (%p484) target = $region36
      $region35: #{model_forward.5} parent=11 // pred_region
        _
      $region36: #{model_forward.5} parent=11 // pred_fallthru
        _
      // Predicated region
      $region37: #{model_forward.5} parent=11 // pred_check
        %p487 = pneg %p237
      $region38: #{model_forward.5} parent=11 // pred_check_branch
        %489 = sbr.rel (%p487) target = $region40
      $region39: #{model_forward.5} parent=11 // pred_region
        _
      $region40: #{model_forward.5} parent=11 // pred_fallthru
        _
      // Predicated region
      $region41: #{model_forward.5} parent=11 // pred_check
        %p490 = pneg %p258
      $region42: #{model_forward.5} parent=11 // pred_check_branch
        %492 = sbr.rel (%p490) target = $region44
      $region43: #{model_forward.5} parent=11 // pred_region
        _
      $region44: #{model_forward.5} parent=11 // pred_fallthru
        _
      // Predicated region
      $region45: #{model_forward.5} parent=11 // pred_check
        %p493 = pneg %p279
      $region46: #{model_forward.5} parent=11 // pred_check_branch
        %495 = sbr.rel (%p493) target = $region48
      $region47: #{model_forward.5} parent=11 // pred_region
        _
      $region48: #{model_forward.5} parent=11 // pred_fallthru
        _
      // Predicated region
      $region49: #{model_forward.5} parent=11 // pred_check
        %p496 = pneg %p300
      $region50: #{model_forward.5} parent=11 // pred_check_branch
        %498 = sbr.rel (%p496) target = $region52
      $region51: #{model_forward.5} parent=11 // pred_region
        _
      $region52: #{model_forward.5} parent=11 // pred_fallthru
        _
      // Predicated region
      $region53: #{model_forward.5} parent=11 // pred_check
        %p499 = pneg %p321
      $region54: #{model_forward.5} parent=11 // pred_check_branch
        %501 = sbr.rel (%p499) target = $region56
      $region55: #{model_forward.5} parent=11 // pred_region
        _
      $region56: #{model_forward.5} parent=11 // pred_fallthru
        _
      // Predicated region
      $region57: #{model_forward.5} parent=11 // pred_check
        %p502 = pneg %p342
      $region58: #{model_forward.5} parent=11 // pred_check_branch
        %504 = sbr.rel (%p502) target = $region60
      $region59: #{model_forward.5} parent=11 // pred_region
        _
      $region60: #{model_forward.5} parent=11 // pred_fallthru
        _
      // Predicated region
      $region61: #{model_forward.5} parent=11 // pred_check
        %p505 = pneg %p363
      $region62: #{model_forward.5} parent=11 // pred_check_branch
        %507 = sbr.rel (%p505) target = $region64
      $region63: #{model_forward.5} parent=11 // pred_region
        _
      $region64: #{model_forward.5} parent=11 // pred_fallthru
        _
      // Predicated region
      $region65: #{model_forward.5} parent=11 // pred_check
        %p508 = pneg %p384
      $region66: #{model_forward.5} parent=11 // pred_check_branch
        %510 = sbr.rel (%p508) target = $region68
      $region67: #{model_forward.5} parent=11 // pred_region
        _
      $region68: #{model_forward.5} parent=11 // pred_fallthru
        _
      // Predicated region
      $region69: #{model_forward.5} parent=11 // pred_check
        %p511 = pneg %p405
      $region70: #{model_forward.5} parent=11 // pred_check_branch
        %513 = sbr.rel (%p511) target = $region72
      $region71: #{model_forward.5} parent=11 // pred_region
        _
      $region72: #{model_forward.5} parent=11 // pred_fallthru
        _
      // Predicated region
      $region73: #{model_forward.5} parent=11 // pred_check
        %p514 = pneg %p426
      $region74: #{model_forward.5} parent=11 // pred_check_branch
        %516 = sbr.rel (%p514) target = $region76
      $region75: #{model_forward.5} parent=11 // pred_region
        _
      $region76: #{model_forward.5} parent=11 // pred_fallthru
        _
    $region12: #{model_forward.5} parent=5 // pred_fallthru
      _
    %p517 = scmp.lt.s32.totalorder %s24, 2
    // Predicated region
    $region77: #{model_forward.5} parent=5 // pred_check
      %p518 = pneg %p517
    $region78: #{model_forward.5} parent=5 // pred_check_branch
      %520 = sbr.rel (%p518) target = $region80
    $region79: #{model_forward.5} parent=5 // pred_region
      // Predicated region
      $region81: #{model_forward.5} parent=79 // pred_check
        %p521 = pneg %p58
      $region82: #{model_forward.5} parent=79 // pred_check_branch
        %523 = sbr.rel (%p521) target = $region84
      $region83: #{model_forward.5} parent=79 // pred_region
        %p524 = scmp.lt.s32.totalorder %s31, 1
        %s525 = scalar_select %p524, %s31, 1
        %p526 = scmp.lt.s32.totalorder %s32, 0
        %s527 = scalar_select %p526, %s32, 0
        %s528 = sadd.s32 %s527, %s525
        %s529 = smul.addr %s528, 8
        %s530 = scalar_lea.vmem %s0, %s529
      $region84: #{model_forward.5} parent=79 // pred_fallthru
        _
      // Predicated region
      $region85: #{model_forward.5} parent=79 // pred_check
        %p531 = pneg %p84
      $region86: #{model_forward.5} parent=79 // pred_check_branch
        %533 = sbr.rel (%p531) target = $region88
      $region87: #{model_forward.5} parent=79 // pred_region
        %p534 = scmp.lt.s32.totalorder %s31, 1
        %s535 = scalar_select %p534, %s31, 1
        %s536 = smul.addr %s535, 8
        %s537 = scalar_lea.vmem %s1, %s536
      $region88: #{model_forward.5} parent=79 // pred_fallthru
        _
    $region80: #{model_forward.5} parent=5 // pred_fallthru
      _
    %p538 = scmp.le.s32.totalorder 1, %s24
    %p539 = scmp.lt.s32.totalorder %s24, 3
    %p540 = pnand %p538, %p539
    %p541 = pneg %p540
    // Predicated region
    $region89: #{model_forward.5} parent=5 // pred_check
      _
    $region90: #{model_forward.5} parent=5 // pred_check_branch
      %543 = sbr.rel (%p540) target = $region92
    $region91: #{model_forward.5} parent=5 // pred_region
      %s544 = ssub.s32 %s24, 1
      %p545 = scmp.lt.s32.totalorder %s33, 1
      %s546 = scalar_select %p545, %s33, 1
      %p547 = scmp.lt.s32.totalorder %s34, 0
      %s548 = scalar_select %p547, %s34, 0
      %s549 = sadd.s32 %s548, %s546
      %s550 = smul.addr %s549, 8
      %s551 = scalar_lea.vmem %s0, %s550
      %p552 = pneg %p64
      %p553 = pneg %p61
      %p554 = scmp.lt.s32.totalorder %s33, 1
      %s555 = scalar_select %p554, %s33, 1
      %s556 = smul.addr %s555, 8
      %s557 = scalar_lea.vmem %s1, %s556
      %p558 = pneg %p90
      %p559 = pneg %p87
      %p560 = pneg %p111
      %p561 = pneg %p108
      %p562 = pneg %p132
      %p563 = pneg %p129
      %p564 = pneg %p153
      %p565 = pneg %p150
      %p566 = pneg %p174
      %p567 = pneg %p171
      %p568 = pneg %p195
      %p569 = pneg %p192
      %p570 = pneg %p216
      %p571 = pneg %p213
      %p572 = pneg %p237
      %p573 = pneg %p234
      %p574 = pneg %p258
      %p575 = pneg %p255
      %p576 = pneg %p279
      %p577 = pneg %p276
      %p578 = pneg %p300
      %p579 = pneg %p297
      %p580 = pneg %p321
      %p581 = pneg %p318
      %p582 = pneg %p342
      %p583 = pneg %p339
      %p584 = pneg %p363
      %p585 = pneg %p360
      %p586 = pneg %p384
      %p587 = pneg %p381
      %p588 = pneg %p405
      %p589 = pneg %p402
      %p590 = pneg %p426
      %p591 = pneg %p423
      %p592 = pneg %p454
      %p593 = pneg %p451
      %p594 = scmp.lt.s32.totalorder %s33, 1
      %s595 = scalar_select %p594, %s33, 1
      %p596 = scmp.lt.s32.totalorder %s34, 0
      %s597 = scalar_select %p596, %s34, 0
      %s598 = sadd.s32 %s597, %s595
      %s599 = smul.addr %s598, 8
      %s600 = scalar_lea.vmem %s18, %s599
      %p601 = scmp.lt.s32.totalorder %s33, 1
      %s602 = scalar_select %p601, %s33, 1
      %p603 = scmp.lt.s32.totalorder %s34, 0
      %s604 = scalar_select %p603, %s34, 0
      %s605 = sadd.s32 %s604, %s602
      %s606 = smul.addr %s605, 8
      %s607 = scalar_lea.vmem %s0, %s606
      %p608 = scmp.lt.s32.totalorder %s33, 1
      %s609 = scalar_select %p608, %s33, 1
      %s610 = smul.addr %s609, 8
      %s611 = scalar_lea.vmem %s1, %s610
      %p612 = scmp.lt.s32.totalorder %s33, 1
      %s613 = scalar_select %p612, %s33, 1
      %p614 = scmp.lt.s32.totalorder %s34, 0
      %s615 = scalar_select %p614, %s34, 0
      %s616 = sadd.s32 %s615, %s613
      %s617 = smul.addr %s616, 8
      %s618 = scalar_lea.vmem %s18, %s617
      %p620 = scmp.eq.s32.totalorder %s34, 0
      // Predicated region
      $region93: #{model_forward.5} parent=91 // pred_check
        %p621 = pneg %p620
      $region94: #{model_forward.5} parent=91 // pred_check_branch
        %623 = sbr.rel (%p621) target = $region96
      $region95: #{model_forward.5} parent=91 // pred_region
        %v624 = vld [vmem:[%s611] sm:$0xff]
        %v625 = vpack.c.bf16 %v624, %v624
        %v626 = vld [vmem:[%s4] sm:$0xf]
        %v627 = vld [vmem:[%s4 + $0x4] sm:$0xf]
        %v628 = vld [vmem:[%s4 + $0x8] sm:$0xf]
        %v629 = vld [vmem:[%s4 + $0xc] sm:$0xf]
        %v630 = vld [vmem:[%s5] sm:$0x1]
        %v632 = vlaneseq
        %v633 = vshrl.u32 %v632, 7
        %v634 = vsub.s32 0, %v633
        %v635 = vrot.slane %v630, %v634
        %v641 = vunpack.c.l.b16 %v626
        %v642 = vunpack.c.l.b16 %v627
        %v643 = vunpack.c.l.b16 %v628
        %v644 = vunpack.c.l.b16 %v629
        %v645 = vpack.c.b16 %v642, %v641
        %v646 = vpack.c.b16 %v644, %v643
        %vm649 = vcmask 261120
        %v651 = vsel %vm649, %v625, 0
        %653 = vmatprep.subr.bf16.mxu0 0
        %654 = vmatpush1.bf16.msra.mxu0 %v645
        %655 = vmatprep.subr.bf16.mxu0 0
        %656 = vmatpush1.bf16.msra.mxu0 %v646
        %657 = vmatprep.subr.bf16.mxu0 0
        %658 = vmatpush1.bf16.msra.mxu0 0
        %659 = vmatprep.subr.bf16.mxu0 0
        %660 = vmatpush1.bf16.msra.mxu0 0
        %661 = vmatprep.subr.bf16.mxu0 0
        %662 = vmatpush1.bf16.msra.mxu0 0
        %663 = vmatprep.subr.bf16.mxu0 0
        %664 = vmatpush1.bf16.msra.mxu0 0
        %665 = vmatprep.subr.bf16.mxu0 0
        %666 = vmatpush1.bf16.msra.mxu0 0
        %667 = vmatprep.subr.bf16.mxu0 0
        %668 = vmatpush1.bf16.msra.mxu0 0
        %669 = vmatprep.subr.bf16.mxu0 0
        %670 = vmatpush1.bf16.msra.mxu0 0
        %671 = vmatprep.subr.bf16.mxu0 0
        %672 = vmatpush1.bf16.msra.mxu0 0
        %673 = vmatprep.subr.bf16.mxu0 0
        %674 = vmatpush1.bf16.msra.mxu0 0
        %675 = vmatprep.subr.bf16.mxu0 0
        %676 = vmatpush1.bf16.msra.mxu0 0
        %677 = vmatprep.subr.bf16.mxu0 0
        %678 = vmatpush1.bf16.msra.mxu0 0
        %679 = vmatprep.subr.bf16.mxu0 0
        %680 = vmatpush1.bf16.msra.mxu0 0
        %681 = vmatprep.subr.bf16.mxu0 0
        %682 = vmatpush1.bf16.msra.mxu0 0
        %683 = vmatprep.subr.bf16.mxu0 0
        %684 = vmatpush1.bf16.msra.mxu0 0
        %685 = vmatprep.mubr.bf16.mxu0 0
        %686 = vmatmul.mubr.bf16.gmra.mrb[0].mxu0 %v651
        %v687 = vpop.f32.mrb[0].mxu0
        %v688 = vadd.f32 %v635, %v687
        %v689 = vpop.f32.mrb[0].mxu0
        %v690 = vpop.f32.mrb[0].mxu0
        %v691 = vpop.f32.mrb[0].mxu0
        %692 = vdwg.mxu0
        %v693 = vpack.c.bf16 %v688, %v688
        %vm694 = vcmask 60416
        %695 = vst.msk [vmem:[#allocation2] sm:$0xf] %vm694, %v693
        %v696 = vld [vmem:[%s6] sm:$0xf]
        %v697 = vld [vmem:[%s6 + $0x4] sm:$0xf]
        %v698 = vld [vmem:[%s6 + $0x8] sm:$0xf]
        %v699 = vld [vmem:[%s6 + $0xc] sm:$0xf]
        %v700 = vld [vmem:[%s7] sm:$0x1]
        %v702 = vlaneseq
        %v703 = vshrl.u32 %v702, 7
        %v704 = vsub.s32 0, %v703
        %v705 = vrot.slane %v700, %v704
        %v711 = vunpack.c.l.b16 %v696
        %v712 = vunpack.c.l.b16 %v697
        %v713 = vunpack.c.l.b16 %v698
        %v714 = vunpack.c.l.b16 %v699
        %v715 = vpack.c.b16 %v712, %v711
        %v716 = vpack.c.b16 %v714, %v713
        %719 = vmatprep.subr.bf16.mxu0 0
        %720 = vmatpush1.bf16.msra.mxu0 %v715
        %721 = vmatprep.subr.bf16.mxu0 0
        %722 = vmatpush1.bf16.msra.mxu0 %v716
        %723 = vmatprep.subr.bf16.mxu0 0
        %724 = vmatpush1.bf16.msra.mxu0 0
        %725 = vmatprep.subr.bf16.mxu0 0
        %726 = vmatpush1.bf16.msra.mxu0 0
        %727 = vmatprep.subr.bf16.mxu0 0
        %728 = vmatpush1.bf16.msra.mxu0 0
        %729 = vmatprep.subr.bf16.mxu0 0
        %730 = vmatpush1.bf16.msra.mxu0 0
        %731 = vmatprep.subr.bf16.mxu0 0
        %732 = vmatpush1.bf16.msra.mxu0 0
        %733 = vmatprep.subr.bf16.mxu0 0
        %734 = vmatpush1.bf16.msra.mxu0 0
        %735 = vmatprep.subr.bf16.mxu0 0
        %736 = vmatpush1.bf16.msra.mxu0 0
        %737 = vmatprep.subr.bf16.mxu0 0
        %738 = vmatpush1.bf16.msra.mxu0 0
        %739 = vmatprep.subr.bf16.mxu0 0
        %740 = vmatpush1.bf16.msra.mxu0 0
        %741 = vmatprep.subr.bf16.mxu0 0
        %742 = vmatpush1.bf16.msra.mxu0 0
        %743 = vmatprep.subr.bf16.mxu0 0
        %744 = vmatpush1.bf16.msra.mxu0 0
        %745 = vmatprep.subr.bf16.mxu0 0
        %746 = vmatpush1.bf16.msra.mxu0 0
        %747 = vmatprep.subr.bf16.mxu0 0
        %748 = vmatpush1.bf16.msra.mxu0 0
        %749 = vmatprep.subr.bf16.mxu0 0
        %750 = vmatpush1.bf16.msra.mxu0 0
        %751 = vmatprep.mubr.bf16.mxu0 0
        %752 = vmatmul.mubr.bf16.gmra.mrb[0].mxu0 %v651
        %v753 = vpop.f32.mrb[0].mxu0
        %v754 = vadd.f32 %v705, %v753
        %v755 = vpop.f32.mrb[0].mxu0
        %v756 = vpop.f32.mrb[0].mxu0
        %v757 = vpop.f32.mrb[0].mxu0
        %758 = vdwg.mxu0
        %v759 = vpack.c.bf16 %v754, %v754
        %760 = vst.msk [vmem:[#allocation3] sm:$0xf] %vm694, %v759
        %s761 = scalar_lea.vmem %s4, 16
        %v762 = vld [vmem:[%s761] sm:$0xf]
        %v763 = vld [vmem:[%s761 + $0x4] sm:$0xf]
        %v764 = vld [vmem:[%s761 + $0x8] sm:$0xf]
        %v765 = vld [vmem:[%s761 + $0xc] sm:$0xf]
        %s766 = scalar_lea.vmem %s5, 1
        %v767 = vld [vmem:[%s766] sm:$0x1]
        %v769 = vlaneseq
        %v770 = vshrl.u32 %v769, 7
        %v771 = vsub.s32 0, %v770
        %v772 = vrot.slane %v767, %v771
        %v778 = vunpack.c.l.b16 %v762
        %v779 = vunpack.c.l.b16 %v763
        %v780 = vunpack.c.l.b16 %v764
        %v781 = vunpack.c.l.b16 %v765
        %v782 = vpack.c.b16 %v779, %v778
        %v783 = vpack.c.b16 %v781, %v780
        %786 = vmatprep.subr.bf16.mxu0 0
        %787 = vmatpush1.bf16.msra.mxu0 %v782
        %788 = vmatprep.subr.bf16.mxu0 0
        %789 = vmatpush1.bf16.msra.mxu0 %v783
        %790 = vmatprep.subr.bf16.mxu0 0
        %791 = vmatpush1.bf16.msra.mxu0 0
        %792 = vmatprep.subr.bf16.mxu0 0
        %793 = vmatpush1.bf16.msra.mxu0 0
        %794 = vmatprep.subr.bf16.mxu0 0
        %795 = vmatpush1.bf16.msra.mxu0 0
        %796 = vmatprep.subr.bf16.mxu0 0
        %797 = vmatpush1.bf16.msra.mxu0 0
        %798 = vmatprep.subr.bf16.mxu0 0
        %799 = vmatpush1.bf16.msra.mxu0 0
        %800 = vmatprep.subr.bf16.mxu0 0
        %801 = vmatpush1.bf16.msra.mxu0 0
        %802 = vmatprep.subr.bf16.mxu0 0
        %803 = vmatpush1.bf16.msra.mxu0 0
        %804 = vmatprep.subr.bf16.mxu0 0
        %805 = vmatpush1.bf16.msra.mxu0 0
        %806 = vmatprep.subr.bf16.mxu0 0
        %807 = vmatpush1.bf16.msra.mxu0 0
        %808 = vmatprep.subr.bf16.mxu0 0
        %809 = vmatpush1.bf16.msra.mxu0 0
        %810 = vmatprep.subr.bf16.mxu0 0
        %811 = vmatpush1.bf16.msra.mxu0 0
        %812 = vmatprep.subr.bf16.mxu0 0
        %813 = vmatpush1.bf16.msra.mxu0 0
        %814 = vmatprep.subr.bf16.mxu0 0
        %815 = vmatpush1.bf16.msra.mxu0 0
        %816 = vmatprep.subr.bf16.mxu0 0
        %817 = vmatpush1.bf16.msra.mxu0 0
        %818 = vmatprep.mubr.bf16.mxu0 0
        %819 = vmatmul.mubr.bf16.gmra.mrb[0].mxu0 %v651
        %v820 = vpop.f32.mrb[0].mxu0
        %v821 = vadd.f32 %v772, %v820
        %v822 = vpop.f32.mrb[0].mxu0
        %v823 = vpop.f32.mrb[0].mxu0
        %v824 = vpop.f32.mrb[0].mxu0
        %825 = vdwg.mxu0
        %v826 = vpack.c.bf16 %v821, %v821
        %s827 = scalar_lea.vmem [#allocation2], 4
        %828 = vst.msk [vmem:[%s827] sm:$0xf] %vm694, %v826
        %s829 = scalar_lea.vmem %s6, 16
        %v830 = vld [vmem:[%s829] sm:$0xf]
        %v831 = vld [vmem:[%s829 + $0x4] sm:$0xf]
        %v832 = vld [vmem:[%s829 + $0x8] sm:$0xf]
        %v833 = vld [vmem:[%s829 + $0xc] sm:$0xf]
        %s834 = scalar_lea.vmem %s7, 1
        %v835 = vld [vmem:[%s834] sm:$0x1]
        %v837 = vlaneseq
        %v838 = vshrl.u32 %v837, 7
        %v839 = vsub.s32 0, %v838
        %v840 = vrot.slane %v835, %v839
        %v846 = vunpack.c.l.b16 %v830
        %v847 = vunpack.c.l.b16 %v831
        %v848 = vunpack.c.l.b16 %v832
        %v849 = vunpack.c.l.b16 %v833
        %v850 = vpack.c.b16 %v847, %v846
        %v851 = vpack.c.b16 %v849, %v848
        %854 = vmatprep.subr.bf16.mxu0 0
        %855 = vmatpush1.bf16.msra.mxu0 %v850
        %856 = vmatprep.subr.bf16.mxu0 0
        %857 = vmatpush1.bf16.msra.mxu0 %v851
        %858 = vmatprep.subr.bf16.mxu0 0
        %859 = vmatpush1.bf16.msra.mxu0 0
        %860 = vmatprep.subr.bf16.mxu0 0
        %861 = vmatpush1.bf16.msra.mxu0 0
        %862 = vmatprep.subr.bf16.mxu0 0
        %863 = vmatpush1.bf16.msra.mxu0 0
        %864 = vmatprep.subr.bf16.mxu0 0
        %865 = vmatpush1.bf16.msra.mxu0 0
        %866 = vmatprep.subr.bf16.mxu0 0
        %867 = vmatpush1.bf16.msra.mxu0 0
        %868 = vmatprep.subr.bf16.mxu0 0
        %869 = vmatpush1.bf16.msra.mxu0 0
        %870 = vmatprep.subr.bf16.mxu0 0
        %871 = vmatpush1.bf16.msra.mxu0 0
        %872 = vmatprep.subr.bf16.mxu0 0
        %873 = vmatpush1.bf16.msra.mxu0 0
        %874 = vmatprep.subr.bf16.mxu0 0
        %875 = vmatpush1.bf16.msra.mxu0 0
        %876 = vmatprep.subr.bf16.mxu0 0
        %877 = vmatpush1.bf16.msra.mxu0 0
        %878 = vmatprep.subr.bf16.mxu0 0
        %879 = vmatpush1.bf16.msra.mxu0 0
        %880 = vmatprep.subr.bf16.mxu0 0
        %881 = vmatpush1.bf16.msra.mxu0 0
        %882 = vmatprep.subr.bf16.mxu0 0
        %883 = vmatpush1.bf16.msra.mxu0 0
        %884 = vmatprep.subr.bf16.mxu0 0
        %885 = vmatpush1.bf16.msra.mxu0 0
        %886 = vmatprep.mubr.bf16.mxu0 0
        %887 = vmatmul.mubr.bf16.gmra.mrb[0].mxu0 %v651
        %v888 = vpop.f32.mrb[0].mxu0
        %v889 = vadd.f32 %v840, %v888
        %v890 = vpop.f32.mrb[0].mxu0
        %v891 = vpop.f32.mrb[0].mxu0
        %v892 = vpop.f32.mrb[0].mxu0
        %893 = vdwg.mxu0
        %v894 = vpack.c.bf16 %v889, %v889
        %s895 = scalar_lea.vmem [#allocation3], 4
        %896 = vst.msk [vmem:[%s895] sm:$0xf] %vm694, %v894
        %s897 = scalar_lea.vmem %s4, 32
        %v898 = vld [vmem:[%s897] sm:$0xf]
        %v899 = vld [vmem:[%s897 + $0x4] sm:$0xf]
        %v900 = vld [vmem:[%s897 + $0x8] sm:$0xf]
        %v901 = vld [vmem:[%s897 + $0xc] sm:$0xf]
        %s902 = scalar_lea.vmem %s5, 2
        %v903 = vld [vmem:[%s902] sm:$0x1]
        %v905 = vlaneseq
        %v906 = vshrl.u32 %v905, 7
        %v907 = vsub.s32 0, %v906
        %v908 = vrot.slane %v903, %v907
        %v914 = vunpack.c.l.b16 %v898
        %v915 = vunpack.c.l.b16 %v899
        %v916 = vunpack.c.l.b16 %v900
        %v917 = vunpack.c.l.b16 %v901
        %v918 = vpack.c.b16 %v915, %v914
        %v919 = vpack.c.b16 %v917, %v916
        %922 = vmatprep.subr.bf16.mxu0 0
        %923 = vmatpush1.bf16.msra.mxu0 %v918
        %924 = vmatprep.subr.bf16.mxu0 0
        %925 = vmatpush1.bf16.msra.mxu0 %v919
        %926 = vmatprep.subr.bf16.mxu0 0
        %927 = vmatpush1.bf16.msra.mxu0 0
        %928 = vmatprep.subr.bf16.mxu0 0
        %929 = vmatpush1.bf16.msra.mxu0 0
        %930 = vmatprep.subr.bf16.mxu0 0
        %931 = vmatpush1.bf16.msra.mxu0 0
        %932 = vmatprep.subr.bf16.mxu0 0
        %933 = vmatpush1.bf16.msra.mxu0 0
        %934 = vmatprep.subr.bf16.mxu0 0
        %935 = vmatpush1.bf16.msra.mxu0 0
        %936 = vmatprep.subr.bf16.mxu0 0
        %937 = vmatpush1.bf16.msra.mxu0 0
        %938 = vmatprep.subr.bf16.mxu0 0
        %939 = vmatpush1.bf16.msra.mxu0 0
        %940 = vmatprep.subr.bf16.mxu0 0
        %941 = vmatpush1.bf16.msra.mxu0 0
        %942 = vmatprep.subr.bf16.mxu0 0
        %943 = vmatpush1.bf16.msra.mxu0 0
        %944 = vmatprep.subr.bf16.mxu0 0
        %945 = vmatpush1.bf16.msra.mxu0 0
        %946 = vmatprep.subr.bf16.mxu0 0
        %947 = vmatpush1.bf16.msra.mxu0 0
        %948 = vmatprep.subr.bf16.mxu0 0
        %949 = vmatpush1.bf16.msra.mxu0 0
        %950 = vmatprep.subr.bf16.mxu0 0
        %951 = vmatpush1.bf16.msra.mxu0 0
        %952 = vmatprep.subr.bf16.mxu0 0
        %953 = vmatpush1.bf16.msra.mxu0 0
        %954 = vmatprep.mubr.bf16.mxu0 0
        %955 = vmatmul.mubr.bf16.gmra.mrb[0].mxu0 %v651
        %v956 = vpop.f32.mrb[0].mxu0
        %v957 = vadd.f32 %v908, %v956
        %v958 = vpop.f32.mrb[0].mxu0
        %v959 = vpop.f32.mrb[0].mxu0
        %v960 = vpop.f32.mrb[0].mxu0
        %961 = vdwg.mxu0
        %v962 = vpack.c.bf16 %v957, %v957
        %s963 = scalar_lea.vmem [#allocation2], 8
        %964 = vst.msk [vmem:[%s963] sm:$0xf] %vm694, %v962
        %s965 = scalar_lea.vmem %s6, 32
        %v966 = vld [vmem:[%s965] sm:$0xf]
        %v967 = vld [vmem:[%s965 + $0x4] sm:$0xf]
        %v968 = vld [vmem:[%s965 + $0x8] sm:$0xf]
        %v969 = vld [vmem:[%s965 + $0xc] sm:$0xf]
        %s970 = scalar_lea.vmem %s7, 2
        %v971 = vld [vmem:[%s970] sm:$0x1]
        %v973 = vlaneseq
        %v974 = vshrl.u32 %v973, 7
        %v975 = vsub.s32 0, %v974
        %v976 = vrot.slane %v971, %v975
        %v982 = vunpack.c.l.b16 %v966
        %v983 = vunpack.c.l.b16 %v967
        %v984 = vunpack.c.l.b16 %v968
        %v985 = vunpack.c.l.b16 %v969
        %v986 = vpack.c.b16 %v983, %v982
        %v987 = vpack.c.b16 %v985, %v984
        %990 = vmatprep.subr.bf16.mxu0 0
        %991 = vmatpush1.bf16.msra.mxu0 %v986
        %992 = vmatprep.subr.bf16.mxu0 0
        %993 = vmatpush1.bf16.msra.mxu0 %v987
        %994 = vmatprep.subr.bf16.mxu0 0
        %995 = vmatpush1.bf16.msra.mxu0 0
        %996 = vmatprep.subr.bf16.mxu0 0
        %997 = vmatpush1.bf16.msra.mxu0 0
        %998 = vmatprep.subr.bf16.mxu0 0
        %999 = vmatpush1.bf16.msra.mxu0 0
        %1000 = vmatprep.subr.bf16.mxu0 0
        %1001 = vmatpush1.bf16.msra.mxu0 0
        %1002 = vmatprep.subr.bf16.mxu0 0
        %1003 = vmatpush1.bf16.msra.mxu0 0
        %1004 = vmatprep.subr.bf16.mxu0 0
        %1005 = vmatpush1.bf16.msra.mxu0 0
        %1006 = vmatprep.subr.bf16.mxu0 0
        %1007 = vmatpush1.bf16.msra.mxu0 0
        %1008 = vmatprep.subr.bf16.mxu0 0
        %1009 = vmatpush1.bf16.msra.mxu0 0
        %1010 = vmatprep.subr.bf16.mxu0 0
        %1011 = vmatpush1.bf16.msra.mxu0 0
        %1012 = vmatprep.subr.bf16.mxu0 0
        %1013 = vmatpush1.bf16.msra.mxu0 0
        %1014 = vmatprep.subr.bf16.mxu0 0
        %1015 = vmatpush1.bf16.msra.mxu0 0
        %1016 = vmatprep.subr.bf16.mxu0 0
        %1017 = vmatpush1.bf16.msra.mxu0 0
        %1018 = vmatprep.subr.bf16.mxu0 0
        %1019 = vmatpush1.bf16.msra.mxu0 0
        %1020 = vmatprep.subr.bf16.mxu0 0
        %1021 = vmatpush1.bf16.msra.mxu0 0
        %1022 = vmatprep.mubr.bf16.mxu0 0
        %1023 = vmatmul.mubr.bf16.gmra.mrb[0].mxu0 %v651
        %v1024 = vpop.f32.mrb[0].mxu0
        %v1025 = vadd.f32 %v976, %v1024
        %v1026 = vpop.f32.mrb[0].mxu0
        %v1027 = vpop.f32.mrb[0].mxu0
        %v1028 = vpop.f32.mrb[0].mxu0
        %1029 = vdwg.mxu0
        %v1030 = vpack.c.bf16 %v1025, %v1025
        %s1031 = scalar_lea.vmem [#allocation3], 8
        %1032 = vst.msk [vmem:[%s1031] sm:$0xf] %vm694, %v1030
        %s1033 = scalar_lea.vmem %s4, 48
        %v1034 = vld [vmem:[%s1033] sm:$0xf]
        %v1035 = vld [vmem:[%s1033 + $0x4] sm:$0xf]
        %v1036 = vld [vmem:[%s1033 + $0x8] sm:$0xf]
        %v1037 = vld [vmem:[%s1033 + $0xc] sm:$0xf]
        %s1038 = scalar_lea.vmem %s5, 3
        %v1039 = vld [vmem:[%s1038] sm:$0x1]
        %v1041 = vlaneseq
        %v1042 = vshrl.u32 %v1041, 7
        %v1043 = vsub.s32 0, %v1042
        %v1044 = vrot.slane %v1039, %v1043
        %v1050 = vunpack.c.l.b16 %v1034
        %v1051 = vunpack.c.l.b16 %v1035
        %v1052 = vunpack.c.l.b16 %v1036
        %v1053 = vunpack.c.l.b16 %v1037
        %v1054 = vpack.c.b16 %v1051, %v1050
        %v1055 = vpack.c.b16 %v1053, %v1052
        %1058 = vmatprep.subr.bf16.mxu0 0
        %1059 = vmatpush1.bf16.msra.mxu0 %v1054
        %1060 = vmatprep.subr.bf16.mxu0 0
        %1061 = vmatpush1.bf16.msra.mxu0 %v1055
        %1062 = vmatprep.subr.bf16.mxu0 0
        %1063 = vmatpush1.bf16.msra.mxu0 0
        %1064 = vmatprep.subr.bf16.mxu0 0
        %1065 = vmatpush1.bf16.msra.mxu0 0
        %1066 = vmatprep.subr.bf16.mxu0 0
        %1067 = vmatpush1.bf16.msra.mxu0 0
        %1068 = vmatprep.subr.bf16.mxu0 0
        %1069 = vmatpush1.bf16.msra.mxu0 0
        %1070 = vmatprep.subr.bf16.mxu0 0
        %1071 = vmatpush1.bf16.msra.mxu0 0
        %1072 = vmatprep.subr.bf16.mxu0 0
        %1073 = vmatpush1.bf16.msra.mxu0 0
        %1074 = vmatprep.subr.bf16.mxu0 0
        %1075 = vmatpush1.bf16.msra.mxu0 0
        %1076 = vmatprep.subr.bf16.mxu0 0
        %1077 = vmatpush1.bf16.msra.mxu0 0
        %1078 = vmatprep.subr.bf16.mxu0 0
        %1079 = vmatpush1.bf16.msra.mxu0 0
        %1080 = vmatprep.subr.bf16.mxu0 0
        %1081 = vmatpush1.bf16.msra.mxu0 0
        %1082 = vmatprep.subr.bf16.mxu0 0
        %1083 = vmatpush1.bf16.msra.mxu0 0
        %1084 = vmatprep.subr.bf16.mxu0 0
        %1085 = vmatpush1.bf16.msra.mxu0 0
        %1086 = vmatprep.subr.bf16.mxu0 0
        %1087 = vmatpush1.bf16.msra.mxu0 0
        %1088 = vmatprep.subr.bf16.mxu0 0
        %1089 = vmatpush1.bf16.msra.mxu0 0
        %1090 = vmatprep.mubr.bf16.mxu0 0
        %1091 = vmatmul.mubr.bf16.gmra.mrb[0].mxu0 %v651
        %v1092 = vpop.f32.mrb[0].mxu0
        %v1093 = vadd.f32 %v1044, %v1092
        %v1094 = vpop.f32.mrb[0].mxu0
        %v1095 = vpop.f32.mrb[0].mxu0
        %v1096 = vpop.f32.mrb[0].mxu0
        %1097 = vdwg.mxu0
        %v1098 = vpack.c.bf16 %v1093, %v1093
        %s1099 = scalar_lea.vmem [#allocation2], 12
        %1100 = vst.msk [vmem:[%s1099] sm:$0xf] %vm694, %v1098
        %s1101 = scalar_lea.vmem %s6, 48
        %v1102 = vld [vmem:[%s1101] sm:$0xf]
        %v1103 = vld [vmem:[%s1101 + $0x4] sm:$0xf]
        %v1104 = vld [vmem:[%s1101 + $0x8] sm:$0xf]
        %v1105 = vld [vmem:[%s1101 + $0xc] sm:$0xf]
        %s1106 = scalar_lea.vmem %s7, 3
        %v1107 = vld [vmem:[%s1106] sm:$0x1]
        %v1109 = vlaneseq
        %v1110 = vshrl.u32 %v1109, 7
        %v1111 = vsub.s32 0, %v1110
        %v1112 = vrot.slane %v1107, %v1111
        %v1118 = vunpack.c.l.b16 %v1102
        %v1119 = vunpack.c.l.b16 %v1103
        %v1120 = vunpack.c.l.b16 %v1104
        %v1121 = vunpack.c.l.b16 %v1105
        %v1122 = vpack.c.b16 %v1119, %v1118
        %v1123 = vpack.c.b16 %v1121, %v1120
        %1126 = vmatprep.subr.bf16.mxu0 0
        %1127 = vmatpush1.bf16.msra.mxu0 %v1122
        %1128 = vmatprep.subr.bf16.mxu0 0
        %1129 = vmatpush1.bf16.msra.mxu0 %v1123
        %1130 = vmatprep.subr.bf16.mxu0 0
        %1131 = vmatpush1.bf16.msra.mxu0 0
        %1132 = vmatprep.subr.bf16.mxu0 0
        %1133 = vmatpush1.bf16.msra.mxu0 0
        %1134 = vmatprep.subr.bf16.mxu0 0
        %1135 = vmatpush1.bf16.msra.mxu0 0
        %1136 = vmatprep.subr.bf16.mxu0 0
        %1137 = vmatpush1.bf16.msra.mxu0 0
        %1138 = vmatprep.subr.bf16.mxu0 0
        %1139 = vmatpush1.bf16.msra.mxu0 0
        %1140 = vmatprep.subr.bf16.mxu0 0
        %1141 = vmatpush1.bf16.msra.mxu0 0
        %1142 = vmatprep.subr.bf16.mxu0 0
        %1143 = vmatpush1.bf16.msra.mxu0 0
        %1144 = vmatprep.subr.bf16.mxu0 0
        %1145 = vmatpush1.bf16.msra.mxu0 0
        %1146 = vmatprep.subr.bf16.mxu0 0
        %1147 = vmatpush1.bf16.msra.mxu0 0
        %1148 = vmatprep.subr.bf16.mxu0 0
        %1149 = vmatpush1.bf16.msra.mxu0 0
        %1150 = vmatprep.subr.bf16.mxu0 0
        %1151 = vmatpush1.bf16.msra.mxu0 0
        %1152 = vmatprep.subr.bf16.mxu0 0
        %1153 = vmatpush1.bf16.msra.mxu0 0
        %1154 = vmatprep.subr.bf16.mxu0 0
        %1155 = vmatpush1.bf16.msra.mxu0 0
        %1156 = vmatprep.subr.bf16.mxu0 0
        %1157 = vmatpush1.bf16.msra.mxu0 0
        %1158 = vmatprep.mubr.bf16.mxu0 0
        %1159 = vmatmul.mubr.bf16.gmra.mrb[0].mxu0 %v651
        %v1160 = vpop.f32.mrb[0].mxu0
        %v1161 = vadd.f32 %v1112, %v1160
        %v1162 = vpop.f32.mrb[0].mxu0
        %v1163 = vpop.f32.mrb[0].mxu0
        %v1164 = vpop.f32.mrb[0].mxu0
        %1165 = vdwg.mxu0
        %v1166 = vpack.c.bf16 %v1161, %v1161
        %s1167 = scalar_lea.vmem [#allocation3], 12
        %1168 = vst.msk [vmem:[%s1167] sm:$0xf] %vm694, %v1166
      $region96: #{model_forward.5} parent=91 // pred_fallthru
        _
      %v1169 = vld [vmem:[%s607] sm:$0xff]
      %v1170 = vpack.c.bf16 %v1169, %v1169
      %v1171 = vld [vmem:[%s2] sm:$0xf]
      %v1172 = vld [vmem:[%s2 + $0x4] sm:$0xf]
      %v1173 = vld [vmem:[%s2 + $0x8] sm:$0xf]
      %v1174 = vld [vmem:[%s2 + $0xc] sm:$0xf]
      %v1175 = vld [vmem:[%s3] sm:$0x1]
      %v1177 = vlaneseq
      %v1178 = vshrl.u32 %v1177, 7
      %v1179 = vsub.s32 0, %v1178
      %v1180 = vrot.slane %v1175, %v1179
      %v1186 = vunpack.c.l.b16 %v1171
      %v1187 = vunpack.c.l.b16 %v1172
      %v1188 = vunpack.c.l.b16 %v1173
      %v1189 = vunpack.c.l.b16 %v1174
      %v1190 = vpack.c.b16 %v1187, %v1186
      %v1191 = vpack.c.b16 %v1189, %v1188
      %vm1194 = vcmask 261120
      %v1196 = vsel %vm1194, %v1170, 0
      %1198 = vmatprep.subr.bf16.mxu0 0
      %1199 = vmatpush1.bf16.msra.mxu0 %v1190
      %1200 = vmatprep.subr.bf16.mxu0 0
      %1201 = vmatpush1.bf16.msra.mxu0 %v1191
      %1202 = vmatprep.subr.bf16.mxu0 0
      %1203 = vmatpush1.bf16.msra.mxu0 0
      %1204 = vmatprep.subr.bf16.mxu0 0
      %1205 = vmatpush1.bf16.msra.mxu0 0
      %1206 = vmatprep.subr.bf16.mxu0 0
      %1207 = vmatpush1.bf16.msra.mxu0 0
      %1208 = vmatprep.subr.bf16.mxu0 0
      %1209 = vmatpush1.bf16.msra.mxu0 0
      %1210 = vmatprep.subr.bf16.mxu0 0
      %1211 = vmatpush1.bf16.msra.mxu0 0
      %1212 = vmatprep.subr.bf16.mxu0 0
      %1213 = vmatpush1.bf16.msra.mxu0 0
      %1214 = vmatprep.subr.bf16.mxu0 0
      %1215 = vmatpush1.bf16.msra.mxu0 0
      %1216 = vmatprep.subr.bf16.mxu0 0
      %1217 = vmatpush1.bf16.msra.mxu0 0
      %1218 = vmatprep.subr.bf16.mxu0 0
      %1219 = vmatpush1.bf16.msra.mxu0 0
      %1220 = vmatprep.subr.bf16.mxu0 0
      %1221 = vmatpush1.bf16.msra.mxu0 0
      %1222 = vmatprep.subr.bf16.mxu0 0
      %1223 = vmatpush1.bf16.msra.mxu0 0
      %1224 = vmatprep.subr.bf16.mxu0 0
      %1225 = vmatpush1.bf16.msra.mxu0 0
      %1226 = vmatprep.subr.bf16.mxu0 0
      %1227 = vmatpush1.bf16.msra.mxu0 0
      %1228 = vmatprep.subr.bf16.mxu0 0
      %1229 = vmatpush1.bf16.msra.mxu0 0
      %1230 = vmatprep.mubr.bf16.mxu0 0
      %1231 = vmatmul.mubr.bf16.gmra.mrb[0].mxu0 %v1196
      %v1232 = vpop.f32.mrb[0].mxu0
      %v1233 = vadd.f32 %v1180, %v1232
      %v1234 = vpop.f32.mrb[0].mxu0
      %v1235 = vpop.f32.mrb[0].mxu0
      %v1236 = vpop.f32.mrb[0].mxu0
      %1237 = vdwg.mxu0
      %v1238 = vld [vmem:[#allocation2] sm:$0xf]
      %v1239 = vpack.c.bf16 %v1233, %v1233
      %vm1240 = vcmask 64512
      %v1242 = vsel %vm1240, %v1239, 0
      %v1245 = vsel %vm1240, %v1238, 0
      %1247 = vmatprep.subr.bf16.mxu0 0
      %1248 = vmatpush1.bf16.xpose.msra.mxu0 %v1245
      %1249 = vmatprep.subr.bf16.mxu0 0
      %1250 = vmatpush1.bf16.xpose.msra.mxu0 0
      %1251 = vmatprep.subr.bf16.mxu0 0
      %1252 = vmatpush1.bf16.xpose.msra.mxu0 0
      %1253 = vmatprep.subr.bf16.mxu0 0
      %1254 = vmatpush1.bf16.xpose.msra.mxu0 0
      %1255 = vmatprep.subr.bf16.mxu0 0
      %1256 = vmatpush1.bf16.xpose.msra.mxu0 0
      %1257 = vmatprep.subr.bf16.mxu0 0
      %1258 = vmatpush1.bf16.xpose.msra.mxu0 0
      %1259 = vmatprep.subr.bf16.mxu0 0
      %1260 = vmatpush1.bf16.xpose.msra.mxu0 0
      %1261 = vmatprep.subr.bf16.mxu0 0
      %1262 = vmatpush1.bf16.xpose.msra.mxu0 0
      %1263 = vmatprep.subr.bf16.mxu0 0
      %1264 = vmatpush1.bf16.xpose.msra.mxu0 0
      %1265 = vmatprep.subr.bf16.mxu0 0
      %1266 = vmatpush1.bf16.xpose.msra.mxu0 0
      %1267 = vmatprep.subr.bf16.mxu0 0
      %1268 = vmatpush1.bf16.xpose.msra.mxu0 0
      %1269 = vmatprep.subr.bf16.mxu0 0
      %1270 = vmatpush1.bf16.xpose.msra.mxu0 0
      %1271 = vmatprep.subr.bf16.mxu0 0
      %1272 = vmatpush1.bf16.xpose.msra.mxu0 0
      %1273 = vmatprep.subr.bf16.mxu0 0
      %1274 = vmatpush1.bf16.xpose.msra.mxu0 0
      %1275 = vmatprep.subr.bf16.mxu0 0
      %1276 = vmatpush1.bf16.xpose.msra.mxu0 0
      %1277 = vmatprep.subr.bf16.mxu0 0
      %1278 = vmatpush1.bf16.xpose.msra.mxu0 0
      %1279 = vmatprep.mubr.bf16.mxu0 0
      %1280 = vmatmul.mubr.bf16.gmra.mrb[0].mxu0 %v1242
      %v1281 = vpop.f32.mrb[0].mxu0
      %v1282 = vadd.f32 0.0, %v1281
      %v1283 = vpop.f32.mrb[0].mxu0
      %v1284 = vpop.f32.mrb[0].mxu0
      %v1285 = vpop.f32.mrb[0].mxu0
      %1286 = vdwg.mxu0
      %v1287 = vsel %vm1240, %v1282, -inf
      %1288 = vmax.xlane.f32.xlu0 %v1287
      %v1289 = vpop.xlane.xlu0 %1288
      %v1290 = vsub.f32 %v1282, %v1289
      %v1291 = vmul.f32 %v1290, 1.442695
      %v1292 = vpow.pop %v1291
      %v1293 = vsel %vm1240, %v1292, 0.0
      %1294 = vadd.xlane.f32.xlu0 %v1293
      %v1295 = vpop.xlane.xlu0 %1294
      %v1296 = vrcp.pop %v1295
      %v1297 = vmul.f32 %v1292, %v1296
      %v1298 = vld [vmem:[#allocation3] sm:$0xf]
      %v1299 = vpack.c.bf16 %v1297, %v1297
      %v1301 = vsel %vm1240, %v1299, 0
      %vm1303 = vcmask 1043456
      %v1305 = vsel %vm1303, %v1298, 0
      %1307 = vmatprep.subr.bf16.mxu0 0
      %1308 = vmatpush1.bf16.msra.mxu0 %v1305
      %1309 = vmatprep.subr.bf16.mxu0 0
      %1310 = vmatpush1.bf16.msra.mxu0 0
      %1311 = vmatprep.subr.bf16.mxu0 0
      %1312 = vmatpush1.bf16.msra.mxu0 0
      %1313 = vmatprep.subr.bf16.mxu0 0
      %1314 = vmatpush1.bf16.msra.mxu0 0
      %1315 = vmatprep.subr.bf16.mxu0 0
      %1316 = vmatpush1.bf16.msra.mxu0 0
      %1317 = vmatprep.subr.bf16.mxu0 0
      %1318 = vmatpush1.bf16.msra.mxu0 0
      %1319 = vmatprep.subr.bf16.mxu0 0
      %1320 = vmatpush1.bf16.msra.mxu0 0
      %1321 = vmatprep.subr.bf16.mxu0 0
      %1322 = vmatpush1.bf16.msra.mxu0 0
      %1323 = vmatprep.subr.bf16.mxu0 0
      %1324 = vmatpush1.bf16.msra.mxu0 0
      %1325 = vmatprep.subr.bf16.mxu0 0
      %1326 = vmatpush1.bf16.msra.mxu0 0
      %1327 = vmatprep.subr.bf16.mxu0 0
      %1328 = vmatpush1.bf16.msra.mxu0 0
      %1329 = vmatprep.subr.bf16.mxu0 0
      %1330 = vmatpush1.bf16.msra.mxu0 0
      %1331 = vmatprep.subr.bf16.mxu0 0
      %1332 = vmatpush1.bf16.msra.mxu0 0
      %1333 = vmatprep.subr.bf16.mxu0 0
      %1334 = vmatpush1.bf16.msra.mxu0 0
      %1335 = vmatprep.subr.bf16.mxu0 0
      %1336 = vmatpush1.bf16.msra.mxu0 0
      %1337 = vmatprep.subr.bf16.mxu0 0
      %1338 = vmatpush1.bf16.msra.mxu0 0
      %1339 = vmatprep.mubr.bf16.mxu0 0
      %1340 = vmatmul.mubr.bf16.gmra.mrb[0].mxu0 %v1301
      %v1341 = vpop.f32.mrb[0].mxu0
      %v1342 = vadd.f32 0.0, %v1341
      %v1343 = vpop.f32.mrb[0].mxu0
      %v1344 = vpop.f32.mrb[0].mxu0
      %v1345 = vpop.f32.mrb[0].mxu0
      %1346 = vdwg.mxu0
      %1347 = vst.msk [vmem:[#allocation4] sm:$0xff] %vm1240, %v1342
      %s1348 = scalar_lea.vmem %s2, 16
      %v1349 = vld [vmem:[%s1348] sm:$0xf]
      %v1350 = vld [vmem:[%s1348 + $0x4] sm:$0xf]
      %v1351 = vld [vmem:[%s1348 + $0x8] sm:$0xf]
      %v1352 = vld [vmem:[%s1348 + $0xc] sm:$0xf]
      %s1353 = scalar_lea.vmem %s3, 1
      %v1354 = vld [vmem:[%s1353] sm:$0x1]
      %v1356 = vlaneseq
      %v1357 = vshrl.u32 %v1356, 7
      %v1358 = vsub.s32 0, %v1357
      %v1359 = vrot.slane %v1354, %v1358
      %v1365 = vunpack.c.l.b16 %v1349
      %v1366 = vunpack.c.l.b16 %v1350
      %v1367 = vunpack.c.l.b16 %v1351
      %v1368 = vunpack.c.l.b16 %v1352
      %v1369 = vpack.c.b16 %v1366, %v1365
      %v1370 = vpack.c.b16 %v1368, %v1367
      %1373 = vmatprep.subr.bf16.mxu0 0
      %1374 = vmatpush1.bf16.msra.mxu0 %v1369
      %1375 = vmatprep.subr.bf16.mxu0 0
      %1376 = vmatpush1.bf16.msra.mxu0 %v1370
      %1377 = vmatprep.subr.bf16.mxu0 0
      %1378 = vmatpush1.bf16.msra.mxu0 0
      %1379 = vmatprep.subr.bf16.mxu0 0
      %1380 = vmatpush1.bf16.msra.mxu0 0
      %1381 = vmatprep.subr.bf16.mxu0 0
      %1382 = vmatpush1.bf16.msra.mxu0 0
      %1383 = vmatprep.subr.bf16.mxu0 0
      %1384 = vmatpush1.bf16.msra.mxu0 0
      %1385 = vmatprep.subr.bf16.mxu0 0
      %1386 = vmatpush1.bf16.msra.mxu0 0
      %1387 = vmatprep.subr.bf16.mxu0 0
      %1388 = vmatpush1.bf16.msra.mxu0 0
      %1389 = vmatprep.subr.bf16.mxu0 0
      %1390 = vmatpush1.bf16.msra.mxu0 0
      %1391 = vmatprep.subr.bf16.mxu0 0
      %1392 = vmatpush1.bf16.msra.mxu0 0
      %1393 = vmatprep.subr.bf16.mxu0 0
      %1394 = vmatpush1.bf16.msra.mxu0 0
      %1395 = vmatprep.subr.bf16.mxu0 0
      %1396 = vmatpush1.bf16.msra.mxu0 0
      %1397 = vmatprep.subr.bf16.mxu0 0
      %1398 = vmatpush1.bf16.msra.mxu0 0
      %1399 = vmatprep.subr.bf16.mxu0 0
      %1400 = vmatpush1.bf16.msra.mxu0 0
      %1401 = vmatprep.subr.bf16.mxu0 0
      %1402 = vmatpush1.bf16.msra.mxu0 0
      %1403 = vmatprep.subr.bf16.mxu0 0
      %1404 = vmatpush1.bf16.msra.mxu0 0
      %1405 = vmatprep.mubr.bf16.mxu0 0
      %1406 = vmatmul.mubr.bf16.gmra.mrb[0].mxu0 %v1196
      %v1407 = vpop.f32.mrb[0].mxu0
      %v1408 = vadd.f32 %v1359, %v1407
      %v1409 = vpop.f32.mrb[0].mxu0
      %v1410 = vpop.f32.mrb[0].mxu0
      %v1411 = vpop.f32.mrb[0].mxu0
      %1412 = vdwg.mxu0
      %s1413 = scalar_lea.vmem [#allocation2], 4
      %v1414 = vld [vmem:[%s1413] sm:$0xf]
      %v1415 = vpack.c.bf16 %v1408, %v1408
      %v1417 = vsel %vm1240, %v1415, 0
      %v1420 = vsel %vm1240, %v1414, 0
      %1422 = vmatprep.subr.bf16.mxu0 0
      %1423 = vmatpush1.bf16.xpose.msra.mxu0 %v1420
      %1424 = vmatprep.subr.bf16.mxu0 0
      %1425 = vmatpush1.bf16.xpose.msra.mxu0 0
      %1426 = vmatprep.subr.bf16.mxu0 0
      %1427 = vmatpush1.bf16.xpose.msra.mxu0 0
      %1428 = vmatprep.subr.bf16.mxu0 0
      %1429 = vmatpush1.bf16.xpose.msra.mxu0 0
      %1430 = vmatprep.subr.bf16.mxu0 0
      %1431 = vmatpush1.bf16.xpose.msra.mxu0 0
      %1432 = vmatprep.subr.bf16.mxu0 0
      %1433 = vmatpush1.bf16.xpose.msra.mxu0 0
      %1434 = vmatprep.subr.bf16.mxu0 0
      %1435 = vmatpush1.bf16.xpose.msra.mxu0 0
      %1436 = vmatprep.subr.bf16.mxu0 0
      %1437 = vmatpush1.bf16.xpose.msra.mxu0 0
      %1438 = vmatprep.subr.bf16.mxu0 0
      %1439 = vmatpush1.bf16.xpose.msra.mxu0 0
      %1440 = vmatprep.subr.bf16.mxu0 0
      %1441 = vmatpush1.bf16.xpose.msra.mxu0 0
      %1442 = vmatprep.subr.bf16.mxu0 0
      %1443 = vmatpush1.bf16.xpose.msra.mxu0 0
      %1444 = vmatprep.subr.bf16.mxu0 0
      %1445 = vmatpush1.bf16.xpose.msra.mxu0 0
      %1446 = vmatprep.subr.bf16.mxu0 0
      %1447 = vmatpush1.bf16.xpose.msra.mxu0 0
      %1448 = vmatprep.subr.bf16.mxu0 0
      %1449 = vmatpush1.bf16.xpose.msra.mxu0 0
      %1450 = vmatprep.subr.bf16.mxu0 0
      %1451 = vmatpush1.bf16.xpose.msra.mxu0 0
      %1452 = vmatprep.subr.bf16.mxu0 0
      %1453 = vmatpush1.bf16.xpose.msra.mxu0 0
      %1454 = vmatprep.mubr.bf16.mxu0 0
      %1455 = vmatmul.mubr.bf16.gmra.mrb[0].mxu0 %v1417
      %v1456 = vpop.f32.mrb[0].mxu0
      %v1457 = vadd.f32 0.0, %v1456
      %v1458 = vpop.f32.mrb[0].mxu0
      %v1459 = vpop.f32.mrb[0].mxu0
      %v1460 = vpop.f32.mrb[0].mxu0
      %1461 = vdwg.mxu0
      %v1462 = vsel %vm1240, %v1457, -inf
      %1463 = vmax.xlane.f32.xlu0 %v1462
      %v1464 = vpop.xlane.xlu0 %1463
      %v1465 = vsub.f32 %v1457, %v1464
      %v1466 = vmul.f32 %v1465, 1.442695
      %v1467 = vpow.pop %v1466
      %v1468 = vsel %vm1240, %v1467, 0.0
      %1469 = vadd.xlane.f32.xlu0 %v1468
      %v1470 = vpop.xlane.xlu0 %1469
      %v1471 = vrcp.pop %v1470
      %v1472 = vmul.f32 %v1467, %v1471
      %s1473 = scalar_lea.vmem [#allocation3], 4
      %v1474 = vld [vmem:[%s1473] sm:$0xf]
      %v1475 = vpack.c.bf16 %v1472, %v1472
      %v1477 = vsel %vm1240, %v1475, 0
      %v1480 = vsel %vm1303, %v1474, 0
      %1482 = vmatprep.subr.bf16.mxu0 0
      %1483 = vmatpush1.bf16.msra.mxu0 %v1480
      %1484 = vmatprep.subr.bf16.mxu0 0
      %1485 = vmatpush1.bf16.msra.mxu0 0
      %1486 = vmatprep.subr.bf16.mxu0 0
      %1487 = vmatpush1.bf16.msra.mxu0 0
      %1488 = vmatprep.subr.bf16.mxu0 0
      %1489 = vmatpush1.bf16.msra.mxu0 0
      %1490 = vmatprep.subr.bf16.mxu0 0
      %1491 = vmatpush1.bf16.msra.mxu0 0
      %1492 = vmatprep.subr.bf16.mxu0 0
      %1493 = vmatpush1.bf16.msra.mxu0 0
      %1494 = vmatprep.subr.bf16.mxu0 0
      %1495 = vmatpush1.bf16.msra.mxu0 0
      %1496 = vmatprep.subr.bf16.mxu0 0
      %1497 = vmatpush1.bf16.msra.mxu0 0
      %1498 = vmatprep.subr.bf16.mxu0 0
      %1499 = vmatpush1.bf16.msra.mxu0 0
      %1500 = vmatprep.subr.bf16.mxu0 0
      %1501 = vmatpush1.bf16.msra.mxu0 0
      %1502 = vmatprep.subr.bf16.mxu0 0
      %1503 = vmatpush1.bf16.msra.mxu0 0
      %1504 = vmatprep.subr.bf16.mxu0 0
      %1505 = vmatpush1.bf16.msra.mxu0 0
      %1506 = vmatprep.subr.bf16.mxu0 0
      %1507 = vmatpush1.bf16.msra.mxu0 0
      %1508 = vmatprep.subr.bf16.mxu0 0
      %1509 = vmatpush1.bf16.msra.mxu0 0
      %1510 = vmatprep.subr.bf16.mxu0 0
      %1511 = vmatpush1.bf16.msra.mxu0 0
      %1512 = vmatprep.subr.bf16.mxu0 0
      %1513 = vmatpush1.bf16.msra.mxu0 0
      %1514 = vmatprep.mubr.bf16.mxu0 0
      %1515 = vmatmul.mubr.bf16.gmra.mrb[0].mxu0 %v1477
      %v1516 = vpop.f32.mrb[0].mxu0
      %v1517 = vadd.f32 0.0, %v1516
      %v1518 = vpop.f32.mrb[0].mxu0
      %v1519 = vpop.f32.mrb[0].mxu0
      %v1520 = vpop.f32.mrb[0].mxu0
      %1521 = vdwg.mxu0
      %1523 = vrot.lane.b32.xlu0 %v1517, 8
      %v1524 = vpop.permute.xlu0 %1523
      %vm1526 = vcmask 130112
      %1527 = vst.msk [vmem:[#allocation4] sm:$0xff] %vm1526, %v1524
      %s1528 = scalar_lea.vmem %s2, 32
      %v1529 = vld [vmem:[%s1528] sm:$0xf]
      %v1530 = vld [vmem:[%s1528 + $0x4] sm:$0xf]
      %v1531 = vld [vmem:[%s1528 + $0x8] sm:$0xf]
      %v1532 = vld [vmem:[%s1528 + $0xc] sm:$0xf]
      %s1533 = scalar_lea.vmem %s3, 2
      %v1534 = vld [vmem:[%s1533] sm:$0x1]
      %v1536 = vlaneseq
      %v1537 = vshrl.u32 %v1536, 7
      %v1538 = vsub.s32 0, %v1537
      %v1539 = vrot.slane %v1534, %v1538
      %v1545 = vunpack.c.l.b16 %v1529
      %v1546 = vunpack.c.l.b16 %v1530
      %v1547 = vunpack.c.l.b16 %v1531
      %v1548 = vunpack.c.l.b16 %v1532
      %v1549 = vpack.c.b16 %v1546, %v1545
      %v1550 = vpack.c.b16 %v1548, %v1547
      %1553 = vmatprep.subr.bf16.mxu0 0
      %1554 = vmatpush1.bf16.msra.mxu0 %v1549
      %1555 = vmatprep.subr.bf16.mxu0 0
      %1556 = vmatpush1.bf16.msra.mxu0 %v1550
      %1557 = vmatprep.subr.bf16.mxu0 0
      %1558 = vmatpush1.bf16.msra.mxu0 0
      %1559 = vmatprep.subr.bf16.mxu0 0
      %1560 = vmatpush1.bf16.msra.mxu0 0
      %1561 = vmatprep.subr.bf16.mxu0 0
      %1562 = vmatpush1.bf16.msra.mxu0 0
      %1563 = vmatprep.subr.bf16.mxu0 0
      %1564 = vmatpush1.bf16.msra.mxu0 0
      %1565 = vmatprep.subr.bf16.mxu0 0
      %1566 = vmatpush1.bf16.msra.mxu0 0
      %1567 = vmatprep.subr.bf16.mxu0 0
      %1568 = vmatpush1.bf16.msra.mxu0 0
      %1569 = vmatprep.subr.bf16.mxu0 0
      %1570 = vmatpush1.bf16.msra.mxu0 0
      %1571 = vmatprep.subr.bf16.mxu0 0
      %1572 = vmatpush1.bf16.msra.mxu0 0
      %1573 = vmatprep.subr.bf16.mxu0 0
      %1574 = vmatpush1.bf16.msra.mxu0 0
      %1575 = vmatprep.subr.bf16.mxu0 0
      %1576 = vmatpush1.bf16.msra.mxu0 0
      %1577 = vmatprep.subr.bf16.mxu0 0
      %1578 = vmatpush1.bf16.msra.mxu0 0
      %1579 = vmatprep.subr.bf16.mxu0 0
      %1580 = vmatpush1.bf16.msra.mxu0 0
      %1581 = vmatprep.subr.bf16.mxu0 0
      %1582 = vmatpush1.bf16.msra.mxu0 0
      %1583 = vmatprep.subr.bf16.mxu0 0
      %1584 = vmatpush1.bf16.msra.mxu0 0
      %1585 = vmatprep.mubr.bf16.mxu0 0
      %1586 = vmatmul.mubr.bf16.gmra.mrb[0].mxu0 %v1196
      %v1587 = vpop.f32.mrb[0].mxu0
      %v1588 = vadd.f32 %v1539, %v1587
      %v1589 = vpop.f32.mrb[0].mxu0
      %v1590 = vpop.f32.mrb[0].mxu0
      %v1591 = vpop.f32.mrb[0].mxu0
      %1592 = vdwg.mxu0
      %s1593 = scalar_lea.vmem [#allocation2], 8
      %v1594 = vld [vmem:[%s1593] sm:$0xf]
      %v1595 = vpack.c.bf16 %v1588, %v1588
      %v1597 = vsel %vm1240, %v1595, 0
      %v1600 = vsel %vm1240, %v1594, 0
      %1602 = vmatprep.subr.bf16.mxu0 0
      %1603 = vmatpush1.bf16.xpose.msra.mxu0 %v1600
      %1604 = vmatprep.subr.bf16.mxu0 0
      %1605 = vmatpush1.bf16.xpose.msra.mxu0 0
      %1606 = vmatprep.subr.bf16.mxu0 0
      %1607 = vmatpush1.bf16.xpose.msra.mxu0 0
      %1608 = vmatprep.subr.bf16.mxu0 0
      %1609 = vmatpush1.bf16.xpose.msra.mxu0 0
      %1610 = vmatprep.subr.bf16.mxu0 0
      %1611 = vmatpush1.bf16.xpose.msra.mxu0 0
      %1612 = vmatprep.subr.bf16.mxu0 0
      %1613 = vmatpush1.bf16.xpose.msra.mxu0 0
      %1614 = vmatprep.subr.bf16.mxu0 0
      %1615 = vmatpush1.bf16.xpose.msra.mxu0 0
      %1616 = vmatprep.subr.bf16.mxu0 0
      %1617 = vmatpush1.bf16.xpose.msra.mxu0 0
      %1618 = vmatprep.subr.bf16.mxu0 0
      %1619 = vmatpush1.bf16.xpose.msra.mxu0 0
      %1620 = vmatprep.subr.bf16.mxu0 0
      %1621 = vmatpush1.bf16.xpose.msra.mxu0 0
      %1622 = vmatprep.subr.bf16.mxu0 0
      %1623 = vmatpush1.bf16.xpose.msra.mxu0 0
      %1624 = vmatprep.subr.bf16.mxu0 0
      %1625 = vmatpush1.bf16.xpose.msra.mxu0 0
      %1626 = vmatprep.subr.bf16.mxu0 0
      %1627 = vmatpush1.bf16.xpose.msra.mxu0 0
      %1628 = vmatprep.subr.bf16.mxu0 0
      %1629 = vmatpush1.bf16.xpose.msra.mxu0 0
      %1630 = vmatprep.subr.bf16.mxu0 0
      %1631 = vmatpush1.bf16.xpose.msra.mxu0 0
      %1632 = vmatprep.subr.bf16.mxu0 0
      %1633 = vmatpush1.bf16.xpose.msra.mxu0 0
      %1634 = vmatprep.mubr.bf16.mxu0 0
      %1635 = vmatmul.mubr.bf16.gmra.mrb[0].mxu0 %v1597
      %v1636 = vpop.f32.mrb[0].mxu0
      %v1637 = vadd.f32 0.0, %v1636
      %v1638 = vpop.f32.mrb[0].mxu0
      %v1639 = vpop.f32.mrb[0].mxu0
      %v1640 = vpop.f32.mrb[0].mxu0
      %1641 = vdwg.mxu0
      %v1642 = vsel %vm1240, %v1637, -inf
      %1643 = vmax.xlane.f32.xlu0 %v1642
      %v1644 = vpop.xlane.xlu0 %1643
      %v1645 = vsub.f32 %v1637, %v1644
      %v1646 = vmul.f32 %v1645, 1.442695
      %v1647 = vpow.pop %v1646
      %v1648 = vsel %vm1240, %v1647, 0.0
      %1649 = vadd.xlane.f32.xlu0 %v1648
      %v1650 = vpop.xlane.xlu0 %1649
      %v1651 = vrcp.pop %v1650
      %v1652 = vmul.f32 %v1647, %v1651
      %s1653 = scalar_lea.vmem [#allocation3], 8
      %v1654 = vld [vmem:[%s1653] sm:$0xf]
      %v1655 = vpack.c.bf16 %v1652, %v1652
      %v1657 = vsel %vm1240, %v1655, 0
      %v1660 = vsel %vm1303, %v1654, 0
      %1662 = vmatprep.subr.bf16.mxu0 0
      %1663 = vmatpush1.bf16.msra.mxu0 %v1660
      %1664 = vmatprep.subr.bf16.mxu0 0
      %1665 = vmatpush1.bf16.msra.mxu0 0
      %1666 = vmatprep.subr.bf16.mxu0 0
      %1667 = vmatpush1.bf16.msra.mxu0 0
      %1668 = vmatprep.subr.bf16.mxu0 0
      %1669 = vmatpush1.bf16.msra.mxu0 0
      %1670 = vmatprep.subr.bf16.mxu0 0
      %1671 = vmatpush1.bf16.msra.mxu0 0
      %1672 = vmatprep.subr.bf16.mxu0 0
      %1673 = vmatpush1.bf16.msra.mxu0 0
      %1674 = vmatprep.subr.bf16.mxu0 0
      %1675 = vmatpush1.bf16.msra.mxu0 0
      %1676 = vmatprep.subr.bf16.mxu0 0
      %1677 = vmatpush1.bf16.msra.mxu0 0
      %1678 = vmatprep.subr.bf16.mxu0 0
      %1679 = vmatpush1.bf16.msra.mxu0 0
      %1680 = vmatprep.subr.bf16.mxu0 0
      %1681 = vmatpush1.bf16.msra.mxu0 0
      %1682 = vmatprep.subr.bf16.mxu0 0
      %1683 = vmatpush1.bf16.msra.mxu0 0
      %1684 = vmatprep.subr.bf16.mxu0 0
      %1685 = vmatpush1.bf16.msra.mxu0 0
      %1686 = vmatprep.subr.bf16.mxu0 0
      %1687 = vmatpush1.bf16.msra.mxu0 0
      %1688 = vmatprep.subr.bf16.mxu0 0
      %1689 = vmatpush1.bf16.msra.mxu0 0
      %1690 = vmatprep.subr.bf16.mxu0 0
      %1691 = vmatpush1.bf16.msra.mxu0 0
      %1692 = vmatprep.subr.bf16.mxu0 0
      %1693 = vmatpush1.bf16.msra.mxu0 0
      %1694 = vmatprep.mubr.bf16.mxu0 0
      %1695 = vmatmul.mubr.bf16.gmra.mrb[0].mxu0 %v1657
      %v1696 = vpop.f32.mrb[0].mxu0
      %v1697 = vadd.f32 0.0, %v1696
      %v1698 = vpop.f32.mrb[0].mxu0
      %v1699 = vpop.f32.mrb[0].mxu0
      %v1700 = vpop.f32.mrb[0].mxu0
      %1701 = vdwg.mxu0
      %1703 = vrot.lane.b32.xlu0 %v1697, 16
      %v1704 = vpop.permute.xlu0 %1703
      %vm1706 = vcmask 195712
      %1707 = vst.msk [vmem:[#allocation4] sm:$0xff] %vm1706, %v1704
      %s1708 = scalar_lea.vmem %s2, 48
      %v1709 = vld [vmem:[%s1708] sm:$0xf]
      %v1710 = vld [vmem:[%s1708 + $0x4] sm:$0xf]
      %v1711 = vld [vmem:[%s1708 + $0x8] sm:$0xf]
      %v1712 = vld [vmem:[%s1708 + $0xc] sm:$0xf]
      %s1713 = scalar_lea.vmem %s3, 3
      %v1714 = vld [vmem:[%s1713] sm:$0x1]
      %v1716 = vlaneseq
      %v1717 = vshrl.u32 %v1716, 7
      %v1718 = vsub.s32 0, %v1717
      %v1719 = vrot.slane %v1714, %v1718
      %v1725 = vunpack.c.l.b16 %v1709
      %v1726 = vunpack.c.l.b16 %v1710
      %v1727 = vunpack.c.l.b16 %v1711
      %v1728 = vunpack.c.l.b16 %v1712
      %v1729 = vpack.c.b16 %v1726, %v1725
      %v1730 = vpack.c.b16 %v1728, %v1727
      %1733 = vmatprep.subr.bf16.mxu0 0
      %1734 = vmatpush1.bf16.msra.mxu0 %v1729
      %1735 = vmatprep.subr.bf16.mxu0 0
      %1736 = vmatpush1.bf16.msra.mxu0 %v1730
      %1737 = vmatprep.subr.bf16.mxu0 0
      %1738 = vmatpush1.bf16.msra.mxu0 0
      %1739 = vmatprep.subr.bf16.mxu0 0
      %1740 = vmatpush1.bf16.msra.mxu0 0
      %1741 = vmatprep.subr.bf16.mxu0 0
      %1742 = vmatpush1.bf16.msra.mxu0 0
      %1743 = vmatprep.subr.bf16.mxu0 0
      %1744 = vmatpush1.bf16.msra.mxu0 0
      %1745 = vmatprep.subr.bf16.mxu0 0
      %1746 = vmatpush1.bf16.msra.mxu0 0
      %1747 = vmatprep.subr.bf16.mxu0 0
      %1748 = vmatpush1.bf16.msra.mxu0 0
      %1749 = vmatprep.subr.bf16.mxu0 0
      %1750 = vmatpush1.bf16.msra.mxu0 0
      %1751 = vmatprep.subr.bf16.mxu0 0
      %1752 = vmatpush1.bf16.msra.mxu0 0
      %1753 = vmatprep.subr.bf16.mxu0 0
      %1754 = vmatpush1.bf16.msra.mxu0 0
      %1755 = vmatprep.subr.bf16.mxu0 0
      %1756 = vmatpush1.bf16.msra.mxu0 0
      %1757 = vmatprep.subr.bf16.mxu0 0
      %1758 = vmatpush1.bf16.msra.mxu0 0
      %1759 = vmatprep.subr.bf16.mxu0 0
      %1760 = vmatpush1.bf16.msra.mxu0 0
      %1761 = vmatprep.subr.bf16.mxu0 0
      %1762 = vmatpush1.bf16.msra.mxu0 0
      %1763 = vmatprep.subr.bf16.mxu0 0
      %1764 = vmatpush1.bf16.msra.mxu0 0
      %1765 = vmatprep.mubr.bf16.mxu0 0
      %1766 = vmatmul.mubr.bf16.gmra.mrb[0].mxu0 %v1196
      %v1767 = vpop.f32.mrb[0].mxu0
      %v1768 = vadd.f32 %v1719, %v1767
      %v1769 = vpop.f32.mrb[0].mxu0
      %v1770 = vpop.f32.mrb[0].mxu0
      %v1771 = vpop.f32.mrb[0].mxu0
      %1772 = vdwg.mxu0
      %s1773 = scalar_lea.vmem [#allocation2], 12
      %v1774 = vld [vmem:[%s1773] sm:$0xf]
      %v1775 = vpack.c.bf16 %v1768, %v1768
      %v1777 = vsel %vm1240, %v1775, 0
      %v1780 = vsel %vm1240, %v1774, 0
      %1782 = vmatprep.subr.bf16.mxu0 0
      %1783 = vmatpush1.bf16.xpose.msra.mxu0 %v1780
      %1784 = vmatprep.subr.bf16.mxu0 0
      %1785 = vmatpush1.bf16.xpose.msra.mxu0 0
      %1786 = vmatprep.subr.bf16.mxu0 0
      %1787 = vmatpush1.bf16.xpose.msra.mxu0 0
      %1788 = vmatprep.subr.bf16.mxu0 0
      %1789 = vmatpush1.bf16.xpose.msra.mxu0 0
      %1790 = vmatprep.subr.bf16.mxu0 0
      %1791 = vmatpush1.bf16.xpose.msra.mxu0 0
      %1792 = vmatprep.subr.bf16.mxu0 0
      %1793 = vmatpush1.bf16.xpose.msra.mxu0 0
      %1794 = vmatprep.subr.bf16.mxu0 0
      %1795 = vmatpush1.bf16.xpose.msra.mxu0 0
      %1796 = vmatprep.subr.bf16.mxu0 0
      %1797 = vmatpush1.bf16.xpose.msra.mxu0 0
      %1798 = vmatprep.subr.bf16.mxu0 0
      %1799 = vmatpush1.bf16.xpose.msra.mxu0 0
      %1800 = vmatprep.subr.bf16.mxu0 0
      %1801 = vmatpush1.bf16.xpose.msra.mxu0 0
      %1802 = vmatprep.subr.bf16.mxu0 0
      %1803 = vmatpush1.bf16.xpose.msra.mxu0 0
      %1804 = vmatprep.subr.bf16.mxu0 0
      %1805 = vmatpush1.bf16.xpose.msra.mxu0 0
      %1806 = vmatprep.subr.bf16.mxu0 0
      %1807 = vmatpush1.bf16.xpose.msra.mxu0 0
      %1808 = vmatprep.subr.bf16.mxu0 0
      %1809 = vmatpush1.bf16.xpose.msra.mxu0 0
      %1810 = vmatprep.subr.bf16.mxu0 0
      %1811 = vmatpush1.bf16.xpose.msra.mxu0 0
      %1812 = vmatprep.subr.bf16.mxu0 0
      %1813 = vmatpush1.bf16.xpose.msra.mxu0 0
      %1814 = vmatprep.mubr.bf16.mxu0 0
      %1815 = vmatmul.mubr.bf16.gmra.mrb[0].mxu0 %v1777
      %v1816 = vpop.f32.mrb[0].mxu0
      %v1817 = vadd.f32 0.0, %v1816
      %v1818 = vpop.f32.mrb[0].mxu0
      %v1819 = vpop.f32.mrb[0].mxu0
      %v1820 = vpop.f32.mrb[0].mxu0
      %1821 = vdwg.mxu0
      %v1822 = vsel %vm1240, %v1817, -inf
      %1823 = vmax.xlane.f32.xlu0 %v1822
      %v1824 = vpop.xlane.xlu0 %1823
      %v1825 = vsub.f32 %v1817, %v1824
      %v1826 = vmul.f32 %v1825, 1.442695
      %v1827 = vpow.pop %v1826
      %v1828 = vsel %vm1240, %v1827, 0.0
      %1829 = vadd.xlane.f32.xlu0 %v1828
      %v1830 = vpop.xlane.xlu0 %1829
      %v1831 = vrcp.pop %v1830
      %v1832 = vmul.f32 %v1827, %v1831
      %s1833 = scalar_lea.vmem [#allocation3], 12
      %v1834 = vld [vmem:[%s1833] sm:$0xf]
      %v1835 = vpack.c.bf16 %v1832, %v1832
      %v1837 = vsel %vm1240, %v1835, 0
      %v1840 = vsel %vm1303, %v1834, 0
      %1842 = vmatprep.subr.bf16.mxu0 0
      %1843 = vmatpush1.bf16.msra.mxu0 %v1840
      %1844 = vmatprep.subr.bf16.mxu0 0
      %1845 = vmatpush1.bf16.msra.mxu0 0
      %1846 = vmatprep.subr.bf16.mxu0 0
      %1847 = vmatpush1.bf16.msra.mxu0 0
      %1848 = vmatprep.subr.bf16.mxu0 0
      %1849 = vmatpush1.bf16.msra.mxu0 0
      %1850 = vmatprep.subr.bf16.mxu0 0
      %1851 = vmatpush1.bf16.msra.mxu0 0
      %1852 = vmatprep.subr.bf16.mxu0 0
      %1853 = vmatpush1.bf16.msra.mxu0 0
      %1854 = vmatprep.subr.bf16.mxu0 0
      %1855 = vmatpush1.bf16.msra.mxu0 0
      %1856 = vmatprep.subr.bf16.mxu0 0
      %1857 = vmatpush1.bf16.msra.mxu0 0
      %1858 = vmatprep.subr.bf16.mxu0 0
      %1859 = vmatpush1.bf16.msra.mxu0 0
      %1860 = vmatprep.subr.bf16.mxu0 0
      %1861 = vmatpush1.bf16.msra.mxu0 0
      %1862 = vmatprep.subr.bf16.mxu0 0
      %1863 = vmatpush1.bf16.msra.mxu0 0
      %1864 = vmatprep.subr.bf16.mxu0 0
      %1865 = vmatpush1.bf16.msra.mxu0 0
      %1866 = vmatprep.subr.bf16.mxu0 0
      %1867 = vmatpush1.bf16.msra.mxu0 0
      %1868 = vmatprep.subr.bf16.mxu0 0
      %1869 = vmatpush1.bf16.msra.mxu0 0
      %1870 = vmatprep.subr.bf16.mxu0 0
      %1871 = vmatpush1.bf16.msra.mxu0 0
      %1872 = vmatprep.subr.bf16.mxu0 0
      %1873 = vmatpush1.bf16.msra.mxu0 0
      %1874 = vmatprep.mubr.bf16.mxu0 0
      %1875 = vmatmul.mubr.bf16.gmra.mrb[0].mxu0 %v1837
      %v1876 = vpop.f32.mrb[0].mxu0
      %v1877 = vadd.f32 0.0, %v1876
      %v1878 = vpop.f32.mrb[0].mxu0
      %v1879 = vpop.f32.mrb[0].mxu0
      %v1880 = vpop.f32.mrb[0].mxu0
      %1881 = vdwg.mxu0
      %1883 = vrot.lane.b32.xlu0 %v1877, 24
      %v1884 = vpop.permute.xlu0 %1883
      %vm1886 = vcmask 261312
      %1887 = vst.msk [vmem:[#allocation4] sm:$0xff] %vm1886, %v1884
      %v1888 = vld [vmem:[#allocation4] sm:$0xff]
      %v1889 = vld [vmem:[%s8] sm:$0xf]
      %v1890 = vld [vmem:[%s8 + $0x4] sm:$0xf]
      %v1891 = vld [vmem:[%s8 + $0x8] sm:$0xf]
      %v1892 = vld [vmem:[%s8 + $0xc] sm:$0xf]
      %v1893 = vpack.c.bf16 %v1888, %v1888
      %v1894 = vld [vmem:[%s9] sm:$0x1]
      %v1896 = vlaneseq
      %v1897 = vshrl.u32 %v1896, 7
      %v1898 = vsub.s32 0, %v1897
      %v1899 = vrot.slane %v1894, %v1898
      %v1905 = vunpack.c.l.b16 %v1889
      %v1906 = vunpack.c.l.b16 %v1890
      %v1907 = vunpack.c.l.b16 %v1891
      %v1908 = vunpack.c.l.b16 %v1892
      %v1909 = vpack.c.b16 %v1906, %v1905
      %v1910 = vpack.c.b16 %v1908, %v1907
      %v1914 = vsel %vm1194, %v1893, 0
      %1916 = vmatprep.subr.bf16.mxu0 0
      %1917 = vmatpush1.bf16.msra.mxu0 %v1909
      %1918 = vmatprep.subr.bf16.mxu0 0
      %1919 = vmatpush1.bf16.msra.mxu0 %v1910
      %1920 = vmatprep.subr.bf16.mxu0 0
      %1921 = vmatpush1.bf16.msra.mxu0 0
      %1922 = vmatprep.subr.bf16.mxu0 0
      %1923 = vmatpush1.bf16.msra.mxu0 0
      %1924 = vmatprep.subr.bf16.mxu0 0
      %1925 = vmatpush1.bf16.msra.mxu0 0
      %1926 = vmatprep.subr.bf16.mxu0 0
      %1927 = vmatpush1.bf16.msra.mxu0 0
      %1928 = vmatprep.subr.bf16.mxu0 0
      %1929 = vmatpush1.bf16.msra.mxu0 0
      %1930 = vmatprep.subr.bf16.mxu0 0
      %1931 = vmatpush1.bf16.msra.mxu0 0
      %1932 = vmatprep.subr.bf16.mxu0 0
      %1933 = vmatpush1.bf16.msra.mxu0 0
      %1934 = vmatprep.subr.bf16.mxu0 0
      %1935 = vmatpush1.bf16.msra.mxu0 0
      %1936 = vmatprep.subr.bf16.mxu0 0
      %1937 = vmatpush1.bf16.msra.mxu0 0
      %1938 = vmatprep.subr.bf16.mxu0 0
      %1939 = vmatpush1.bf16.msra.mxu0 0
      %1940 = vmatprep.subr.bf16.mxu0 0
      %1941 = vmatpush1.bf16.msra.mxu0 0
      %1942 = vmatprep.subr.bf16.mxu0 0
      %1943 = vmatpush1.bf16.msra.mxu0 0
      %1944 = vmatprep.subr.bf16.mxu0 0
      %1945 = vmatpush1.bf16.msra.mxu0 0
      %1946 = vmatprep.subr.bf16.mxu0 0
      %1947 = vmatpush1.bf16.msra.mxu0 0
      %1948 = vmatprep.mubr.bf16.mxu0 0
      %1949 = vmatmul.mubr.bf16.gmra.mrb[0].mxu0 %v1914
      %v1950 = vpop.f32.mrb[0].mxu0
      %v1951 = vadd.f32 %v1899, %v1950
      %v1952 = vpop.f32.mrb[0].mxu0
      %v1953 = vpop.f32.mrb[0].mxu0
      %v1954 = vpop.f32.mrb[0].mxu0
      %1955 = vdwg.mxu0
      %v1956 = vadd.f32 %v1169, %v1951
      %v1957 = vld [vmem:[%s10] sm:$0x1]
      %v1958 = vld [vmem:[%s11] sm:$0x1]
      %v1959 = vsel %vm1194, %v1956, 0.0
      %1960 = vadd.xlane.f32.xlu0 %v1959
      %v1961 = vpop.xlane.xlu0 %1960
      %v1962 = vrcp.pop 32.0
      %v1963 = vmul.f32 %v1961, %v1962
      %v1964 = vsub.f32 %v1956, %v1963
      %v1965 = vmul.f32 %v1964, %v1964
      %v1966 = vsel %vm1194, %v1965, 0.0
      %1967 = vadd.xlane.f32.xlu0 %v1966
      %v1968 = vpop.xlane.xlu0 %1967
      %v1969 = vmul.f32 %v1968, %v1962
      %v1970 = vadd.f32 %v1969, 1e-05
      %v1971 = vrsqrt.pop %v1970
      %v1972 = vmul.f32 %v1964, %v1971
      %v1974 = vlaneseq
      %v1975 = vshrl.u32 %v1974, 7
      %v1976 = vsub.s32 0, %v1975
      %v1977 = vrot.slane %v1957, %v1976
      %v1979 = vmul.f32 %v1972, %v1977
      %v1981 = vlaneseq
      %v1982 = vshrl.u32 %v1981, 7
      %v1983 = vsub.s32 0, %v1982
      %v1984 = vrot.slane %v1958, %v1983
      %v1986 = vadd.f32 %v1979, %v1984
      %v1987 = vld [vmem:[%s12] sm:$0xf]
      %v1988 = vld [vmem:[%s12 + $0x4] sm:$0xf]
      %v1989 = vld [vmem:[%s12 + $0x8] sm:$0xf]
      %v1990 = vld [vmem:[%s12 + $0xc] sm:$0xf]
      %v1991 = vpack.c.bf16 %v1986, %v1986
      %v1992 = vld [vmem:[%s13] sm:$0x1]
      %v1994 = vlaneseq
      %v1995 = vshrl.u32 %v1994, 7
      %v1996 = vsub.s32 0, %v1995
      %v1997 = vrot.slane %v1992, %v1996
      %v2003 = vunpack.c.l.b16 %v1987
      %v2004 = vunpack.c.l.b16 %v1988
      %v2005 = vunpack.c.l.b16 %v1989
      %v2006 = vunpack.c.l.b16 %v1990
      %v2007 = vpack.c.b16 %v2004, %v2003
      %v2008 = vpack.c.b16 %v2006, %v2005
      %v2012 = vsel %vm1194, %v1991, 0
      %2014 = vmatprep.subr.bf16.mxu0 0
      %2015 = vmatpush1.bf16.msra.mxu0 %v2007
      %2016 = vmatprep.subr.bf16.mxu0 0
      %2017 = vmatpush1.bf16.msra.mxu0 %v2008
      %2018 = vmatprep.subr.bf16.mxu0 0
      %2019 = vmatpush1.bf16.msra.mxu0 0
      %2020 = vmatprep.subr.bf16.mxu0 0
      %2021 = vmatpush1.bf16.msra.mxu0 0
      %2022 = vmatprep.subr.bf16.mxu0 0
      %2023 = vmatpush1.bf16.msra.mxu0 0
      %2024 = vmatprep.subr.bf16.mxu0 0
      %2025 = vmatpush1.bf16.msra.mxu0 0
      %2026 = vmatprep.subr.bf16.mxu0 0
      %2027 = vmatpush1.bf16.msra.mxu0 0
      %2028 = vmatprep.subr.bf16.mxu0 0
      %2029 = vmatpush1.bf16.msra.mxu0 0
      %2030 = vmatprep.subr.bf16.mxu0 0
      %2031 = vmatpush1.bf16.msra.mxu0 0
      %2032 = vmatprep.subr.bf16.mxu0 0
      %2033 = vmatpush1.bf16.msra.mxu0 0
      %2034 = vmatprep.subr.bf16.mxu0 0
      %2035 = vmatpush1.bf16.msra.mxu0 0
      %2036 = vmatprep.subr.bf16.mxu0 0
      %2037 = vmatpush1.bf16.msra.mxu0 0
      %2038 = vmatprep.subr.bf16.mxu0 0
      %2039 = vmatpush1.bf16.msra.mxu0 0
      %2040 = vmatprep.subr.bf16.mxu0 0
      %2041 = vmatpush1.bf16.msra.mxu0 0
      %2042 = vmatprep.subr.bf16.mxu0 0
      %2043 = vmatpush1.bf16.msra.mxu0 0
      %2044 = vmatprep.subr.bf16.mxu0 0
      %2045 = vmatpush1.bf16.msra.mxu0 0
      %2046 = vmatprep.mubr.bf16.mxu0 0
      %2047 = vmatmul.mubr.bf16.gmra.mrb[0].mxu0 %v2012
      %v2048 = vpop.f32.mrb[0].mxu0
      %v2049 = vadd.f32 %v1997, %v2048
      %v2050 = vpop.f32.mrb[0].mxu0
      %v2051 = vpop.f32.mrb[0].mxu0
      %v2052 = vpop.f32.mrb[0].mxu0
      %2053 = vdwg.mxu0
      %v2054 = vmax.f32 %v2049, 0.0
      %v2055 = vld [vmem:[%s14] sm:$0xf]
      %v2056 = vld [vmem:[%s14 + $0x4] sm:$0xf]
      %v2057 = vld [vmem:[%s14 + $0x8] sm:$0xf]
      %v2058 = vld [vmem:[%s14 + $0xc] sm:$0xf]
      %v2059 = vpack.c.bf16 %v2054, %v2054
      %v2060 = vld [vmem:[%s15] sm:$0x1]
      %v2062 = vlaneseq
      %v2063 = vshrl.u32 %v2062, 7
      %v2064 = vsub.s32 0, %v2063
      %v2065 = vrot.slane %v2060, %v2064
      %v2071 = vunpack.c.l.b16 %v2055
      %v2072 = vunpack.c.l.b16 %v2056
      %v2073 = vunpack.c.l.b16 %v2057
      %v2074 = vunpack.c.l.b16 %v2058
      %v2075 = vpack.c.b16 %v2072, %v2071
      %v2076 = vpack.c.b16 %v2074, %v2073
      %v2080 = vsel %vm1194, %v2059, 0
      %2082 = vmatprep.subr.bf16.mxu0 0
      %2083 = vmatpush1.bf16.msra.mxu0 %v2075
      %2084 = vmatprep.subr.bf16.mxu0 0
      %2085 = vmatpush1.bf16.msra.mxu0 %v2076
      %2086 = vmatprep.subr.bf16.mxu0 0
      %2087 = vmatpush1.bf16.msra.mxu0 0
      %2088 = vmatprep.subr.bf16.mxu0 0
      %2089 = vmatpush1.bf16.msra.mxu0 0
      %2090 = vmatprep.subr.bf16.mxu0 0
      %2091 = vmatpush1.bf16.msra.mxu0 0
      %2092 = vmatprep.subr.bf16.mxu0 0
      %2093 = vmatpush1.bf16.msra.mxu0 0
      %2094 = vmatprep.subr.bf16.mxu0 0
      %2095 = vmatpush1.bf16.msra.mxu0 0
      %2096 = vmatprep.subr.bf16.mxu0 0
      %2097 = vmatpush1.bf16.msra.mxu0 0
      %2098 = vmatprep.subr.bf16.mxu0 0
      %2099 = vmatpush1.bf16.msra.mxu0 0
      %2100 = vmatprep.subr.bf16.mxu0 0
      %2101 = vmatpush1.bf16.msra.mxu0 0
      %2102 = vmatprep.subr.bf16.mxu0 0
      %2103 = vmatpush1.bf16.msra.mxu0 0
      %2104 = vmatprep.subr.bf16.mxu0 0
      %2105 = vmatpush1.bf16.msra.mxu0 0
      %2106 = vmatprep.subr.bf16.mxu0 0
      %2107 = vmatpush1.bf16.msra.mxu0 0
      %2108 = vmatprep.subr.bf16.mxu0 0
      %2109 = vmatpush1.bf16.msra.mxu0 0
      %2110 = vmatprep.subr.bf16.mxu0 0
      %2111 = vmatpush1.bf16.msra.mxu0 0
      %2112 = vmatprep.subr.bf16.mxu0 0
      %2113 = vmatpush1.bf16.msra.mxu0 0
      %2114 = vmatprep.mubr.bf16.mxu0 0
      %2115 = vmatmul.mubr.bf16.gmra.mrb[0].mxu0 %v2080
      %v2116 = vpop.f32.mrb[0].mxu0
      %v2117 = vadd.f32 %v2065, %v2116
      %v2118 = vpop.f32.mrb[0].mxu0
      %v2119 = vpop.f32.mrb[0].mxu0
      %v2120 = vpop.f32.mrb[0].mxu0
      %2121 = vdwg.mxu0
      %v2122 = vadd.f32 %v1986, %v2117
      %v2123 = vld [vmem:[%s16] sm:$0x1]
      %v2124 = vld [vmem:[%s17] sm:$0x1]
      %v2125 = vsel %vm1194, %v2122, 0.0
      %2126 = vadd.xlane.f32.xlu0 %v2125
      %v2127 = vpop.xlane.xlu0 %2126
      %v2128 = vmul.f32 %v2127, %v1962
      %v2129 = vsub.f32 %v2122, %v2128
      %v2130 = vmul.f32 %v2129, %v2129
      %v2131 = vsel %vm1194, %v2130, 0.0
      %2132 = vadd.xlane.f32.xlu0 %v2131
      %v2133 = vpop.xlane.xlu0 %2132
      %v2134 = vmul.f32 %v2133, %v1962
      %v2135 = vadd.f32 %v2134, 1e-05
      %v2136 = vrsqrt.pop %v2135
      %v2137 = vmul.f32 %v2129, %v2136
      %v2139 = vlaneseq
      %v2140 = vshrl.u32 %v2139, 7
      %v2141 = vsub.s32 0, %v2140
      %v2142 = vrot.slane %v2123, %v2141
      %v2144 = vmul.f32 %v2137, %v2142
      %v2146 = vlaneseq
      %v2147 = vshrl.u32 %v2146, 7
      %v2148 = vsub.s32 0, %v2147
      %v2149 = vrot.slane %v2124, %v2148
      %v2151 = vadd.f32 %v2144, %v2149
      %2152 = vst.msk [vmem:[%s618] sm:$0xff] %vm1194, %v2151
      %p2153 = scmp.lt.s32.totalorder %s33, 1
      %s2154 = scalar_select %p2153, %s33, 1
      %p2155 = scmp.lt.s32.totalorder %s34, 0
      %s2156 = scalar_select %p2155, %s34, 0
      %s2157 = sadd.s32 %s2156, %s2154
      %s2158 = smul.addr %s2157, 8
      %s2159 = scalar_lea.vmem %s18, %s2158
      // Predicated region
      $region97: #{model_forward.5} parent=91 // pred_check
        %p2160 = pneg %p451
      $region98: #{model_forward.5} parent=91 // pred_check_branch
        %2162 = sbr.rel (%p2160) target = $region100
      $region99: #{model_forward.5} parent=91 // pred_region
        _
      $region100: #{model_forward.5} parent=91 // pred_fallthru
        _
    $region92: #{model_forward.5} parent=5 // pred_fallthru
      _
    %p2163 = scmp.le.s32.totalorder 2, %s24
    // Predicated region
    $region101: #{model_forward.5} parent=5 // pred_check
      %p2164 = pneg %p2163
    $region102: #{model_forward.5} parent=5 // pred_check_branch
      %2166 = sbr.rel (%p2164) target = $region104
    $region103: #{model_forward.5} parent=5 // pred_region
      %s2167 = ssub.s32 %s24, 2
      // Predicated region
      $region105: #{model_forward.5} parent=103 // pred_check
        %p2168 = pneg %p457
      $region106: #{model_forward.5} parent=103 // pred_check_branch
        %2170 = sbr.rel (%p2168) target = $region108
      $region107: #{model_forward.5} parent=103 // pred_region
        %p2171 = scmp.lt.s32.totalorder %s35, 1
        %s2172 = scalar_select %p2171, %s35, 1
        %p2173 = scmp.lt.s32.totalorder %s36, 0
        %s2174 = scalar_select %p2173, %s36, 0
        %s2175 = sadd.s32 %s2174, %s2172
        %s2176 = smul.addr %s2175, 8
        %s2177 = scalar_lea.vmem %s18, %s2176
      $region108: #{model_forward.5} parent=103 // pred_fallthru
        _
    $region104: #{model_forward.5} parent=5 // pred_fallthru
      _
  $region6: #{model_forward.5} parent=0 // loop_footer
    %s28 = sadd.s32 1, %s24
  $region7: #{model_forward.5} parent=0 // loop_footer_branch
    %23 = sbr.rel target = $region3
  $region8: #{model_forward.5} parent=0 // loop_exit
    _

</llo_original>
